<compile_context>
chip_gen: v5e
topology: v5e:2x2
jax: 0.10.0
libtpu: 0.0.40
codegen_flags: <defaults>
</compile_context>

<pallas_src>
import functools
import math

import jax
import jax.numpy as jnp
from jax.experimental import pallas as pl
from jax.experimental.pallas import tpu as pltpu

# ----------------------------- problem sizes ------------------------------
B = 2            # graphs in the batch
N_ATOM = 8       # atom nodes
N_FG = 4         # functional-group (motif) nodes
E_ATOM = 12      # atom-atom edges
E_FG = 6         # fg-fg edges
HID = 32         # args.hid_dim
HEADS = 4        # args.heads
D_K = HID // HEADS
EMB = 32         # emb_dim
STEP = 2         # args.step
ATOM_IN = 16     # args.atom_in_dim
SS_NODE_IN = 16  # args.ss_node_in_dim
BOND_IN = 8      # args.bond_in_dim
SS_EDGE_IN = 8   # args.ss_edge_in_dim

VMEM = pltpu.MemorySpace.VMEM


# ------------------------- fused forward kernel ----------------------------
def _fused_forward_kernel(*refs, names):
    n_in = len(names)
    val = {name: ref[...] for name, ref in zip(names, refs[:n_in])}
    o_ref = refs[n_in]

    def mm(a, b):
        return jnp.dot(a, b, preferred_element_type=jnp.float32)

    def relu(x):
        return jnp.maximum(x, 0.0)

    r_expand = val["r_expand"]      # (HID, HID*HID)  src -> repeat per out-col block
    s_reduce = val["s_reduce"]      # (HID*HID, HID)  sum over the in-dim blocks
    head_sum = val["head_sum"]      # (HID, HEADS)    sum the lanes of one head
    head_bcast = val["head_bcast"]  # (HEADS, HID)    broadcast a head scalar to its lanes

    # LinearBn(+BN folded) -> ReLU -> Dropout(eval) -> LinearBn(+BN) -> ReLU
    def encode(x, w1, b1, w2, b2):
        h = relu(mm(x, w1) + b1)
        return relu(mm(h, w2) + b2)

    # DGL NNConv ('sum'): msg_e = h_src[e] @ W_e, scatter-sum, + bias.
    # W_e kept flat as w_flat[e, h*HID + g]; the contraction over h is done
    # with two plain 2-D MXU matmuls (no (E,H,H) temporary, no reshape).
    def nnconv(gsrc, sdst, nf, w_flat, bias):
        src = mm(gsrc, nf)                     # (E, H)    gather sources
        src_exp = mm(src, r_expand)            # (E, H*H)  src_exp[e, h*H+g] = src[e, h]
        msgs = mm(src_exp * w_flat, s_reduce)  # (E, H)    sum_h src[e,h] * W_e[h,g]
        return mm(sdst, msgs) + bias           # (N, H)    scatter-sum to destinations

    # LocalAugmentation: per-node, per-head 2-key attention, lane-dense (N, HID).
    def local_aug(fine, coarse, motif):
        q = mm(motif, val["la_wq"])
        k0 = mm(fine, val["la_wk"])
        k1 = mm(coarse, val["la_wk"])
        v0 = mm(fine, val["la_wv"])
        v1 = mm(coarse, val["la_wv"])
        inv_dk = jnp.float32(1.0 / D_K)
        s0 = mm(q * k0, head_sum) * inv_dk     # (N, HEADS)
        s1 = mm(q * k1, head_sum) * inv_dk
        m = jnp.maximum(s0, s1)
        e0 = jnp.exp(s0 - m)
        e1 = jnp.exp(s1 - m)
        inv_den = 1.0 / (e0 + e1)
        a0 = mm(e0 * inv_den, head_bcast)      # (N, HID)  head weight per lane
        a1 = mm(e1 * inv_den, head_bcast)
        out = a0 * v0 + a1 * v1
        return mm(out, val["la_wo"]) + val["la_bo"]

    # torch.nn.GRUCell (gate order r, z, n; weights stored transposed).
    def gru(x, h, wi, wh, bi, bh):
        gi = mm(x, wi) + bi
        gh = mm(h, wh) + bh
        r = jax.nn.sigmoid(gi[:, 0:HID] + gh[:, 0:HID])
        z = jax.nn.sigmoid(gi[:, HID:2 * HID] + gh[:, HID:2 * HID])
        n = jnp.tanh(gi[:, 2 * HID:3 * HID] + r * gh[:, 2 * HID:3 * HID])
        return (1.0 - z) * n + z * h

    # Attention Readout: per-graph softmax-weighted sum + per-graph max.
    # The HID->1 score linear is folded in as an NT matmul giving a (1, N) row.
    # Everything stays 2-D: the per-graph max uses the transposed membership
    # matrix (N, B) to mask, avoiding a (B, N, HID) temporary / relayout.
    def readout(nf, w_t, b, mem, mem_t):
        neg = jnp.float32(-1e30)
        nw = jax.lax.dot_general(
            w_t, nf, (((1,), (1,)), ((), ())),
            preferred_element_type=jnp.float32) + b           # (1, N)
        masked_nw = jnp.where(mem > 0, nw, neg)               # (B, N)
        gmax = jnp.max(masked_nw, axis=1, keepdims=True)      # (B, 1)
        # clamp avoids exp overflow on non-member nodes before masking
        e = jnp.where(mem > 0, jnp.exp(jnp.minimum(nw - gmax, 0.0)), 0.0)
        denom = jnp.sum(e, axis=1, keepdims=True)             # (B, 1)
        wbn = e / denom                                       # (B, N)
        weighted = mm(wbn, nf)                                # (B, H)
        rows = []
        for g_ix in range(B):                                 # unrolled, B is tiny
            m = mem_t[:, g_ix:g_ix + 1]                       # (N, 1)
            masked = jnp.where(m > 0, nf, neg)                # (N, H)
            rows.append(jnp.max(masked, axis=0, keepdims=True))
        maxed = jnp.concatenate(rows, axis=0)                 # (B, H)
        return weighted, maxed

    # ------------------------------ forward --------------------------------
    uaf = encode(val["af"], val["at_w1"], val["at_b1"], val["at_w2"], val["at_b2"])
    ufnf = encode(val["fnf"], val["mo_w1"], val["mo_b1"], val["mo_w2"], val["mo_b2"])

    # edge-function linears are loop-invariant -> hoisted out of the step loop
    w_fg = mm(val["fef"], val["ef_fg_w"]) + val["ef_fg_b"]    # (E_fg, H*H)
    w_at = mm(val["bf"], val["ef_at_w"]) + val["ef_at_b"]     # (E_at, H*H)

    for _ in range(STEP):
        ufnm = nnconv(val["gsrc_fg"], val["sdst_fg"], ufnf, w_fg, val["nnconv_fg_b"])
        uam = nnconv(val["gsrc_at"], val["sdst_at"], uaf, w_at, val["nnconv_at_b"])
        augment_ufnm = mm(val["a2f"], uam)                    # atom -> motif sum agg
        ufnm = local_aug(augment_ufnm, ufnm, ufnf)
        ufnf = gru(ufnm, ufnf, val["grum_wi"], val["grum_wh"],
                   val["grum_bi"], val["grum_bh"])
        uaf = gru(uam, uaf, val["grua_wi"], val["grua_wh"],
                  val["grua_bi"], val["grua_bh"])

    mo_wsum, mo_max = readout(ufnf, val["ro_mo_wt"], val["ro_mo_b"],
                              val["mem_fg"], val["mem_fg_t"])
    at_wsum, at_max = readout(uaf, val["ro_at_wt"], val["ro_at_b"],
                              val["mem_at"], val["mem_at_t"])

    # h_graph = cat([atom_readout, motif_readout]); the concat is folded into
    # four partial matmuls against the pre-split rows of spu_w1.
    h1 = relu(mm(at_wsum, val["spu_w1_a"]) + mm(at_max, val["spu_w1_b"])
              + mm(mo_wsum, val["spu_w1_c"]) + mm(mo_max, val["spu_w1_d"])
              + val["spu_b1"])
    h2 = mm(h1, val["spu_w2"]) + val["spu_b2"]
    o_ref[...] = mm(h2, val["cq_w"]) + val["cq_b"]


# --------------------------------- wrapper ----------------------------------
def graph_encoder_forward(params, graph, af, bf, fnf, fef):
    f32 = jnp.float32
    # static helper matrices turning the flat / per-head contractions into matmuls
    r_expand = jnp.kron(jnp.eye(HID, dtype=f32), jnp.ones((1, HID), f32))    # (H, H*H)
    s_reduce = jnp.kron(jnp.ones((HID, 1), f32), jnp.eye(HID, dtype=f32))    # (H*H, H)
    head_sum = jnp.kron(jnp.eye(HEADS, dtype=f32), jnp.ones((D_K, 1), f32))  # (H, HEADS)
    head_bcast = jnp.transpose(head_sum)                                     # (HEADS, H)

    w1 = params["spu_w1"]
    args = dict(
        af=af, bf=bf, fnf=fnf, fef=fef,
        gsrc_at=graph["gsrc_at"], sdst_at=graph["sdst_at"],
        gsrc_fg=graph["gsrc_fg"], sdst_fg=graph["sdst_fg"],
        a2f=graph["a2f"],
        mem_at=graph["mem_at"], mem_fg=graph["mem_fg"],
        mem_at_t=jnp.transpose(graph["mem_at"]),
        mem_fg_t=jnp.transpose(graph["mem_fg"]),
        r_expand=r_expand, s_reduce=s_reduce,
        head_sum=head_sum, head_bcast=head_bcast,
        at_w1=params["atom_enc"]["w1"], at_b1=params["atom_enc"]["b1"],
        at_w2=params["atom_enc"]["w2"], at_b2=params["atom_enc"]["b2"],
        mo_w1=params["motif_enc"]["w1"], mo_b1=params["motif_enc"]["b1"],
        mo_w2=params["motif_enc"]["w2"], mo_b2=params["motif_enc"]["b2"],
        ef_fg_w=params["ef_fg_w"], ef_fg_b=params["ef_fg_b"],
        nnconv_fg_b=params["nnconv_fg_b"],
        ef_at_w=params["ef_at_w"], ef_at_b=params["ef_at_b"],
        nnconv_at_b=params["nnconv_at_b"],
        la_wq=params["la_wq"], la_wk=params["la_wk"], la_wv=params["la_wv"],
        la_wo=params["la_wo"], la_bo=params["la_bo"],
        grum_wi=params["gru_motif"]["wi"], grum_wh=params["gru_motif"]["wh"],
        grum_bi=params["gru_motif"]["bi"], grum_bh=params["gru_motif"]["bh"],
        grua_wi=params["gru_atom"]["wi"], grua_wh=params["gru_atom"]["wh"],
        grua_bi=params["gru_atom"]["bi"], grua_bh=params["gru_atom"]["bh"],
        ro_mo_wt=jnp.transpose(params["ro_motif_w"]), ro_mo_b=params["ro_motif_b"],
        ro_at_wt=jnp.transpose(params["ro_atom_w"]), ro_at_b=params["ro_atom_b"],
        spu_w1_a=w1[0:HID], spu_w1_b=w1[HID:2 * HID],
        spu_w1_c=w1[2 * HID:3 * HID], spu_w1_d=w1[3 * HID:4 * HID],
        spu_b1=params["spu_b1"], spu_w2=params["spu_w2"], spu_b2=params["spu_b2"],
        cq_w=params["cq_w"], cq_b=params["cq_b"],
    )
    names = tuple(args.keys())
    operands = [args[k] for k in names]

    return pl.pallas_call(
        functools.partial(_fused_forward_kernel, names=names),
        out_shape=jax.ShapeDtypeStruct((B, 2), jnp.float32),
        in_specs=[pl.BlockSpec(memory_space=VMEM)] * len(operands),
        out_specs=pl.BlockSpec(memory_space=VMEM),
        cost_estimate=pl.CostEstimate(
            flops=6_000_000, transcendentals=3_000, bytes_accessed=400_000),
    )(*operands)


# ------------------------- pure-JAX reference (check) -----------------------
def reference_forward(params, graph, af, bf, fnf, fef):
    hp = jax.lax.Precision.HIGHEST

    def mm(a, b):
        return jnp.dot(a, b, precision=hp)

    def enc(x, q):
        h = jnp.maximum(mm(x, q["w1"]) + q["b1"], 0.0)
        return jnp.maximum(mm(h, q["w2"]) + q["b2"], 0.0)

    def nnconv(gsrc, sdst, nf, ef, w, bvec, bias):
        w_e = (mm(ef, w) + bvec).reshape(-1, HID, HID)
        src = mm(gsrc, nf)
        msgs = jnp.einsum("eh,ehg->eg", src, w_e, precision=hp)
        return mm(sdst, msgs) + bias

    def la(fine, coarse, motif):
        def split_heads(x):
            return x.reshape(-1, HEADS, D_K)
        q = split_heads(mm(motif, params["la_wq"]))
        k0 = split_heads(mm(fine, params["la_wk"]))
        k1 = split_heads(mm(coarse, params["la_wk"]))
        v0 = split_heads(mm(fine, params["la_wv"]))
        v1 = split_heads(mm(coarse, params["la_wv"]))
        s0 = jnp.sum(q * k0, axis=-1) / D_K
        s1 = jnp.sum(q * k1, axis=-1) / D_K
        a = jax.nn.softmax(jnp.stack([s0, s1], axis=-1), axis=-1)
        out = a[..., 0:1] * v0 + a[..., 1:2] * v1
        return mm(out.reshape(-1, HID), params["la_wo"]) + params["la_bo"]

    def gru(x, h, q):
        gi = mm(x, q["wi"]) + q["bi"]
        gh = mm(h, q["wh"]) + q["bh"]
        r = jax.nn.sigmoid(gi[:, 0:HID] + gh[:, 0:HID])
        z = jax.nn.sigmoid(gi[:, HID:2 * HID] + gh[:, HID:2 * HID])
        n = jnp.tanh(gi[:, 2 * HID:3 * HID] + r * gh[:, 2 * HID:3 * HID])
        return (1.0 - z) * n + z * h

    def readout(nf, w, b, mem):
        neg = -1e30
        nw = (mm(nf, w) + b)[:, 0]
        masked = jnp.where(mem > 0, nw[None, :], neg)
        gmax = masked.max(axis=1, keepdims=True)
        e = jnp.where(mem > 0, jnp.exp(nw[None, :] - gmax), 0.0)
        wbn = e / e.sum(axis=1, keepdims=True)
        weighted = mm(wbn, nf)
        maxed = jnp.where(mem[:, :, None] > 0, nf[None, :, :], neg).max(axis=1)
        return jnp.concatenate([weighted, maxed], axis=1)

    uaf = enc(af, params["atom_enc"])
    ufnf = enc(fnf, params["motif_enc"])
    for _ in range(STEP):
        ufnm = nnconv(graph["gsrc_fg"], graph["sdst_fg"], ufnf, fef,
                      params["ef_fg_w"], params["ef_fg_b"], params["nnconv_fg_b"])
        uam = nnconv(graph["gsrc_at"], graph["sdst_at"], uaf, bf,
                     params["ef_at_w"], params["ef_at_b"], params["nnconv_at_b"])
        augment = mm(graph["a2f"], uam)
        ufnm = la(augment, ufnm, ufnf)
        ufnf = gru(ufnm, ufnf, params["gru_motif"])
        uaf = gru(uam, uaf, params["gru_atom"])
    motif_ro = readout(ufnf, params["ro_motif_w"], params["ro_motif_b"], graph["mem_fg"])
    atom_ro = readout(uaf, params["ro_atom_w"], params["ro_atom_b"], graph["mem_at"])
    h = jnp.concatenate([atom_ro, motif_ro], axis=1)
    p = jnp.maximum(mm(h, params["spu_w1"]) + params["spu_b1"], 0.0)
    p = mm(p, params["spu_w2"]) + params["spu_b2"]
    return mm(p, params["cq_w"]) + params["cq_b"]


# ----------------------------- parameter init ------------------------------
def init_params(key):
    keys = iter(jax.random.split(key, 64))

    def W(shape):
        return jax.random.normal(next(keys), shape, jnp.float32) / math.sqrt(shape[0])

    def Bv(shape):
        return jax.random.normal(next(keys), shape, jnp.float32) * 0.01

    bn = 1.0 / math.sqrt(1.0 + 1e-5)   # eval-mode BatchNorm1d folded in

    p = {}
    p["atom_enc"] = dict(w1=W((ATOM_IN, HID)) * bn, b1=Bv((1, HID)) * bn,
                         w2=W((HID, HID)) * bn, b2=Bv((1, HID)) * bn)
    p["motif_enc"] = dict(w1=W((SS_NODE_IN, HID)) * bn, b1=Bv((1, HID)) * bn,
                          w2=W((HID, HID)) * bn, b2=Bv((1, HID)) * bn)
    p["ef_fg_w"] = W((SS_EDGE_IN, HID * HID))
    p["ef_fg_b"] = Bv((1, HID * HID))
    p["nnconv_fg_b"] = Bv((1, HID))
    p["ef_at_w"] = W((BOND_IN, HID * HID))
    p["ef_at_b"] = Bv((1, HID * HID))
    p["nnconv_at_b"] = Bv((1, HID))
    p["la_wq"] = W((HID, HID))
    p["la_wk"] = W((HID, HID))
    p["la_wv"] = W((HID, HID))
    p["la_wo"] = W((HID, HID))
    p["la_bo"] = Bv((1, HID))
    p["gru_motif"] = dict(wi=W((HID, 3 * HID)), wh=W((HID, 3 * HID)),
                          bi=Bv((1, 3 * HID)), bh=Bv((1, 3 * HID)))
    p["gru_atom"] = dict(wi=W((HID, 3 * HID)), wh=W((HID, 3 * HID)),
                         bi=Bv((1, 3 * HID)), bh=Bv((1, 3 * HID)))
    p["ro_motif_w"] = W((HID, 1))
    p["ro_motif_b"] = Bv((1, 1))
    p["ro_atom_w"] = W((HID, 1))
    p["ro_atom_b"] = Bv((1, 1))
    p["spu_w1"] = W((4 * HID, 2 * EMB))
    p["spu_b1"] = Bv((1, 2 * EMB))
    p["spu_w2"] = W((2 * EMB, 2))
    p["spu_b2"] = Bv((1, 2))
    p["cq_w"] = W((2, 2))
    p["cq_b"] = Bv((1, 2))
    return p


# --------------------------------- main -------------------------------------
if __name__ == "__main__":
    key = jax.random.PRNGKey(0)
    k_params, k_af, k_bf, k_fnf, k_fef = jax.random.split(key, 5)

    params = init_params(k_params)

    # node / edge features
    af = jax.random.normal(k_af, (N_ATOM, ATOM_IN), jnp.float32)
    bf = jax.random.normal(k_bf, (E_ATOM, BOND_IN), jnp.float32)
    fnf = jax.random.normal(k_fnf, (N_FG, SS_NODE_IN), jnp.float32)
    fef = jax.random.normal(k_fef, (E_FG, SS_EDGE_IN), jnp.float32)

    # deterministic synthetic heterograph (dense one-hot matrices)
    atom_src = jnp.array([0, 1, 2, 3, 4, 5, 6, 7, 1, 2, 5, 6], jnp.int32)
    atom_dst = jnp.array([1, 2, 3, 0, 5, 6, 7, 4, 0, 1, 4, 5], jnp.int32)
    fg_src = jnp.array([0, 1, 1, 0, 2, 3], jnp.int32)
    fg_dst = jnp.array([1, 0, 0, 1, 3, 2], jnp.int32)
    atom2fg = jnp.array([0, 0, 1, 1, 2, 2, 3, 3], jnp.int32)
    atom2graph = jnp.array([0, 0, 0, 0, 1, 1, 1, 1], jnp.int32)
    fg2graph = jnp.array([0, 0, 1, 1], jnp.int32)

    graph = dict(
        gsrc_at=jax.nn.one_hot(atom_src, N_ATOM, dtype=jnp.float32),                 # (E_at, N_at)
        sdst_at=jnp.transpose(jax.nn.one_hot(atom_dst, N_ATOM, dtype=jnp.float32)),  # (N_at, E_at)
        gsrc_fg=jax.nn.one_hot(fg_src, N_FG, dtype=jnp.float32),                     # (E_fg, N_fg)
        sdst_fg=jnp.transpose(jax.nn.one_hot(fg_dst, N_FG, dtype=jnp.float32)),      # (N_fg, E_fg)
        a2f=jnp.transpose(jax.nn.one_hot(atom2fg, N_FG, dtype=jnp.float32)),         # (N_fg, N_at)
        mem_at=jnp.transpose(jax.nn.one_hot(atom2graph, B, dtype=jnp.float32)),      # (B, N_at)
        mem_fg=jnp.transpose(jax.nn.one_hot(fg2graph, B, dtype=jnp.float32)),        # (B, N_fg)
    )

    p_graph = graph_encoder_forward(params, graph, af, bf, fnf, fef)
    p_graph = jax.block_until_ready(p_graph)

    assert p_graph.shape == (B, 2)
    assert bool(jnp.all(jnp.isfinite(p_graph)))

    ref = reference_forward(params, graph, af, bf, fnf, fef)
    max_err = float(jnp.max(jnp.abs(p_graph - ref)))
    assert max_err < 1e-2, f"kernel/reference mismatch: {max_err}"

    print("KERNEL_OK")
</pallas_src>

<mosaic_0001>
module attributes {stable_mosaic.version = 11 : i64} {
  func.func @_fused_forward_kernel(%arg0: memref<8x16xf32, #tpu.memory_space<vmem>>, %arg1: memref<12x8xf32, #tpu.memory_space<vmem>>, %arg2: memref<4x16xf32, #tpu.memory_space<vmem>>, %arg3: memref<6x8xf32, #tpu.memory_space<vmem>>, %arg4: memref<12x8xf32, #tpu.memory_space<vmem>>, %arg5: memref<8x12xf32, #tpu.memory_space<vmem>>, %arg6: memref<6x4xf32, #tpu.memory_space<vmem>>, %arg7: memref<4x6xf32, #tpu.memory_space<vmem>>, %arg8: memref<4x8xf32, #tpu.memory_space<vmem>>, %arg9: memref<2x8xf32, #tpu.memory_space<vmem>>, %arg10: memref<2x4xf32, #tpu.memory_space<vmem>>, %arg11: memref<8x2xf32, #tpu.memory_space<vmem>>, %arg12: memref<4x2xf32, #tpu.memory_space<vmem>>, %arg13: memref<32x1024xf32, #tpu.memory_space<vmem>>, %arg14: memref<1024x32xf32, #tpu.memory_space<vmem>>, %arg15: memref<32x4xf32, #tpu.memory_space<vmem>>, %arg16: memref<4x32xf32, #tpu.memory_space<vmem>>, %arg17: memref<16x32xf32, #tpu.memory_space<vmem>>, %arg18: memref<1x32xf32, #tpu.memory_space<vmem>>, %arg19: memref<32x32xf32, #tpu.memory_space<vmem>>, %arg20: memref<1x32xf32, #tpu.memory_space<vmem>>, %arg21: memref<16x32xf32, #tpu.memory_space<vmem>>, %arg22: memref<1x32xf32, #tpu.memory_space<vmem>>, %arg23: memref<32x32xf32, #tpu.memory_space<vmem>>, %arg24: memref<1x32xf32, #tpu.memory_space<vmem>>, %arg25: memref<8x1024xf32, #tpu.memory_space<vmem>>, %arg26: memref<1x1024xf32, #tpu.memory_space<vmem>>, %arg27: memref<1x32xf32, #tpu.memory_space<vmem>>, %arg28: memref<8x1024xf32, #tpu.memory_space<vmem>>, %arg29: memref<1x1024xf32, #tpu.memory_space<vmem>>, %arg30: memref<1x32xf32, #tpu.memory_space<vmem>>, %arg31: memref<32x32xf32, #tpu.memory_space<vmem>>, %arg32: memref<32x32xf32, #tpu.memory_space<vmem>>, %arg33: memref<32x32xf32, #tpu.memory_space<vmem>>, %arg34: memref<32x32xf32, #tpu.memory_space<vmem>>, %arg35: memref<1x32xf32, #tpu.memory_space<vmem>>, %arg36: memref<32x96xf32, #tpu.memory_space<vmem>>, %arg37: memref<32x96xf32, #tpu.memory_space<vmem>>, %arg38: memref<1x96xf32, #tpu.memory_space<vmem>>, %arg39: memref<1x96xf32, #tpu.memory_space<vmem>>, %arg40: memref<32x96xf32, #tpu.memory_space<vmem>>, %arg41: memref<32x96xf32, #tpu.memory_space<vmem>>, %arg42: memref<1x96xf32, #tpu.memory_space<vmem>>, %arg43: memref<1x96xf32, #tpu.memory_space<vmem>>, %arg44: memref<1x32xf32, #tpu.memory_space<vmem>>, %arg45: memref<1x1xf32, #tpu.memory_space<vmem>>, %arg46: memref<1x32xf32, #tpu.memory_space<vmem>>, %arg47: memref<1x1xf32, #tpu.memory_space<vmem>>, %arg48: memref<32x64xf32, #tpu.memory_space<vmem>>, %arg49: memref<32x64xf32, #tpu.memory_space<vmem>>, %arg50: memref<32x64xf32, #tpu.memory_space<vmem>>, %arg51: memref<32x64xf32, #tpu.memory_space<vmem>>, %arg52: memref<1x64xf32, #tpu.memory_space<vmem>>, %arg53: memref<64x2xf32, #tpu.memory_space<vmem>>, %arg54: memref<1x2xf32, #tpu.memory_space<vmem>>, %arg55: memref<2x2xf32, #tpu.memory_space<vmem>>, %arg56: memref<1x2xf32, #tpu.memory_space<vmem>>, %arg57: memref<2x2xf32, #tpu.memory_space<vmem>>) attributes {dimension_semantics = [], scalar_prefetch = 0 : i64, scratch_operands = 0 : i64, tpu.core_type = #tpu.core_type<tc>} {
    %c0 = arith.constant 0 : index
    %c0_0 = arith.constant 0 : index
    %0 = vector.load %arg0[%c0, %c0_0] : memref<8x16xf32, #tpu.memory_space<vmem>>, vector<8x16xf32>
    %c0_1 = arith.constant 0 : index
    %c0_2 = arith.constant 0 : index
    %1 = vector.load %arg1[%c0_1, %c0_2] : memref<12x8xf32, #tpu.memory_space<vmem>>, vector<12x8xf32>
    %c0_3 = arith.constant 0 : index
    %c0_4 = arith.constant 0 : index
    %2 = vector.load %arg2[%c0_3, %c0_4] : memref<4x16xf32, #tpu.memory_space<vmem>>, vector<4x16xf32>
    %c0_5 = arith.constant 0 : index
    %c0_6 = arith.constant 0 : index
    %3 = vector.load %arg3[%c0_5, %c0_6] : memref<6x8xf32, #tpu.memory_space<vmem>>, vector<6x8xf32>
    %c0_7 = arith.constant 0 : index
    %c0_8 = arith.constant 0 : index
    %4 = vector.load %arg4[%c0_7, %c0_8] : memref<12x8xf32, #tpu.memory_space<vmem>>, vector<12x8xf32>
    %c0_9 = arith.constant 0 : index
    %c0_10 = arith.constant 0 : index
    %5 = vector.load %arg5[%c0_9, %c0_10] : memref<8x12xf32, #tpu.memory_space<vmem>>, vector<8x12xf32>
    %c0_11 = arith.constant 0 : index
    %c0_12 = arith.constant 0 : index
    %6 = vector.load %arg6[%c0_11, %c0_12] : memref<6x4xf32, #tpu.memory_space<vmem>>, vector<6x4xf32>
    %c0_13 = arith.constant 0 : index
    %c0_14 = arith.constant 0 : index
    %7 = vector.load %arg7[%c0_13, %c0_14] : memref<4x6xf32, #tpu.memory_space<vmem>>, vector<4x6xf32>
    %c0_15 = arith.constant 0 : index
    %c0_16 = arith.constant 0 : index
    %8 = vector.load %arg8[%c0_15, %c0_16] : memref<4x8xf32, #tpu.memory_space<vmem>>, vector<4x8xf32>
    %c0_17 = arith.constant 0 : index
    %c0_18 = arith.constant 0 : index
    %9 = vector.load %arg9[%c0_17, %c0_18] : memref<2x8xf32, #tpu.memory_space<vmem>>, vector<2x8xf32>
    %c0_19 = arith.constant 0 : index
    %c0_20 = arith.constant 0 : index
    %10 = vector.load %arg10[%c0_19, %c0_20] : memref<2x4xf32, #tpu.memory_space<vmem>>, vector<2x4xf32>
    %c0_21 = arith.constant 0 : index
    %c0_22 = arith.constant 0 : index
    %11 = vector.load %arg11[%c0_21, %c0_22] : memref<8x2xf32, #tpu.memory_space<vmem>>, vector<8x2xf32>
    %c0_23 = arith.constant 0 : index
    %c0_24 = arith.constant 0 : index
    %12 = vector.load %arg12[%c0_23, %c0_24] : memref<4x2xf32, #tpu.memory_space<vmem>>, vector<4x2xf32>
    %c0_25 = arith.constant 0 : index
    %c0_26 = arith.constant 0 : index
    %13 = vector.load %arg13[%c0_25, %c0_26] : memref<32x1024xf32, #tpu.memory_space<vmem>>, vector<32x1024xf32>
    %c0_27 = arith.constant 0 : index
    %c0_28 = arith.constant 0 : index
    %14 = vector.load %arg14[%c0_27, %c0_28] : memref<1024x32xf32, #tpu.memory_space<vmem>>, vector<1024x32xf32>
    %c0_29 = arith.constant 0 : index
    %c0_30 = arith.constant 0 : index
    %15 = vector.load %arg15[%c0_29, %c0_30] : memref<32x4xf32, #tpu.memory_space<vmem>>, vector<32x4xf32>
    %c0_31 = arith.constant 0 : index
    %c0_32 = arith.constant 0 : index
    %16 = vector.load %arg16[%c0_31, %c0_32] : memref<4x32xf32, #tpu.memory_space<vmem>>, vector<4x32xf32>
    %c0_33 = arith.constant 0 : index
    %c0_34 = arith.constant 0 : index
    %17 = vector.load %arg17[%c0_33, %c0_34] : memref<16x32xf32, #tpu.memory_space<vmem>>, vector<16x32xf32>
    %c0_35 = arith.constant 0 : index
    %c0_36 = arith.constant 0 : index
    %18 = vector.load %arg18[%c0_35, %c0_36] : memref<1x32xf32, #tpu.memory_space<vmem>>, vector<1x32xf32>
    %c0_37 = arith.constant 0 : index
    %c0_38 = arith.constant 0 : index
    %19 = vector.load %arg19[%c0_37, %c0_38] : memref<32x32xf32, #tpu.memory_space<vmem>>, vector<32x32xf32>
    %c0_39 = arith.constant 0 : index
    %c0_40 = arith.constant 0 : index
    %20 = vector.load %arg20[%c0_39, %c0_40] : memref<1x32xf32, #tpu.memory_space<vmem>>, vector<1x32xf32>
    %c0_41 = arith.constant 0 : index
    %c0_42 = arith.constant 0 : index
    %21 = vector.load %arg21[%c0_41, %c0_42] : memref<16x32xf32, #tpu.memory_space<vmem>>, vector<16x32xf32>
    %c0_43 = arith.constant 0 : index
    %c0_44 = arith.constant 0 : index
    %22 = vector.load %arg22[%c0_43, %c0_44] : memref<1x32xf32, #tpu.memory_space<vmem>>, vector<1x32xf32>
    %c0_45 = arith.constant 0 : index
    %c0_46 = arith.constant 0 : index
    %23 = vector.load %arg23[%c0_45, %c0_46] : memref<32x32xf32, #tpu.memory_space<vmem>>, vector<32x32xf32>
    %c0_47 = arith.constant 0 : index
    %c0_48 = arith.constant 0 : index
    %24 = vector.load %arg24[%c0_47, %c0_48] : memref<1x32xf32, #tpu.memory_space<vmem>>, vector<1x32xf32>
    %c0_49 = arith.constant 0 : index
    %c0_50 = arith.constant 0 : index
    %25 = vector.load %arg25[%c0_49, %c0_50] : memref<8x1024xf32, #tpu.memory_space<vmem>>, vector<8x1024xf32>
    %c0_51 = arith.constant 0 : index
    %c0_52 = arith.constant 0 : index
    %26 = vector.load %arg26[%c0_51, %c0_52] : memref<1x1024xf32, #tpu.memory_space<vmem>>, vector<1x1024xf32>
    %c0_53 = arith.constant 0 : index
    %c0_54 = arith.constant 0 : index
    %27 = vector.load %arg27[%c0_53, %c0_54] : memref<1x32xf32, #tpu.memory_space<vmem>>, vector<1x32xf32>
    %c0_55 = arith.constant 0 : index
    %c0_56 = arith.constant 0 : index
    %28 = vector.load %arg28[%c0_55, %c0_56] : memref<8x1024xf32, #tpu.memory_space<vmem>>, vector<8x1024xf32>
    %c0_57 = arith.constant 0 : index
    %c0_58 = arith.constant 0 : index
    %29 = vector.load %arg29[%c0_57, %c0_58] : memref<1x1024xf32, #tpu.memory_space<vmem>>, vector<1x1024xf32>
    %c0_59 = arith.constant 0 : index
    %c0_60 = arith.constant 0 : index
    %30 = vector.load %arg30[%c0_59, %c0_60] : memref<1x32xf32, #tpu.memory_space<vmem>>, vector<1x32xf32>
    %c0_61 = arith.constant 0 : index
    %c0_62 = arith.constant 0 : index
    %31 = vector.load %arg31[%c0_61, %c0_62] : memref<32x32xf32, #tpu.memory_space<vmem>>, vector<32x32xf32>
    %c0_63 = arith.constant 0 : index
    %c0_64 = arith.constant 0 : index
    %32 = vector.load %arg32[%c0_63, %c0_64] : memref<32x32xf32, #tpu.memory_space<vmem>>, vector<32x32xf32>
    %c0_65 = arith.constant 0 : index
    %c0_66 = arith.constant 0 : index
    %33 = vector.load %arg33[%c0_65, %c0_66] : memref<32x32xf32, #tpu.memory_space<vmem>>, vector<32x32xf32>
    %c0_67 = arith.constant 0 : index
    %c0_68 = arith.constant 0 : index
    %34 = vector.load %arg34[%c0_67, %c0_68] : memref<32x32xf32, #tpu.memory_space<vmem>>, vector<32x32xf32>
    %c0_69 = arith.constant 0 : index
    %c0_70 = arith.constant 0 : index
    %35 = vector.load %arg35[%c0_69, %c0_70] : memref<1x32xf32, #tpu.memory_space<vmem>>, vector<1x32xf32>
    %c0_71 = arith.constant 0 : index
    %c0_72 = arith.constant 0 : index
    %36 = vector.load %arg36[%c0_71, %c0_72] : memref<32x96xf32, #tpu.memory_space<vmem>>, vector<32x96xf32>
    %c0_73 = arith.constant 0 : index
    %c0_74 = arith.constant 0 : index
    %37 = vector.load %arg37[%c0_73, %c0_74] : memref<32x96xf32, #tpu.memory_space<vmem>>, vector<32x96xf32>
    %c0_75 = arith.constant 0 : index
    %c0_76 = arith.constant 0 : index
    %38 = vector.load %arg38[%c0_75, %c0_76] : memref<1x96xf32, #tpu.memory_space<vmem>>, vector<1x96xf32>
    %c0_77 = arith.constant 0 : index
    %c0_78 = arith.constant 0 : index
    %39 = vector.load %arg39[%c0_77, %c0_78] : memref<1x96xf32, #tpu.memory_space<vmem>>, vector<1x96xf32>
    %c0_79 = arith.constant 0 : index
    %c0_80 = arith.constant 0 : index
    %40 = vector.load %arg40[%c0_79, %c0_80] : memref<32x96xf32, #tpu.memory_space<vmem>>, vector<32x96xf32>
    %c0_81 = arith.constant 0 : index
    %c0_82 = arith.constant 0 : index
    %41 = vector.load %arg41[%c0_81, %c0_82] : memref<32x96xf32, #tpu.memory_space<vmem>>, vector<32x96xf32>
    %c0_83 = arith.constant 0 : index
    %c0_84 = arith.constant 0 : index
    %42 = vector.load %arg42[%c0_83, %c0_84] : memref<1x96xf32, #tpu.memory_space<vmem>>, vector<1x96xf32>
    %c0_85 = arith.constant 0 : index
    %c0_86 = arith.constant 0 : index
    %43 = vector.load %arg43[%c0_85, %c0_86] : memref<1x96xf32, #tpu.memory_space<vmem>>, vector<1x96xf32>
    %c0_87 = arith.constant 0 : index
    %c0_88 = arith.constant 0 : index
    %44 = vector.load %arg44[%c0_87, %c0_88] : memref<1x32xf32, #tpu.memory_space<vmem>>, vector<1x32xf32>
    %c0_89 = arith.constant 0 : index
    %c0_90 = arith.constant 0 : index
    %45 = vector.load %arg45[%c0_89, %c0_90] : memref<1x1xf32, #tpu.memory_space<vmem>>, vector<1x1xf32>
    %c0_91 = arith.constant 0 : index
    %c0_92 = arith.constant 0 : index
    %46 = vector.load %arg46[%c0_91, %c0_92] : memref<1x32xf32, #tpu.memory_space<vmem>>, vector<1x32xf32>
    %c0_93 = arith.constant 0 : index
    %c0_94 = arith.constant 0 : index
    %47 = vector.load %arg47[%c0_93, %c0_94] : memref<1x1xf32, #tpu.memory_space<vmem>>, vector<1x1xf32>
    %c0_95 = arith.constant 0 : index
    %c0_96 = arith.constant 0 : index
    %48 = vector.load %arg48[%c0_95, %c0_96] : memref<32x64xf32, #tpu.memory_space<vmem>>, vector<32x64xf32>
    %c0_97 = arith.constant 0 : index
    %c0_98 = arith.constant 0 : index
    %49 = vector.load %arg49[%c0_97, %c0_98] : memref<32x64xf32, #tpu.memory_space<vmem>>, vector<32x64xf32>
    %c0_99 = arith.constant 0 : index
    %c0_100 = arith.constant 0 : index
    %50 = vector.load %arg50[%c0_99, %c0_100] : memref<32x64xf32, #tpu.memory_space<vmem>>, vector<32x64xf32>
    %c0_101 = arith.constant 0 : index
    %c0_102 = arith.constant 0 : index
    %51 = vector.load %arg51[%c0_101, %c0_102] : memref<32x64xf32, #tpu.memory_space<vmem>>, vector<32x64xf32>
    %c0_103 = arith.constant 0 : index
    %c0_104 = arith.constant 0 : index
    %52 = vector.load %arg52[%c0_103, %c0_104] : memref<1x64xf32, #tpu.memory_space<vmem>>, vector<1x64xf32>
    %c0_105 = arith.constant 0 : index
    %c0_106 = arith.constant 0 : index
    %53 = vector.load %arg53[%c0_105, %c0_106] : memref<64x2xf32, #tpu.memory_space<vmem>>, vector<64x2xf32>
    %c0_107 = arith.constant 0 : index
    %c0_108 = arith.constant 0 : index
    %54 = vector.load %arg54[%c0_107, %c0_108] : memref<1x2xf32, #tpu.memory_space<vmem>>, vector<1x2xf32>
    %c0_109 = arith.constant 0 : index
    %c0_110 = arith.constant 0 : index
    %55 = vector.load %arg55[%c0_109, %c0_110] : memref<2x2xf32, #tpu.memory_space<vmem>>, vector<2x2xf32>
    %c0_111 = arith.constant 0 : index
    %c0_112 = arith.constant 0 : index
    %56 = vector.load %arg56[%c0_111, %c0_112] : memref<1x2xf32, #tpu.memory_space<vmem>>, vector<1x2xf32>
    %cst = arith.constant dense<0.000000e+00> : vector<8x32xf32>
    %57 = tpu.matmul %0, %17, %cst {dimension_numbers = #tpu.dot_dimension_numbers<[1], [0], [0], [1], [0, 0, 1, 1], [], []>} : vector<8x16xf32>, vector<16x32xf32>, vector<8x32xf32> -> vector<8x32xf32>
    %58 = vector.broadcast %18 : vector<1x32xf32> to vector<8x32xf32>
    %59 = arith.addf %57, %58 : vector<8x32xf32>
    %cst_113 = arith.constant 0.000000e+00 : f32
    %60 = vector.broadcast %cst_113 : f32 to vector<8x32xf32>
    %61 = arith.maximumf %59, %60 : vector<8x32xf32>
    %cst_114 = arith.constant dense<0.000000e+00> : vector<8x32xf32>
    %62 = tpu.matmul %61, %19, %cst_114 {dimension_numbers = #tpu.dot_dimension_numbers<[1], [0], [0], [1], [0, 0, 1, 1], [], []>} : vector<8x32xf32>, vector<32x32xf32>, vector<8x32xf32> -> vector<8x32xf32>
    %63 = vector.broadcast %20 : vector<1x32xf32> to vector<8x32xf32>
    %64 = arith.addf %62, %63 : vector<8x32xf32>
    %cst_115 = arith.constant 0.000000e+00 : f32
    %65 = vector.broadcast %cst_115 : f32 to vector<8x32xf32>
    %66 = arith.maximumf %64, %65 : vector<8x32xf32>
    %cst_116 = arith.constant dense<0.000000e+00> : vector<4x32xf32>
    %67 = tpu.matmul %2, %21, %cst_116 {dimension_numbers = #tpu.dot_dimension_numbers<[1], [0], [0], [1], [0, 0, 1, 1], [], []>} : vector<4x16xf32>, vector<16x32xf32>, vector<4x32xf32> -> vector<4x32xf32>
    %68 = vector.broadcast %22 : vector<1x32xf32> to vector<4x32xf32>
    %69 = arith.addf %67, %68 : vector<4x32xf32>
    %cst_117 = arith.constant 0.000000e+00 : f32
    %70 = vector.broadcast %cst_117 : f32 to vector<4x32xf32>
    %71 = arith.maximumf %69, %70 : vector<4x32xf32>
    %cst_118 = arith.constant dense<0.000000e+00> : vector<4x32xf32>
    %72 = tpu.matmul %71, %23, %cst_118 {dimension_numbers = #tpu.dot_dimension_numbers<[1], [0], [0], [1], [0, 0, 1, 1], [], []>} : vector<4x32xf32>, vector<32x32xf32>, vector<4x32xf32> -> vector<4x32xf32>
    %73 = vector.broadcast %24 : vector<1x32xf32> to vector<4x32xf32>
    %74 = arith.addf %72, %73 : vector<4x32xf32>
    %cst_119 = arith.constant 0.000000e+00 : f32
    %75 = vector.broadcast %cst_119 : f32 to vector<4x32xf32>
    %76 = arith.maximumf %74, %75 : vector<4x32xf32>
    %cst_120 = arith.constant dense<0.000000e+00> : vector<6x1024xf32>
    %77 = tpu.matmul %3, %25, %cst_120 {dimension_numbers = #tpu.dot_dimension_numbers<[1], [0], [0], [1], [0, 0, 1, 1], [], []>} : vector<6x8xf32>, vector<8x1024xf32>, vector<6x1024xf32> -> vector<6x1024xf32>
    %78 = vector.broadcast %26 : vector<1x1024xf32> to vector<6x1024xf32>
    %79 = arith.addf %77, %78 : vector<6x1024xf32>
    %cst_121 = arith.constant dense<0.000000e+00> : vector<12x1024xf32>
    %80 = tpu.matmul %1, %28, %cst_121 {dimension_numbers = #tpu.dot_dimension_numbers<[1], [0], [0], [1], [0, 0, 1, 1], [], []>} : vector<12x8xf32>, vector<8x1024xf32>, vector<12x1024xf32> -> vector<12x1024xf32>
    %81 = vector.broadcast %29 : vector<1x1024xf32> to vector<12x1024xf32>
    %82 = arith.addf %80, %81 : vector<12x1024xf32>
    %cst_122 = arith.constant dense<0.000000e+00> : vector<6x32xf32>
    %83 = tpu.matmul %6, %76, %cst_122 {dimension_numbers = #tpu.dot_dimension_numbers<[1], [0], [0], [1], [0, 0, 1, 1], [], []>} : vector<6x4xf32>, vector<4x32xf32>, vector<6x32xf32> -> vector<6x32xf32>
    %cst_123 = arith.constant dense<0.000000e+00> : vector<6x1024xf32>
    %84 = tpu.matmul %83, %13, %cst_123 {dimension_numbers = #tpu.dot_dimension_numbers<[1], [0], [0], [1], [0, 0, 1, 1], [], []>} : vector<6x32xf32>, vector<32x1024xf32>, vector<6x1024xf32> -> vector<6x1024xf32>
    %85 = arith.mulf %84, %79 : vector<6x1024xf32>
    %cst_124 = arith.constant dense<0.000000e+00> : vector<6x32xf32>
    %86 = tpu.matmul %85, %14, %cst_124 {dimension_numbers = #tpu.dot_dimension_numbers<[1], [0], [0], [1], [0, 0, 1, 1], [], []>} : vector<6x1024xf32>, vector<1024x32xf32>, vector<6x32xf32> -> vector<6x32xf32>
    %cst_125 = arith.constant dense<0.000000e+00> : vector<4x32xf32>
    %87 = tpu.matmul %7, %86, %cst_125 {dimension_numbers = #tpu.dot_dimension_numbers<[1], [0], [0], [1], [0, 0, 1, 1], [], []>} : vector<4x6xf32>, vector<6x32xf32>, vector<4x32xf32> -> vector<4x32xf32>
    %88 = vector.broadcast %27 : vector<1x32xf32> to vector<4x32xf32>
    %89 = arith.addf %87, %88 : vector<4x32xf32>
    %cst_126 = arith.constant dense<0.000000e+00> : vector<12x32xf32>
    %90 = tpu.matmul %4, %66, %cst_126 {dimension_numbers = #tpu.dot_dimension_numbers<[1], [0], [0], [1], [0, 0, 1, 1], [], []>} : vector<12x8xf32>, vector<8x32xf32>, vector<12x32xf32> -> vector<12x32xf32>
    %cst_127 = arith.constant dense<0.000000e+00> : vector<12x1024xf32>
    %91 = tpu.matmul %90, %13, %cst_127 {dimension_numbers = #tpu.dot_dimension_numbers<[1], [0], [0], [1], [0, 0, 1, 1], [], []>} : vector<12x32xf32>, vector<32x1024xf32>, vector<12x1024xf32> -> vector<12x1024xf32>
    %92 = arith.mulf %91, %82 : vector<12x1024xf32>
    %cst_128 = arith.constant dense<0.000000e+00> : vector<12x32xf32>
    %93 = tpu.matmul %92, %14, %cst_128 {dimension_numbers = #tpu.dot_dimension_numbers<[1], [0], [0], [1], [0, 0, 1, 1], [], []>} : vector<12x1024xf32>, vector<1024x32xf32>, vector<12x32xf32> -> vector<12x32xf32>
    %cst_129 = arith.constant dense<0.000000e+00> : vector<8x32xf32>
    %94 = tpu.matmul %5, %93, %cst_129 {dimension_numbers = #tpu.dot_dimension_numbers<[1], [0], [0], [1], [0, 0, 1, 1], [], []>} : vector<8x12xf32>, vector<12x32xf32>, vector<8x32xf32> -> vector<8x32xf32>
    %95 = vector.broadcast %30 : vector<1x32xf32> to vector<8x32xf32>
    %96 = arith.addf %94, %95 : vector<8x32xf32>
    %cst_130 = arith.constant dense<0.000000e+00> : vector<4x32xf32>
    %97 = tpu.matmul %8, %96, %cst_130 {dimension_numbers = #tpu.dot_dimension_numbers<[1], [0], [0], [1], [0, 0, 1, 1], [], []>} : vector<4x8xf32>, vector<8x32xf32>, vector<4x32xf32> -> vector<4x32xf32>
    %cst_131 = arith.constant dense<0.000000e+00> : vector<4x32xf32>
    %98 = tpu.matmul %76, %31, %cst_131 {dimension_numbers = #tpu.dot_dimension_numbers<[1], [0], [0], [1], [0, 0, 1, 1], [], []>} : vector<4x32xf32>, vector<32x32xf32>, vector<4x32xf32> -> vector<4x32xf32>
    %cst_132 = arith.constant dense<0.000000e+00> : vector<4x32xf32>
    %99 = tpu.matmul %97, %32, %cst_132 {dimension_numbers = #tpu.dot_dimension_numbers<[1], [0], [0], [1], [0, 0, 1, 1], [], []>} : vector<4x32xf32>, vector<32x32xf32>, vector<4x32xf32> -> vector<4x32xf32>
    %cst_133 = arith.constant dense<0.000000e+00> : vector<4x32xf32>
    %100 = tpu.matmul %89, %32, %cst_133 {dimension_numbers = #tpu.dot_dimension_numbers<[1], [0], [0], [1], [0, 0, 1, 1], [], []>} : vector<4x32xf32>, vector<32x32xf32>, vector<4x32xf32> -> vector<4x32xf32>
    %cst_134 = arith.constant dense<0.000000e+00> : vector<4x32xf32>
    %101 = tpu.matmul %97, %33, %cst_134 {dimension_numbers = #tpu.dot_dimension_numbers<[1], [0], [0], [1], [0, 0, 1, 1], [], []>} : vector<4x32xf32>, vector<32x32xf32>, vector<4x32xf32> -> vector<4x32xf32>
    %cst_135 = arith.constant dense<0.000000e+00> : vector<4x32xf32>
    %102 = tpu.matmul %89, %33, %cst_135 {dimension_numbers = #tpu.dot_dimension_numbers<[1], [0], [0], [1], [0, 0, 1, 1], [], []>} : vector<4x32xf32>, vector<32x32xf32>, vector<4x32xf32> -> vector<4x32xf32>
    %103 = arith.mulf %98, %99 : vector<4x32xf32>
    %cst_136 = arith.constant dense<0.000000e+00> : vector<4x4xf32>
    %104 = tpu.matmul %103, %15, %cst_136 {dimension_numbers = #tpu.dot_dimension_numbers<[1], [0], [0], [1], [0, 0, 1, 1], [], []>} : vector<4x32xf32>, vector<32x4xf32>, vector<4x4xf32> -> vector<4x4xf32>
    %cst_137 = arith.constant 1.250000e-01 : f32
    %105 = vector.broadcast %cst_137 : f32 to vector<4x4xf32>
    %106 = arith.mulf %104, %105 : vector<4x4xf32>
    %107 = arith.mulf %98, %100 : vector<4x32xf32>
    %cst_138 = arith.constant dense<0.000000e+00> : vector<4x4xf32>
    %108 = tpu.matmul %107, %15, %cst_138 {dimension_numbers = #tpu.dot_dimension_numbers<[1], [0], [0], [1], [0, 0, 1, 1], [], []>} : vector<4x32xf32>, vector<32x4xf32>, vector<4x4xf32> -> vector<4x4xf32>
    %cst_139 = arith.constant 1.250000e-01 : f32
    %109 = vector.broadcast %cst_139 : f32 to vector<4x4xf32>
    %110 = arith.mulf %108, %109 : vector<4x4xf32>
    %111 = arith.maximumf %106, %110 : vector<4x4xf32>
    %112 = arith.subf %106, %111 : vector<4x4xf32>
    %113 = math.exp %112 : vector<4x4xf32>
    %114 = arith.subf %110, %111 : vector<4x4xf32>
    %115 = math.exp %114 : vector<4x4xf32>
    %116 = arith.addf %113, %115 : vector<4x4xf32>
    %cst_140 = arith.constant 1.000000e+00 : f32
    %117 = vector.broadcast %cst_140 : f32 to vector<4x4xf32>
    %118 = arith.divf %117, %116 : vector<4x4xf32>
    %119 = arith.mulf %113, %118 : vector<4x4xf32>
    %cst_141 = arith.constant dense<0.000000e+00> : vector<4x32xf32>
    %120 = tpu.matmul %119, %16, %cst_141 {dimension_numbers = #tpu.dot_dimension_numbers<[1], [0], [0], [1], [0, 0, 1, 1], [], []>} : vector<4x4xf32>, vector<4x32xf32>, vector<4x32xf32> -> vector<4x32xf32>
    %121 = arith.mulf %115, %118 : vector<4x4xf32>
    %cst_142 = arith.constant dense<0.000000e+00> : vector<4x32xf32>
    %122 = tpu.matmul %121, %16, %cst_142 {dimension_numbers = #tpu.dot_dimension_numbers<[1], [0], [0], [1], [0, 0, 1, 1], [], []>} : vector<4x4xf32>, vector<4x32xf32>, vector<4x32xf32> -> vector<4x32xf32>
    %123 = arith.mulf %120, %101 : vector<4x32xf32>
    %124 = arith.mulf %122, %102 : vector<4x32xf32>
    %125 = arith.addf %123, %124 : vector<4x32xf32>
    %cst_143 = arith.constant dense<0.000000e+00> : vector<4x32xf32>
    %126 = tpu.matmul %125, %34, %cst_143 {dimension_numbers = #tpu.dot_dimension_numbers<[1], [0], [0], [1], [0, 0, 1, 1], [], []>} : vector<4x32xf32>, vector<32x32xf32>, vector<4x32xf32> -> vector<4x32xf32>
    %127 = vector.broadcast %35 : vector<1x32xf32> to vector<4x32xf32>
    %128 = arith.addf %126, %127 : vector<4x32xf32>
    %cst_144 = arith.constant dense<0.000000e+00> : vector<4x96xf32>
    %129 = tpu.matmul %128, %36, %cst_144 {dimension_numbers = #tpu.dot_dimension_numbers<[1], [0], [0], [1], [0, 0, 1, 1], [], []>} : vector<4x32xf32>, vector<32x96xf32>, vector<4x96xf32> -> vector<4x96xf32>
    %130 = vector.broadcast %38 : vector<1x96xf32> to vector<4x96xf32>
    %131 = arith.addf %129, %130 : vector<4x96xf32>
    %cst_145 = arith.constant dense<0.000000e+00> : vector<4x96xf32>
    %132 = tpu.matmul %76, %37, %cst_145 {dimension_numbers = #tpu.dot_dimension_numbers<[1], [0], [0], [1], [0, 0, 1, 1], [], []>} : vector<4x32xf32>, vector<32x96xf32>, vector<4x96xf32> -> vector<4x96xf32>
    %133 = vector.broadcast %39 : vector<1x96xf32> to vector<4x96xf32>
    %134 = arith.addf %132, %133 : vector<4x96xf32>
    %135 = vector.extract_strided_slice %131 {offsets = [0, 0], sizes = [4, 32], strides = [1, 1]} : vector<4x96xf32> to vector<4x32xf32>
    %136 = vector.extract_strided_slice %134 {offsets = [0, 0], sizes = [4, 32], strides = [1, 1]} : vector<4x96xf32> to vector<4x32xf32>
    %137 = arith.addf %135, %136 : vector<4x32xf32>
    %138 = arith.negf %137 : vector<4x32xf32>
    %139 = math.exp %138 : vector<4x32xf32>
    %cst_146 = arith.constant 1.000000e+00 : f32
    %140 = vector.broadcast %cst_146 : f32 to vector<4x32xf32>
    %141 = arith.addf %140, %139 : vector<4x32xf32>
    %142 = arith.divf %140, %141 : vector<4x32xf32>
    %143 = vector.extract_strided_slice %131 {offsets = [0, 32], sizes = [4, 32], strides = [1, 1]} : vector<4x96xf32> to vector<4x32xf32>
    %144 = vector.extract_strided_slice %134 {offsets = [0, 32], sizes = [4, 32], strides = [1, 1]} : vector<4x96xf32> to vector<4x32xf32>
    %145 = arith.addf %143, %144 : vector<4x32xf32>
    %146 = arith.negf %145 : vector<4x32xf32>
    %147 = math.exp %146 : vector<4x32xf32>
    %cst_147 = arith.constant 1.000000e+00 : f32
    %148 = vector.broadcast %cst_147 : f32 to vector<4x32xf32>
    %149 = arith.addf %148, %147 : vector<4x32xf32>
    %150 = arith.divf %148, %149 : vector<4x32xf32>
    %151 = vector.extract_strided_slice %131 {offsets = [0, 64], sizes = [4, 32], strides = [1, 1]} : vector<4x96xf32> to vector<4x32xf32>
    %152 = vector.extract_strided_slice %134 {offsets = [0, 64], sizes = [4, 32], strides = [1, 1]} : vector<4x96xf32> to vector<4x32xf32>
    %153 = arith.mulf %142, %152 : vector<4x32xf32>
    %154 = arith.addf %151, %153 : vector<4x32xf32>
    %155 = math.tanh %154 : vector<4x32xf32>
    %cst_148 = arith.constant 1.000000e+00 : f32
    %156 = vector.broadcast %cst_148 : f32 to vector<4x32xf32>
    %157 = arith.subf %156, %150 : vector<4x32xf32>
    %158 = arith.mulf %157, %155 : vector<4x32xf32>
    %159 = arith.mulf %150, %76 : vector<4x32xf32>
    %160 = arith.addf %158, %159 : vector<4x32xf32>
    %cst_149 = arith.constant dense<0.000000e+00> : vector<8x96xf32>
    %161 = tpu.matmul %96, %40, %cst_149 {dimension_numbers = #tpu.dot_dimension_numbers<[1], [0], [0], [1], [0, 0, 1, 1], [], []>} : vector<8x32xf32>, vector<32x96xf32>, vector<8x96xf32> -> vector<8x96xf32>
    %162 = vector.broadcast %42 : vector<1x96xf32> to vector<8x96xf32>
    %163 = arith.addf %161, %162 : vector<8x96xf32>
    %cst_150 = arith.constant dense<0.000000e+00> : vector<8x96xf32>
    %164 = tpu.matmul %66, %41, %cst_150 {dimension_numbers = #tpu.dot_dimension_numbers<[1], [0], [0], [1], [0, 0, 1, 1], [], []>} : vector<8x32xf32>, vector<32x96xf32>, vector<8x96xf32> -> vector<8x96xf32>
    %165 = vector.broadcast %43 : vector<1x96xf32> to vector<8x96xf32>
    %166 = arith.addf %164, %165 : vector<8x96xf32>
    %167 = vector.extract_strided_slice %163 {offsets = [0, 0], sizes = [8, 32], strides = [1, 1]} : vector<8x96xf32> to vector<8x32xf32>
    %168 = vector.extract_strided_slice %166 {offsets = [0, 0], sizes = [8, 32], strides = [1, 1]} : vector<8x96xf32> to vector<8x32xf32>
    %169 = arith.addf %167, %168 : vector<8x32xf32>
    %170 = arith.negf %169 : vector<8x32xf32>
    %171 = math.exp %170 : vector<8x32xf32>
    %cst_151 = arith.constant 1.000000e+00 : f32
    %172 = vector.broadcast %cst_151 : f32 to vector<8x32xf32>
    %173 = arith.addf %172, %171 : vector<8x32xf32>
    %174 = arith.divf %172, %173 : vector<8x32xf32>
    %175 = vector.extract_strided_slice %163 {offsets = [0, 32], sizes = [8, 32], strides = [1, 1]} : vector<8x96xf32> to vector<8x32xf32>
    %176 = vector.extract_strided_slice %166 {offsets = [0, 32], sizes = [8, 32], strides = [1, 1]} : vector<8x96xf32> to vector<8x32xf32>
    %177 = arith.addf %175, %176 : vector<8x32xf32>
    %178 = arith.negf %177 : vector<8x32xf32>
    %179 = math.exp %178 : vector<8x32xf32>
    %cst_152 = arith.constant 1.000000e+00 : f32
    %180 = vector.broadcast %cst_152 : f32 to vector<8x32xf32>
    %181 = arith.addf %180, %179 : vector<8x32xf32>
    %182 = arith.divf %180, %181 : vector<8x32xf32>
    %183 = vector.extract_strided_slice %163 {offsets = [0, 64], sizes = [8, 32], strides = [1, 1]} : vector<8x96xf32> to vector<8x32xf32>
    %184 = vector.extract_strided_slice %166 {offsets = [0, 64], sizes = [8, 32], strides = [1, 1]} : vector<8x96xf32> to vector<8x32xf32>
    %185 = arith.mulf %174, %184 : vector<8x32xf32>
    %186 = arith.addf %183, %185 : vector<8x32xf32>
    %187 = math.tanh %186 : vector<8x32xf32>
    %cst_153 = arith.constant 1.000000e+00 : f32
    %188 = vector.broadcast %cst_153 : f32 to vector<8x32xf32>
    %189 = arith.subf %188, %182 : vector<8x32xf32>
    %190 = arith.mulf %189, %187 : vector<8x32xf32>
    %191 = arith.mulf %182, %66 : vector<8x32xf32>
    %192 = arith.addf %190, %191 : vector<8x32xf32>
    %cst_154 = arith.constant dense<0.000000e+00> : vector<6x32xf32>
    %193 = tpu.matmul %6, %160, %cst_154 {dimension_numbers = #tpu.dot_dimension_numbers<[1], [0], [0], [1], [0, 0, 1, 1], [], []>} : vector<6x4xf32>, vector<4x32xf32>, vector<6x32xf32> -> vector<6x32xf32>
    %cst_155 = arith.constant dense<0.000000e+00> : vector<6x1024xf32>
    %194 = tpu.matmul %193, %13, %cst_155 {dimension_numbers = #tpu.dot_dimension_numbers<[1], [0], [0], [1], [0, 0, 1, 1], [], []>} : vector<6x32xf32>, vector<32x1024xf32>, vector<6x1024xf32> -> vector<6x1024xf32>
    %195 = arith.mulf %194, %79 : vector<6x1024xf32>
    %cst_156 = arith.constant dense<0.000000e+00> : vector<6x32xf32>
    %196 = tpu.matmul %195, %14, %cst_156 {dimension_numbers = #tpu.dot_dimension_numbers<[1], [0], [0], [1], [0, 0, 1, 1], [], []>} : vector<6x1024xf32>, vector<1024x32xf32>, vector<6x32xf32> -> vector<6x32xf32>
    %cst_157 = arith.constant dense<0.000000e+00> : vector<4x32xf32>
    %197 = tpu.matmul %7, %196, %cst_157 {dimension_numbers = #tpu.dot_dimension_numbers<[1], [0], [0], [1], [0, 0, 1, 1], [], []>} : vector<4x6xf32>, vector<6x32xf32>, vector<4x32xf32> -> vector<4x32xf32>
    %198 = vector.broadcast %27 : vector<1x32xf32> to vector<4x32xf32>
    %199 = arith.addf %197, %198 : vector<4x32xf32>
    %cst_158 = arith.constant dense<0.000000e+00> : vector<12x32xf32>
    %200 = tpu.matmul %4, %192, %cst_158 {dimension_numbers = #tpu.dot_dimension_numbers<[1], [0], [0], [1], [0, 0, 1, 1], [], []>} : vector<12x8xf32>, vector<8x32xf32>, vector<12x32xf32> -> vector<12x32xf32>
    %cst_159 = arith.constant dense<0.000000e+00> : vector<12x1024xf32>
    %201 = tpu.matmul %200, %13, %cst_159 {dimension_numbers = #tpu.dot_dimension_numbers<[1], [0], [0], [1], [0, 0, 1, 1], [], []>} : vector<12x32xf32>, vector<32x1024xf32>, vector<12x1024xf32> -> vector<12x1024xf32>
    %202 = arith.mulf %201, %82 : vector<12x1024xf32>
    %cst_160 = arith.constant dense<0.000000e+00> : vector<12x32xf32>
    %203 = tpu.matmul %202, %14, %cst_160 {dimension_numbers = #tpu.dot_dimension_numbers<[1], [0], [0], [1], [0, 0, 1, 1], [], []>} : vector<12x1024xf32>, vector<1024x32xf32>, vector<12x32xf32> -> vector<12x32xf32>
    %cst_161 = arith.constant dense<0.000000e+00> : vector<8x32xf32>
    %204 = tpu.matmul %5, %203, %cst_161 {dimension_numbers = #tpu.dot_dimension_numbers<[1], [0], [0], [1], [0, 0, 1, 1], [], []>} : vector<8x12xf32>, vector<12x32xf32>, vector<8x32xf32> -> vector<8x32xf32>
    %205 = vector.broadcast %30 : vector<1x32xf32> to vector<8x32xf32>
    %206 = arith.addf %204, %205 : vector<8x32xf32>
    %cst_162 = arith.constant dense<0.000000e+00> : vector<4x32xf32>
    %207 = tpu.matmul %8, %206, %cst_162 {dimension_numbers = #tpu.dot_dimension_numbers<[1], [0], [0], [1], [0, 0, 1, 1], [], []>} : vector<4x8xf32>, vector<8x32xf32>, vector<4x32xf32> -> vector<4x32xf32>
    %cst_163 = arith.constant dense<0.000000e+00> : vector<4x32xf32>
    %208 = tpu.matmul %160, %31, %cst_163 {dimension_numbers = #tpu.dot_dimension_numbers<[1], [0], [0], [1], [0, 0, 1, 1], [], []>} : vector<4x32xf32>, vector<32x32xf32>, vector<4x32xf32> -> vector<4x32xf32>
    %cst_164 = arith.constant dense<0.000000e+00> : vector<4x32xf32>
    %209 = tpu.matmul %207, %32, %cst_164 {dimension_numbers = #tpu.dot_dimension_numbers<[1], [0], [0], [1], [0, 0, 1, 1], [], []>} : vector<4x32xf32>, vector<32x32xf32>, vector<4x32xf32> -> vector<4x32xf32>
    %cst_165 = arith.constant dense<0.000000e+00> : vector<4x32xf32>
    %210 = tpu.matmul %199, %32, %cst_165 {dimension_numbers = #tpu.dot_dimension_numbers<[1], [0], [0], [1], [0, 0, 1, 1], [], []>} : vector<4x32xf32>, vector<32x32xf32>, vector<4x32xf32> -> vector<4x32xf32>
    %cst_166 = arith.constant dense<0.000000e+00> : vector<4x32xf32>
    %211 = tpu.matmul %207, %33, %cst_166 {dimension_numbers = #tpu.dot_dimension_numbers<[1], [0], [0], [1], [0, 0, 1, 1], [], []>} : vector<4x32xf32>, vector<32x32xf32>, vector<4x32xf32> -> vector<4x32xf32>
    %cst_167 = arith.constant dense<0.000000e+00> : vector<4x32xf32>
    %212 = tpu.matmul %199, %33, %cst_167 {dimension_numbers = #tpu.dot_dimension_numbers<[1], [0], [0], [1], [0, 0, 1, 1], [], []>} : vector<4x32xf32>, vector<32x32xf32>, vector<4x32xf32> -> vector<4x32xf32>
    %213 = arith.mulf %208, %209 : vector<4x32xf32>
    %cst_168 = arith.constant dense<0.000000e+00> : vector<4x4xf32>
    %214 = tpu.matmul %213, %15, %cst_168 {dimension_numbers = #tpu.dot_dimension_numbers<[1], [0], [0], [1], [0, 0, 1, 1], [], []>} : vector<4x32xf32>, vector<32x4xf32>, vector<4x4xf32> -> vector<4x4xf32>
    %cst_169 = arith.constant 1.250000e-01 : f32
    %215 = vector.broadcast %cst_169 : f32 to vector<4x4xf32>
    %216 = arith.mulf %214, %215 : vector<4x4xf32>
    %217 = arith.mulf %208, %210 : vector<4x32xf32>
    %cst_170 = arith.constant dense<0.000000e+00> : vector<4x4xf32>
    %218 = tpu.matmul %217, %15, %cst_170 {dimension_numbers = #tpu.dot_dimension_numbers<[1], [0], [0], [1], [0, 0, 1, 1], [], []>} : vector<4x32xf32>, vector<32x4xf32>, vector<4x4xf32> -> vector<4x4xf32>
    %cst_171 = arith.constant 1.250000e-01 : f32
    %219 = vector.broadcast %cst_171 : f32 to vector<4x4xf32>
    %220 = arith.mulf %218, %219 : vector<4x4xf32>
    %221 = arith.maximumf %216, %220 : vector<4x4xf32>
    %222 = arith.subf %216, %221 : vector<4x4xf32>
    %223 = math.exp %222 : vector<4x4xf32>
    %224 = arith.subf %220, %221 : vector<4x4xf32>
    %225 = math.exp %224 : vector<4x4xf32>
    %226 = arith.addf %223, %225 : vector<4x4xf32>
    %cst_172 = arith.constant 1.000000e+00 : f32
    %227 = vector.broadcast %cst_172 : f32 to vector<4x4xf32>
    %228 = arith.divf %227, %226 : vector<4x4xf32>
    %229 = arith.mulf %223, %228 : vector<4x4xf32>
    %cst_173 = arith.constant dense<0.000000e+00> : vector<4x32xf32>
    %230 = tpu.matmul %229, %16, %cst_173 {dimension_numbers = #tpu.dot_dimension_numbers<[1], [0], [0], [1], [0, 0, 1, 1], [], []>} : vector<4x4xf32>, vector<4x32xf32>, vector<4x32xf32> -> vector<4x32xf32>
    %231 = arith.mulf %225, %228 : vector<4x4xf32>
    %cst_174 = arith.constant dense<0.000000e+00> : vector<4x32xf32>
    %232 = tpu.matmul %231, %16, %cst_174 {dimension_numbers = #tpu.dot_dimension_numbers<[1], [0], [0], [1], [0, 0, 1, 1], [], []>} : vector<4x4xf32>, vector<4x32xf32>, vector<4x32xf32> -> vector<4x32xf32>
    %233 = arith.mulf %230, %211 : vector<4x32xf32>
    %234 = arith.mulf %232, %212 : vector<4x32xf32>
    %235 = arith.addf %233, %234 : vector<4x32xf32>
    %cst_175 = arith.constant dense<0.000000e+00> : vector<4x32xf32>
    %236 = tpu.matmul %235, %34, %cst_175 {dimension_numbers = #tpu.dot_dimension_numbers<[1], [0], [0], [1], [0, 0, 1, 1], [], []>} : vector<4x32xf32>, vector<32x32xf32>, vector<4x32xf32> -> vector<4x32xf32>
    %237 = vector.broadcast %35 : vector<1x32xf32> to vector<4x32xf32>
    %238 = arith.addf %236, %237 : vector<4x32xf32>
    %cst_176 = arith.constant dense<0.000000e+00> : vector<4x96xf32>
    %239 = tpu.matmul %238, %36, %cst_176 {dimension_numbers = #tpu.dot_dimension_numbers<[1], [0], [0], [1], [0, 0, 1, 1], [], []>} : vector<4x32xf32>, vector<32x96xf32>, vector<4x96xf32> -> vector<4x96xf32>
    %240 = vector.broadcast %38 : vector<1x96xf32> to vector<4x96xf32>
    %241 = arith.addf %239, %240 : vector<4x96xf32>
    %cst_177 = arith.constant dense<0.000000e+00> : vector<4x96xf32>
    %242 = tpu.matmul %160, %37, %cst_177 {dimension_numbers = #tpu.dot_dimension_numbers<[1], [0], [0], [1], [0, 0, 1, 1], [], []>} : vector<4x32xf32>, vector<32x96xf32>, vector<4x96xf32> -> vector<4x96xf32>
    %243 = vector.broadcast %39 : vector<1x96xf32> to vector<4x96xf32>
    %244 = arith.addf %242, %243 : vector<4x96xf32>
    %245 = vector.extract_strided_slice %241 {offsets = [0, 0], sizes = [4, 32], strides = [1, 1]} : vector<4x96xf32> to vector<4x32xf32>
    %246 = vector.extract_strided_slice %244 {offsets = [0, 0], sizes = [4, 32], strides = [1, 1]} : vector<4x96xf32> to vector<4x32xf32>
    %247 = arith.addf %245, %246 : vector<4x32xf32>
    %248 = arith.negf %247 : vector<4x32xf32>
    %249 = math.exp %248 : vector<4x32xf32>
    %cst_178 = arith.constant 1.000000e+00 : f32
    %250 = vector.broadcast %cst_178 : f32 to vector<4x32xf32>
    %251 = arith.addf %250, %249 : vector<4x32xf32>
    %252 = arith.divf %250, %251 : vector<4x32xf32>
    %253 = vector.extract_strided_slice %241 {offsets = [0, 32], sizes = [4, 32], strides = [1, 1]} : vector<4x96xf32> to vector<4x32xf32>
    %254 = vector.extract_strided_slice %244 {offsets = [0, 32], sizes = [4, 32], strides = [1, 1]} : vector<4x96xf32> to vector<4x32xf32>
    %255 = arith.addf %253, %254 : vector<4x32xf32>
    %256 = arith.negf %255 : vector<4x32xf32>
    %257 = math.exp %256 : vector<4x32xf32>
    %cst_179 = arith.constant 1.000000e+00 : f32
    %258 = vector.broadcast %cst_179 : f32 to vector<4x32xf32>
    %259 = arith.addf %258, %257 : vector<4x32xf32>
    %260 = arith.divf %258, %259 : vector<4x32xf32>
    %261 = vector.extract_strided_slice %241 {offsets = [0, 64], sizes = [4, 32], strides = [1, 1]} : vector<4x96xf32> to vector<4x32xf32>
    %262 = vector.extract_strided_slice %244 {offsets = [0, 64], sizes = [4, 32], strides = [1, 1]} : vector<4x96xf32> to vector<4x32xf32>
    %263 = arith.mulf %252, %262 : vector<4x32xf32>
    %264 = arith.addf %261, %263 : vector<4x32xf32>
    %265 = math.tanh %264 : vector<4x32xf32>
    %cst_180 = arith.constant 1.000000e+00 : f32
    %266 = vector.broadcast %cst_180 : f32 to vector<4x32xf32>
    %267 = arith.subf %266, %260 : vector<4x32xf32>
    %268 = arith.mulf %267, %265 : vector<4x32xf32>
    %269 = arith.mulf %260, %160 : vector<4x32xf32>
    %270 = arith.addf %268, %269 : vector<4x32xf32>
    %cst_181 = arith.constant dense<0.000000e+00> : vector<8x96xf32>
    %271 = tpu.matmul %206, %40, %cst_181 {dimension_numbers = #tpu.dot_dimension_numbers<[1], [0], [0], [1], [0, 0, 1, 1], [], []>} : vector<8x32xf32>, vector<32x96xf32>, vector<8x96xf32> -> vector<8x96xf32>
    %272 = vector.broadcast %42 : vector<1x96xf32> to vector<8x96xf32>
    %273 = arith.addf %271, %272 : vector<8x96xf32>
    %cst_182 = arith.constant dense<0.000000e+00> : vector<8x96xf32>
    %274 = tpu.matmul %192, %41, %cst_182 {dimension_numbers = #tpu.dot_dimension_numbers<[1], [0], [0], [1], [0, 0, 1, 1], [], []>} : vector<8x32xf32>, vector<32x96xf32>, vector<8x96xf32> -> vector<8x96xf32>
    %275 = vector.broadcast %43 : vector<1x96xf32> to vector<8x96xf32>
    %276 = arith.addf %274, %275 : vector<8x96xf32>
    %277 = vector.extract_strided_slice %273 {offsets = [0, 0], sizes = [8, 32], strides = [1, 1]} : vector<8x96xf32> to vector<8x32xf32>
    %278 = vector.extract_strided_slice %276 {offsets = [0, 0], sizes = [8, 32], strides = [1, 1]} : vector<8x96xf32> to vector<8x32xf32>
    %279 = arith.addf %277, %278 : vector<8x32xf32>
    %280 = arith.negf %279 : vector<8x32xf32>
    %281 = math.exp %280 : vector<8x32xf32>
    %cst_183 = arith.constant 1.000000e+00 : f32
    %282 = vector.broadcast %cst_183 : f32 to vector<8x32xf32>
    %283 = arith.addf %282, %281 : vector<8x32xf32>
    %284 = arith.divf %282, %283 : vector<8x32xf32>
    %285 = vector.extract_strided_slice %273 {offsets = [0, 32], sizes = [8, 32], strides = [1, 1]} : vector<8x96xf32> to vector<8x32xf32>
    %286 = vector.extract_strided_slice %276 {offsets = [0, 32], sizes = [8, 32], strides = [1, 1]} : vector<8x96xf32> to vector<8x32xf32>
    %287 = arith.addf %285, %286 : vector<8x32xf32>
    %288 = arith.negf %287 : vector<8x32xf32>
    %289 = math.exp %288 : vector<8x32xf32>
    %cst_184 = arith.constant 1.000000e+00 : f32
    %290 = vector.broadcast %cst_184 : f32 to vector<8x32xf32>
    %291 = arith.addf %290, %289 : vector<8x32xf32>
    %292 = arith.divf %290, %291 : vector<8x32xf32>
    %293 = vector.extract_strided_slice %273 {offsets = [0, 64], sizes = [8, 32], strides = [1, 1]} : vector<8x96xf32> to vector<8x32xf32>
    %294 = vector.extract_strided_slice %276 {offsets = [0, 64], sizes = [8, 32], strides = [1, 1]} : vector<8x96xf32> to vector<8x32xf32>
    %295 = arith.mulf %284, %294 : vector<8x32xf32>
    %296 = arith.addf %293, %295 : vector<8x32xf32>
    %297 = math.tanh %296 : vector<8x32xf32>
    %cst_185 = arith.constant 1.000000e+00 : f32
    %298 = vector.broadcast %cst_185 : f32 to vector<8x32xf32>
    %299 = arith.subf %298, %292 : vector<8x32xf32>
    %300 = arith.mulf %299, %297 : vector<8x32xf32>
    %301 = arith.mulf %292, %192 : vector<8x32xf32>
    %302 = arith.addf %300, %301 : vector<8x32xf32>
    %cst_186 = arith.constant dense<0.000000e+00> : vector<1x4xf32>
    %303 = tpu.matmul %44, %270, %cst_186 {dimension_numbers = #tpu.dot_dimension_numbers<[1], [1], [0], [0], [0, 0, 1, 0], [], []>} : vector<1x32xf32>, vector<4x32xf32>, vector<1x4xf32> -> vector<1x4xf32>
    %304 = vector.broadcast %45 : vector<1x1xf32> to vector<1x4xf32>
    %305 = arith.addf %303, %304 : vector<1x4xf32>
    %cst_187 = arith.constant 0.000000e+00 : f32
    %306 = vector.broadcast %cst_187 : f32 to vector<2x4xf32>
    %307 = arith.cmpf ogt, %10, %306 : vector<2x4xf32>
    %cst_188 = arith.constant -1.000000e+30 : f32
    %308 = vector.shape_cast %305 : vector<1x4xf32> to vector<1x4xf32>
    %309 = vector.broadcast %308 : vector<1x4xf32> to vector<2x4xf32>
    %310 = vector.broadcast %cst_188 : f32 to vector<2x4xf32>
    %311 = arith.select %307, %309, %310 : vector<2x4xi1>, vector<2x4xf32>
    %cst_189 = arith.constant dense<0xFF800000> : vector<2xf32>
    %312 = vector.multi_reduction <maximumf>, %311, %cst_189 [1] : vector<2x4xf32> to vector<2xf32>
    %313 = vector.shape_cast %312 : vector<2xf32> to vector<2x1xf32>
    %cst_190 = arith.constant 0.000000e+00 : f32
    %314 = vector.broadcast %cst_190 : f32 to vector<2x4xf32>
    %315 = arith.cmpf ogt, %10, %314 : vector<2x4xf32>
    %316 = vector.broadcast %305 : vector<1x4xf32> to vector<2x4xf32>
    %317 = vector.broadcast %313 : vector<2x1xf32> to vector<2x4xf32>
    %318 = arith.subf %316, %317 : vector<2x4xf32>
    %cst_191 = arith.constant 0.000000e+00 : f32
    %319 = vector.broadcast %cst_191 : f32 to vector<2x4xf32>
    %320 = arith.minimumf %318, %319 : vector<2x4xf32>
    %321 = math.exp %320 : vector<2x4xf32>
    %cst_192 = arith.constant 0.000000e+00 : f32
    %322 = vector.broadcast %cst_192 : f32 to vector<2x4xf32>
    %323 = arith.select %315, %321, %322 : vector<2x4xi1>, vector<2x4xf32>
    %cst_193 = arith.constant dense<0.000000e+00> : vector<2xf32>
    %324 = vector.multi_reduction <add>, %323, %cst_193 [1] : vector<2x4xf32> to vector<2xf32>
    %325 = vector.shape_cast %324 : vector<2xf32> to vector<2x1xf32>
    %326 = vector.broadcast %325 : vector<2x1xf32> to vector<2x4xf32>
    %327 = arith.divf %323, %326 : vector<2x4xf32>
    %cst_194 = arith.constant dense<0.000000e+00> : vector<2x32xf32>
    %328 = tpu.matmul %327, %270, %cst_194 {dimension_numbers = #tpu.dot_dimension_numbers<[1], [0], [0], [1], [0, 0, 1, 1], [], []>} : vector<2x4xf32>, vector<4x32xf32>, vector<2x32xf32> -> vector<2x32xf32>
    %329 = vector.extract_strided_slice %12 {offsets = [0, 0], sizes = [4, 1], strides = [1, 1]} : vector<4x2xf32> to vector<4x1xf32>
    %cst_195 = arith.constant 0.000000e+00 : f32
    %330 = vector.broadcast %cst_195 : f32 to vector<4x1xf32>
    %331 = arith.cmpf ogt, %329, %330 : vector<4x1xf32>
    %cst_196 = arith.constant -1.000000e+30 : f32
    %332 = vector.shape_cast %331 : vector<4x1xi1> to vector<4x1xi1>
    %333 = vector.broadcast %332 : vector<4x1xi1> to vector<4x32xi1>
    %334 = vector.broadcast %cst_196 : f32 to vector<4x32xf32>
    %335 = arith.select %333, %270, %334 : vector<4x32xi1>, vector<4x32xf32>
    %cst_197 = arith.constant dense<0xFF800000> : vector<32xf32>
    %336 = vector.multi_reduction <maximumf>, %335, %cst_197 [0] : vector<4x32xf32> to vector<32xf32>
    %337 = vector.shape_cast %336 : vector<32xf32> to vector<1x32xf32>
    %338 = vector.extract_strided_slice %12 {offsets = [0, 1], sizes = [4, 1], strides = [1, 1]} : vector<4x2xf32> to vector<4x1xf32>
    %cst_198 = arith.constant 0.000000e+00 : f32
    %339 = vector.broadcast %cst_198 : f32 to vector<4x1xf32>
    %340 = arith.cmpf ogt, %338, %339 : vector<4x1xf32>
    %cst_199 = arith.constant -1.000000e+30 : f32
    %341 = vector.shape_cast %340 : vector<4x1xi1> to vector<4x1xi1>
    %342 = vector.broadcast %341 : vector<4x1xi1> to vector<4x32xi1>
    %343 = vector.broadcast %cst_199 : f32 to vector<4x32xf32>
    %344 = arith.select %342, %270, %343 : vector<4x32xi1>, vector<4x32xf32>
    %cst_200 = arith.constant dense<0xFF800000> : vector<32xf32>
    %345 = vector.multi_reduction <maximumf>, %344, %cst_200 [0] : vector<4x32xf32> to vector<32xf32>
    %346 = vector.shape_cast %345 : vector<32xf32> to vector<1x32xf32>
    %347 = tpu.concatenate %337, %346 in 0 : vector<1x32xf32>, vector<1x32xf32> -> vector<2x32xf32>
    %cst_201 = arith.constant dense<0.000000e+00> : vector<1x8xf32>
    %348 = tpu.matmul %46, %302, %cst_201 {dimension_numbers = #tpu.dot_dimension_numbers<[1], [1], [0], [0], [0, 0, 1, 0], [], []>} : vector<1x32xf32>, vector<8x32xf32>, vector<1x8xf32> -> vector<1x8xf32>
    %349 = vector.broadcast %47 : vector<1x1xf32> to vector<1x8xf32>
    %350 = arith.addf %348, %349 : vector<1x8xf32>
    %cst_202 = arith.constant 0.000000e+00 : f32
    %351 = vector.broadcast %cst_202 : f32 to vector<2x8xf32>
    %352 = arith.cmpf ogt, %9, %351 : vector<2x8xf32>
    %cst_203 = arith.constant -1.000000e+30 : f32
    %353 = vector.shape_cast %350 : vector<1x8xf32> to vector<1x8xf32>
    %354 = vector.broadcast %353 : vector<1x8xf32> to vector<2x8xf32>
    %355 = vector.broadcast %cst_203 : f32 to vector<2x8xf32>
    %356 = arith.select %352, %354, %355 : vector<2x8xi1>, vector<2x8xf32>
    %cst_204 = arith.constant dense<0xFF800000> : vector<2xf32>
    %357 = vector.multi_reduction <maximumf>, %356, %cst_204 [1] : vector<2x8xf32> to vector<2xf32>
    %358 = vector.shape_cast %357 : vector<2xf32> to vector<2x1xf32>
    %cst_205 = arith.constant 0.000000e+00 : f32
    %359 = vector.broadcast %cst_205 : f32 to vector<2x8xf32>
    %360 = arith.cmpf ogt, %9, %359 : vector<2x8xf32>
    %361 = vector.broadcast %350 : vector<1x8xf32> to vector<2x8xf32>
    %362 = vector.broadcast %358 : vector<2x1xf32> to vector<2x8xf32>
    %363 = arith.subf %361, %362 : vector<2x8xf32>
    %cst_206 = arith.constant 0.000000e+00 : f32
    %364 = vector.broadcast %cst_206 : f32 to vector<2x8xf32>
    %365 = arith.minimumf %363, %364 : vector<2x8xf32>
    %366 = math.exp %365 : vector<2x8xf32>
    %cst_207 = arith.constant 0.000000e+00 : f32
    %367 = vector.broadcast %cst_207 : f32 to vector<2x8xf32>
    %368 = arith.select %360, %366, %367 : vector<2x8xi1>, vector<2x8xf32>
    %cst_208 = arith.constant dense<0.000000e+00> : vector<2xf32>
    %369 = vector.multi_reduction <add>, %368, %cst_208 [1] : vector<2x8xf32> to vector<2xf32>
    %370 = vector.shape_cast %369 : vector<2xf32> to vector<2x1xf32>
    %371 = vector.broadcast %370 : vector<2x1xf32> to vector<2x8xf32>
    %372 = arith.divf %368, %371 : vector<2x8xf32>
    %cst_209 = arith.constant dense<0.000000e+00> : vector<2x32xf32>
    %373 = tpu.matmul %372, %302, %cst_209 {dimension_numbers = #tpu.dot_dimension_numbers<[1], [0], [0], [1], [0, 0, 1, 1], [], []>} : vector<2x8xf32>, vector<8x32xf32>, vector<2x32xf32> -> vector<2x32xf32>
    %374 = vector.extract_strided_slice %11 {offsets = [0, 0], sizes = [8, 1], strides = [1, 1]} : vector<8x2xf32> to vector<8x1xf32>
    %cst_210 = arith.constant 0.000000e+00 : f32
    %375 = vector.broadcast %cst_210 : f32 to vector<8x1xf32>
    %376 = arith.cmpf ogt, %374, %375 : vector<8x1xf32>
    %cst_211 = arith.constant -1.000000e+30 : f32
    %377 = vector.shape_cast %376 : vector<8x1xi1> to vector<8x1xi1>
    %378 = vector.broadcast %377 : vector<8x1xi1> to vector<8x32xi1>
    %379 = vector.broadcast %cst_211 : f32 to vector<8x32xf32>
    %380 = arith.select %378, %302, %379 : vector<8x32xi1>, vector<8x32xf32>
    %cst_212 = arith.constant dense<0xFF800000> : vector<32xf32>
    %381 = vector.multi_reduction <maximumf>, %380, %cst_212 [0] : vector<8x32xf32> to vector<32xf32>
    %382 = vector.shape_cast %381 : vector<32xf32> to vector<1x32xf32>
    %383 = vector.extract_strided_slice %11 {offsets = [0, 1], sizes = [8, 1], strides = [1, 1]} : vector<8x2xf32> to vector<8x1xf32>
    %cst_213 = arith.constant 0.000000e+00 : f32
    %384 = vector.broadcast %cst_213 : f32 to vector<8x1xf32>
    %385 = arith.cmpf ogt, %383, %384 : vector<8x1xf32>
    %cst_214 = arith.constant -1.000000e+30 : f32
    %386 = vector.shape_cast %385 : vector<8x1xi1> to vector<8x1xi1>
    %387 = vector.broadcast %386 : vector<8x1xi1> to vector<8x32xi1>
    %388 = vector.broadcast %cst_214 : f32 to vector<8x32xf32>
    %389 = arith.select %387, %302, %388 : vector<8x32xi1>, vector<8x32xf32>
    %cst_215 = arith.constant dense<0xFF800000> : vector<32xf32>
    %390 = vector.multi_reduction <maximumf>, %389, %cst_215 [0] : vector<8x32xf32> to vector<32xf32>
    %391 = vector.shape_cast %390 : vector<32xf32> to vector<1x32xf32>
    %392 = tpu.concatenate %382, %391 in 0 : vector<1x32xf32>, vector<1x32xf32> -> vector<2x32xf32>
    %cst_216 = arith.constant dense<0.000000e+00> : vector<2x64xf32>
    %393 = tpu.matmul %373, %48, %cst_216 {dimension_numbers = #tpu.dot_dimension_numbers<[1], [0], [0], [1], [0, 0, 1, 1], [], []>} : vector<2x32xf32>, vector<32x64xf32>, vector<2x64xf32> -> vector<2x64xf32>
    %cst_217 = arith.constant dense<0.000000e+00> : vector<2x64xf32>
    %394 = tpu.matmul %392, %49, %cst_217 {dimension_numbers = #tpu.dot_dimension_numbers<[1], [0], [0], [1], [0, 0, 1, 1], [], []>} : vector<2x32xf32>, vector<32x64xf32>, vector<2x64xf32> -> vector<2x64xf32>
    %395 = arith.addf %393, %394 : vector<2x64xf32>
    %cst_218 = arith.constant dense<0.000000e+00> : vector<2x64xf32>
    %396 = tpu.matmul %328, %50, %cst_218 {dimension_numbers = #tpu.dot_dimension_numbers<[1], [0], [0], [1], [0, 0, 1, 1], [], []>} : vector<2x32xf32>, vector<32x64xf32>, vector<2x64xf32> -> vector<2x64xf32>
    %397 = arith.addf %395, %396 : vector<2x64xf32>
    %cst_219 = arith.constant dense<0.000000e+00> : vector<2x64xf32>
    %398 = tpu.matmul %347, %51, %cst_219 {dimension_numbers = #tpu.dot_dimension_numbers<[1], [0], [0], [1], [0, 0, 1, 1], [], []>} : vector<2x32xf32>, vector<32x64xf32>, vector<2x64xf32> -> vector<2x64xf32>
    %399 = arith.addf %397, %398 : vector<2x64xf32>
    %400 = vector.broadcast %52 : vector<1x64xf32> to vector<2x64xf32>
    %401 = arith.addf %399, %400 : vector<2x64xf32>
    %cst_220 = arith.constant 0.000000e+00 : f32
    %402 = vector.broadcast %cst_220 : f32 to vector<2x64xf32>
    %403 = arith.maximumf %401, %402 : vector<2x64xf32>
    %cst_221 = arith.constant dense<0.000000e+00> : vector<2x2xf32>
    %404 = tpu.matmul %403, %53, %cst_221 {dimension_numbers = #tpu.dot_dimension_numbers<[1], [0], [0], [1], [0, 0, 1, 1], [], []>} : vector<2x64xf32>, vector<64x2xf32>, vector<2x2xf32> -> vector<2x2xf32>
    %405 = vector.broadcast %54 : vector<1x2xf32> to vector<2x2xf32>
    %406 = arith.addf %404, %405 : vector<2x2xf32>
    %cst_222 = arith.constant dense<0.000000e+00> : vector<2x2xf32>
    %407 = tpu.matmul %406, %55, %cst_222 {dimension_numbers = #tpu.dot_dimension_numbers<[1], [0], [0], [1], [0, 0, 1, 1], [], []>} : vector<2x2xf32>, vector<2x2xf32>, vector<2x2xf32> -> vector<2x2xf32>
    %408 = vector.broadcast %56 : vector<1x2xf32> to vector<2x2xf32>
    %409 = arith.addf %407, %408 : vector<2x2xf32>
    %c0_223 = arith.constant 0 : index
    %c0_224 = arith.constant 0 : index
    %410 = vector.load %arg57[%c0_223, %c0_224] : memref<2x2xf32, #tpu.memory_space<vmem>>, vector<2x2xf32>
    tpu.vector_store %arg57[%c0_223, %c0_224], %409 {strides = array<i32>} : memref<2x2xf32, #tpu.memory_space<vmem>>, vector<2x2xf32>,
    return
  }
}

</mosaic_0001>

<llo_original>
// kernel: tpu_custom_call.1
$region0: #{tpu_custom_call.1}
  #allocation0 [shape = 'u32[]', space=smem, size = 0x4, offset = 0x4, fixed_abs, tag = 'smem constant byte address 0x4 - core index']
  #allocation1 [shape = 'u32[72,128]{1,0:T(1,128)}', space=vmem, size = 0x9000, scoped, tag = 'internal scratch']
  #allocation2 [shape = 'f32[1,1]{1,0:T(1,128)S(1)}', space=vmem, size = 0x200, scoped, tag = 'scoped memory for tpu_custom_call.1']
  #allocation3 [shape = 'f32[1,1]{1,0:T(1,128)S(1)}', space=vmem, size = 0x200, scoped, tag = 'scoped memory for tpu_custom_call.1']
  %s0 = inlined_call_operand.smem [shape: u32[58], index: -1, kind: input, shape index: {}]
  %s1 = sld [smem:[%s0]]
  %s2 = scalar_lea.smem %s0, 1
  %s3 = sld [smem:[%s2]]
  %s4 = scalar_lea.smem %s0, 2
  %s5 = sld [smem:[%s4]]
  %s6 = scalar_lea.smem %s0, 3
  %s7 = sld [smem:[%s6]]
  %s8 = scalar_lea.smem %s0, 4
  %s9 = sld [smem:[%s8]]
  %s10 = scalar_lea.smem %s0, 5
  %s11 = sld [smem:[%s10]]
  %s12 = scalar_lea.smem %s0, 6
  %s13 = sld [smem:[%s12]]
  %s14 = scalar_lea.smem %s0, 7
  %s15 = sld [smem:[%s14]]
  %s16 = scalar_lea.smem %s0, 8
  %s17 = sld [smem:[%s16]]
  %s18 = scalar_lea.smem %s0, 9
  %s19 = sld [smem:[%s18]]
  %s20 = scalar_lea.smem %s0, 10
  %s21 = sld [smem:[%s20]]
  %s22 = scalar_lea.smem %s0, 11
  %s23 = sld [smem:[%s22]]
  %s24 = scalar_lea.smem %s0, 12
  %s25 = sld [smem:[%s24]]
  %s26 = scalar_lea.smem %s0, 13
  %s27 = sld [smem:[%s26]]
  %s28 = scalar_lea.smem %s0, 14
  %s29 = sld [smem:[%s28]]
  %s30 = scalar_lea.smem %s0, 15
  %s31 = sld [smem:[%s30]]
  %s32 = scalar_lea.smem %s0, 16
  %s33 = sld [smem:[%s32]]
  %s34 = scalar_lea.smem %s0, 17
  %s35 = sld [smem:[%s34]]
  %s36 = scalar_lea.smem %s0, 18
  %s37 = sld [smem:[%s36]]
  %s38 = scalar_lea.smem %s0, 19
  %s39 = sld [smem:[%s38]]
  %s40 = scalar_lea.smem %s0, 20
  %s41 = sld [smem:[%s40]]
  %s42 = scalar_lea.smem %s0, 21
  %s43 = sld [smem:[%s42]]
  %s44 = scalar_lea.smem %s0, 22
  %s45 = sld [smem:[%s44]]
  %s46 = scalar_lea.smem %s0, 23
  %s47 = sld [smem:[%s46]]
  %s48 = scalar_lea.smem %s0, 24
  %s49 = sld [smem:[%s48]]
  %s50 = scalar_lea.smem %s0, 25
  %s51 = sld [smem:[%s50]]
  %s52 = scalar_lea.smem %s0, 26
  %s53 = sld [smem:[%s52]]
  %s54 = scalar_lea.smem %s0, 27
  %s55 = sld [smem:[%s54]]
  %s56 = scalar_lea.smem %s0, 28
  %s57 = sld [smem:[%s56]]
  %s58 = scalar_lea.smem %s0, 29
  %s59 = sld [smem:[%s58]]
  %s60 = scalar_lea.smem %s0, 30
  %s61 = sld [smem:[%s60]]
  %s62 = scalar_lea.smem %s0, 31
  %s63 = sld [smem:[%s62]]
  %s64 = scalar_lea.smem %s0, 32
  %s65 = sld [smem:[%s64]]
  %s66 = scalar_lea.smem %s0, 33
  %s67 = sld [smem:[%s66]]
  %s68 = scalar_lea.smem %s0, 34
  %s69 = sld [smem:[%s68]]
  %s70 = scalar_lea.smem %s0, 35
  %s71 = sld [smem:[%s70]]
  %s72 = scalar_lea.smem %s0, 36
  %s73 = sld [smem:[%s72]]
  %s74 = scalar_lea.smem %s0, 37
  %s75 = sld [smem:[%s74]]
  %s76 = scalar_lea.smem %s0, 38
  %s77 = sld [smem:[%s76]]
  %s78 = scalar_lea.smem %s0, 39
  %s79 = sld [smem:[%s78]]
  %s80 = scalar_lea.smem %s0, 40
  %s81 = sld [smem:[%s80]]
  %s82 = scalar_lea.smem %s0, 41
  %s83 = sld [smem:[%s82]]
  %s84 = scalar_lea.smem %s0, 42
  %s85 = sld [smem:[%s84]]
  %s86 = scalar_lea.smem %s0, 43
  %s87 = sld [smem:[%s86]]
  %s88 = scalar_lea.smem %s0, 44
  %s89 = sld [smem:[%s88]]
  %s90 = scalar_lea.smem %s0, 45
  %s91 = sld [smem:[%s90]]
  %s92 = scalar_lea.smem %s0, 46
  %s93 = sld [smem:[%s92]]
  %s94 = scalar_lea.smem %s0, 47
  %s95 = sld [smem:[%s94]]
  %s96 = scalar_lea.smem %s0, 48
  %s97 = sld [smem:[%s96]]
  %s98 = scalar_lea.smem %s0, 49
  %s99 = sld [smem:[%s98]]
  %s100 = scalar_lea.smem %s0, 50
  %s101 = sld [smem:[%s100]]
  %s102 = scalar_lea.smem %s0, 51
  %s103 = sld [smem:[%s102]]
  %s104 = scalar_lea.smem %s0, 52
  %s105 = sld [smem:[%s104]]
  %s106 = scalar_lea.smem %s0, 53
  %s107 = sld [smem:[%s106]]
  %s108 = scalar_lea.smem %s0, 54
  %s109 = sld [smem:[%s108]]
  %s110 = scalar_lea.smem %s0, 55
  %s111 = sld [smem:[%s110]]
  %s112 = scalar_lea.smem %s0, 56
  %s113 = sld [smem:[%s112]]
  %s114 = scalar_lea.smem %s0, 57
  %s115 = sld [smem:[%s114]]
  %s116 = sld [smem:[#allocation0]]
  $region270: #{tpu_custom_call.1} parent=0
    _
  %s118 = ssub.s32 1, %s116
  %s119 = scalar_select 0, %s118, %s116
  %v120 = vstv %s91
  %121 = vst [vmem:[#allocation2] sm:$0x1] %v120
  %v122 = vstv %s95
  %123 = vst [vmem:[#allocation3] sm:$0x1] %v122
  $region1: #{tpu_custom_call.1} parent=0
    #allocation4 [shape = 'u8[512]{0}', space=vmem, size = 0x400, scoped, tag = 'input window, operand 39, single buffered']
    #allocation5 [shape = 's32[1]{0}', space=sflag, size = 0x4, scoped, tag = 'scoped memory for tpu_custom_call.1']
    #allocation6 [shape = 's32[1]{0}', space=sflag, size = 0x4, scoped, tag = 'scoped memory for tpu_custom_call.1']
    #allocation7 [shape = 'u8[512]{0}', space=vmem, size = 0x400, scoped, tag = 'input window, operand 42, single buffered']
    #allocation8 [shape = 's32[1]{0}', space=sflag, size = 0x4, scoped, tag = 'scoped memory for tpu_custom_call.1']
    #allocation9 [shape = 'u8[512]{0}', space=vmem, size = 0x400, scoped, tag = 'input window, operand 43, single buffered']
    #allocation10 [shape = 'u8[512]{0}', space=vmem, size = 0x400, scoped, tag = 'input window, operand 44, single buffered']
    #allocation11 [shape = 's32[1]{0}', space=sflag, size = 0x4, scoped, tag = 'scoped memory for tpu_custom_call.1']
    #allocation12 [shape = 'u8[512]{0}', space=vmem, size = 0x400, scoped, tag = 'input window, operand 46, single buffered']
    #allocation13 [shape = 'u8[512]{0}', space=vmem, size = 0x400, scoped, tag = 'input window, operand 52, single buffered']
    #allocation14 [shape = 's32[1]{0}', space=sflag, size = 0x4, scoped, tag = 'scoped memory for tpu_custom_call.1']
    #allocation15 [shape = 'u8[512]{0}', space=vmem, size = 0x400, scoped, tag = 'input window, operand 54, single buffered']
    #allocation16 [shape = 'u8[512]{0}', space=vmem, size = 0x400, scoped, tag = 'input window, operand 56, single buffered']
    #allocation17 [shape = 's32[1]{0}', space=sflag, size = 0x4, scoped, tag = 'scoped memory for tpu_custom_call.1']
    #allocation18 [shape = 'u8[1024]{0}', space=vmem, size = 0x400, scoped, tag = 'output window, operand 0, single buffered']
    %124 = vsyncpa [#allocation5], 0
    %125 = vsyncpa [#allocation8], 0
    %126 = vsyncpa [#allocation11], 0
    %127 = vsyncpa [#allocation14], 0
    %128 = vsyncpa [#allocation17], 0
    %129 = vsyncpa [#allocation6], 0
    // Predicated region
    $region2: #{tpu_custom_call.1} parent=1 // pred_check
      _
    $region3: #{tpu_custom_call.1} parent=1 // pred_check_branch
      %131 = sbr.rel (0) target = $region5
    $region4: #{tpu_custom_call.1} parent=1 // pred_region
      _
    $region5: #{tpu_custom_call.1} parent=1 // pred_fallthru
      _
    // Predicated region
    $region6: #{tpu_custom_call.1} parent=1 // pred_check
      _
    $region7: #{tpu_custom_call.1} parent=1 // pred_check_branch
      %133 = sbr.rel (0) target = $region9
    $region8: #{tpu_custom_call.1} parent=1 // pred_region
      _
    $region9: #{tpu_custom_call.1} parent=1 // pred_fallthru
      _
    // Predicated region
    $region10: #{tpu_custom_call.1} parent=1 // pred_check
      _
    $region11: #{tpu_custom_call.1} parent=1 // pred_check_branch
      %135 = sbr.rel (0) target = $region13
    $region12: #{tpu_custom_call.1} parent=1 // pred_region
      _
    $region13: #{tpu_custom_call.1} parent=1 // pred_fallthru
      _
    // Predicated region
    $region14: #{tpu_custom_call.1} parent=1 // pred_check
      _
    $region15: #{tpu_custom_call.1} parent=1 // pred_check_branch
      %137 = sbr.rel (0) target = $region17
    $region16: #{tpu_custom_call.1} parent=1 // pred_region
      _
    $region17: #{tpu_custom_call.1} parent=1 // pred_fallthru
      _
    // Predicated region
    $region18: #{tpu_custom_call.1} parent=1 // pred_check
      _
    $region19: #{tpu_custom_call.1} parent=1 // pred_check_branch
      %139 = sbr.rel (0) target = $region21
    $region20: #{tpu_custom_call.1} parent=1 // pred_region
      _
    $region21: #{tpu_custom_call.1} parent=1 // pred_fallthru
      _
    // Predicated region
    $region22: #{tpu_custom_call.1} parent=1 // pred_check
      _
    $region23: #{tpu_custom_call.1} parent=1 // pred_check_branch
      %141 = sbr.rel (0) target = $region25
    $region24: #{tpu_custom_call.1} parent=1 // pred_region
      _
    $region25: #{tpu_custom_call.1} parent=1 // pred_fallthru
      _
    // Predicated region
    $region26: #{tpu_custom_call.1} parent=1 // pred_check
      _
    $region27: #{tpu_custom_call.1} parent=1 // pred_check_branch
      %143 = sbr.rel (0) target = $region29
    $region28: #{tpu_custom_call.1} parent=1 // pred_region
      _
    $region29: #{tpu_custom_call.1} parent=1 // pred_fallthru
      _
    // Predicated region
    $region30: #{tpu_custom_call.1} parent=1 // pred_check
      _
    $region31: #{tpu_custom_call.1} parent=1 // pred_check_branch
      %145 = sbr.rel (0) target = $region33
    $region32: #{tpu_custom_call.1} parent=1 // pred_region
      _
    $region33: #{tpu_custom_call.1} parent=1 // pred_fallthru
      _
    // Predicated region
    $region34: #{tpu_custom_call.1} parent=1 // pred_check
      _
    $region35: #{tpu_custom_call.1} parent=1 // pred_check_branch
      %147 = sbr.rel (0) target = $region37
    $region36: #{tpu_custom_call.1} parent=1 // pred_region
      _
    $region37: #{tpu_custom_call.1} parent=1 // pred_fallthru
      _
    // Predicated region
    $region38: #{tpu_custom_call.1} parent=1 // pred_check
      _
    $region39: #{tpu_custom_call.1} parent=1 // pred_check_branch
      %149 = sbr.rel (0) target = $region41
    $region40: #{tpu_custom_call.1} parent=1 // pred_region
      _
    $region41: #{tpu_custom_call.1} parent=1 // pred_fallthru
      _
    // Predicated region
    $region42: #{tpu_custom_call.1} parent=1 // pred_check
      _
    $region43: #{tpu_custom_call.1} parent=1 // pred_check_branch
      %151 = sbr.rel (0) target = $region45
    $region44: #{tpu_custom_call.1} parent=1 // pred_region
      _
    $region45: #{tpu_custom_call.1} parent=1 // pred_fallthru
      _
    // Predicated region
    $region46: #{tpu_custom_call.1} parent=1 // pred_check
      _
    $region47: #{tpu_custom_call.1} parent=1 // pred_check_branch
      %153 = sbr.rel (0) target = $region49
    $region48: #{tpu_custom_call.1} parent=1 // pred_region
      _
    $region49: #{tpu_custom_call.1} parent=1 // pred_fallthru
      _
    // Predicated region
    $region50: #{tpu_custom_call.1} parent=1 // pred_check
      _
    $region51: #{tpu_custom_call.1} parent=1 // pred_check_branch
      %155 = sbr.rel (0) target = $region53
    $region52: #{tpu_custom_call.1} parent=1 // pred_region
      _
    $region53: #{tpu_custom_call.1} parent=1 // pred_fallthru
      _
    // Predicated region
    $region54: #{tpu_custom_call.1} parent=1 // pred_check
      _
    $region55: #{tpu_custom_call.1} parent=1 // pred_check_branch
      %157 = sbr.rel (0) target = $region57
    $region56: #{tpu_custom_call.1} parent=1 // pred_region
      _
    $region57: #{tpu_custom_call.1} parent=1 // pred_fallthru
      _
    // Predicated region
    $region58: #{tpu_custom_call.1} parent=1 // pred_check
      _
    $region59: #{tpu_custom_call.1} parent=1 // pred_check_branch
      %159 = sbr.rel (0) target = $region61
    $region60: #{tpu_custom_call.1} parent=1 // pred_region
      _
    $region61: #{tpu_custom_call.1} parent=1 // pred_fallthru
      _
    // Predicated region
    $region62: #{tpu_custom_call.1} parent=1 // pred_check
      _
    $region63: #{tpu_custom_call.1} parent=1 // pred_check_branch
      %161 = sbr.rel (0) target = $region65
    $region64: #{tpu_custom_call.1} parent=1 // pred_region
      _
    $region65: #{tpu_custom_call.1} parent=1 // pred_fallthru
      _
    // Predicated region
    $region66: #{tpu_custom_call.1} parent=1 // pred_check
      _
    $region67: #{tpu_custom_call.1} parent=1 // pred_check_branch
      %163 = sbr.rel (0) target = $region69
    $region68: #{tpu_custom_call.1} parent=1 // pred_region
      _
    $region69: #{tpu_custom_call.1} parent=1 // pred_fallthru
      _
    // Predicated region
    $region70: #{tpu_custom_call.1} parent=1 // pred_check
      _
    $region71: #{tpu_custom_call.1} parent=1 // pred_check_branch
      %165 = sbr.rel (0) target = $region73
    $region72: #{tpu_custom_call.1} parent=1 // pred_region
      _
    $region73: #{tpu_custom_call.1} parent=1 // pred_fallthru
      _
    // Predicated region
    $region74: #{tpu_custom_call.1} parent=1 // pred_check
      _
    $region75: #{tpu_custom_call.1} parent=1 // pred_check_branch
      %167 = sbr.rel (0) target = $region77
    $region76: #{tpu_custom_call.1} parent=1 // pred_region
      _
    $region77: #{tpu_custom_call.1} parent=1 // pred_fallthru
      _
    // Predicated region
    $region78: #{tpu_custom_call.1} parent=1 // pred_check
      _
    $region79: #{tpu_custom_call.1} parent=1 // pred_check_branch
      %169 = sbr.rel (0) target = $region81
    $region80: #{tpu_custom_call.1} parent=1 // pred_region
      _
    $region81: #{tpu_custom_call.1} parent=1 // pred_fallthru
      _
    // Predicated region
    $region82: #{tpu_custom_call.1} parent=1 // pred_check
      _
    $region83: #{tpu_custom_call.1} parent=1 // pred_check_branch
      %171 = sbr.rel (0) target = $region85
    $region84: #{tpu_custom_call.1} parent=1 // pred_region
      _
    $region85: #{tpu_custom_call.1} parent=1 // pred_fallthru
      _
    // Predicated region
    $region86: #{tpu_custom_call.1} parent=1 // pred_check
      _
    $region87: #{tpu_custom_call.1} parent=1 // pred_check_branch
      %173 = sbr.rel (0) target = $region89
    $region88: #{tpu_custom_call.1} parent=1 // pred_region
      _
    $region89: #{tpu_custom_call.1} parent=1 // pred_fallthru
      _
    // Predicated region
    $region90: #{tpu_custom_call.1} parent=1 // pred_check
      _
    $region91: #{tpu_custom_call.1} parent=1 // pred_check_branch
      %175 = sbr.rel (0) target = $region93
    $region92: #{tpu_custom_call.1} parent=1 // pred_region
      _
    $region93: #{tpu_custom_call.1} parent=1 // pred_fallthru
      _
    // Predicated region
    $region94: #{tpu_custom_call.1} parent=1 // pred_check
      _
    $region95: #{tpu_custom_call.1} parent=1 // pred_check_branch
      %177 = sbr.rel (0) target = $region97
    $region96: #{tpu_custom_call.1} parent=1 // pred_region
      _
    $region97: #{tpu_custom_call.1} parent=1 // pred_fallthru
      _
    // Predicated region
    $region98: #{tpu_custom_call.1} parent=1 // pred_check
      _
    $region99: #{tpu_custom_call.1} parent=1 // pred_check_branch
      %179 = sbr.rel (0) target = $region101
    $region100: #{tpu_custom_call.1} parent=1 // pred_region
      _
    $region101: #{tpu_custom_call.1} parent=1 // pred_fallthru
      _
    // Predicated region
    $region102: #{tpu_custom_call.1} parent=1 // pred_check
      _
    $region103: #{tpu_custom_call.1} parent=1 // pred_check_branch
      %181 = sbr.rel (0) target = $region105
    $region104: #{tpu_custom_call.1} parent=1 // pred_region
      _
    $region105: #{tpu_custom_call.1} parent=1 // pred_fallthru
      _
    // Predicated region
    $region106: #{tpu_custom_call.1} parent=1 // pred_check
      _
    $region107: #{tpu_custom_call.1} parent=1 // pred_check_branch
      %183 = sbr.rel (0) target = $region109
    $region108: #{tpu_custom_call.1} parent=1 // pred_region
      _
    $region109: #{tpu_custom_call.1} parent=1 // pred_fallthru
      _
    // Predicated region
    $region110: #{tpu_custom_call.1} parent=1 // pred_check
      _
    $region111: #{tpu_custom_call.1} parent=1 // pred_check_branch
      %185 = sbr.rel (0) target = $region113
    $region112: #{tpu_custom_call.1} parent=1 // pred_region
      _
    $region113: #{tpu_custom_call.1} parent=1 // pred_fallthru
      _
    // Predicated region
    $region114: #{tpu_custom_call.1} parent=1 // pred_check
      _
    $region115: #{tpu_custom_call.1} parent=1 // pred_check_branch
      %187 = sbr.rel (0) target = $region117
    $region116: #{tpu_custom_call.1} parent=1 // pred_region
      _
    $region117: #{tpu_custom_call.1} parent=1 // pred_fallthru
      _
    // Predicated region
    $region118: #{tpu_custom_call.1} parent=1 // pred_check
      _
    $region119: #{tpu_custom_call.1} parent=1 // pred_check_branch
      %189 = sbr.rel (0) target = $region121
    $region120: #{tpu_custom_call.1} parent=1 // pred_region
      _
    $region121: #{tpu_custom_call.1} parent=1 // pred_fallthru
      _
    // Predicated region
    $region122: #{tpu_custom_call.1} parent=1 // pred_check
      _
    $region123: #{tpu_custom_call.1} parent=1 // pred_check_branch
      %191 = sbr.rel (0) target = $region125
    $region124: #{tpu_custom_call.1} parent=1 // pred_region
      _
    $region125: #{tpu_custom_call.1} parent=1 // pred_fallthru
      _
    // Predicated region
    $region126: #{tpu_custom_call.1} parent=1 // pred_check
      _
    $region127: #{tpu_custom_call.1} parent=1 // pred_check_branch
      %193 = sbr.rel (0) target = $region129
    $region128: #{tpu_custom_call.1} parent=1 // pred_region
      _
    $region129: #{tpu_custom_call.1} parent=1 // pred_fallthru
      _
    // Predicated region
    $region130: #{tpu_custom_call.1} parent=1 // pred_check
      _
    $region131: #{tpu_custom_call.1} parent=1 // pred_check_branch
      %195 = sbr.rel (0) target = $region133
    $region132: #{tpu_custom_call.1} parent=1 // pred_region
      _
    $region133: #{tpu_custom_call.1} parent=1 // pred_fallthru
      _
    // Predicated region
    $region134: #{tpu_custom_call.1} parent=1 // pred_check
      _
    $region135: #{tpu_custom_call.1} parent=1 // pred_check_branch
      %197 = sbr.rel (0) target = $region137
    $region136: #{tpu_custom_call.1} parent=1 // pred_region
      _
    $region137: #{tpu_custom_call.1} parent=1 // pred_fallthru
      _
    // Predicated region
    $region138: #{tpu_custom_call.1} parent=1 // pred_check
      _
    $region139: #{tpu_custom_call.1} parent=1 // pred_check_branch
      %199 = sbr.rel (0) target = $region141
    $region140: #{tpu_custom_call.1} parent=1 // pred_region
      _
    $region141: #{tpu_custom_call.1} parent=1 // pred_fallthru
      _
    // Predicated region
    $region142: #{tpu_custom_call.1} parent=1 // pred_check
      _
    $region143: #{tpu_custom_call.1} parent=1 // pred_check_branch
      %201 = sbr.rel (0) target = $region145
    $region144: #{tpu_custom_call.1} parent=1 // pred_region
      _
    $region145: #{tpu_custom_call.1} parent=1 // pred_fallthru
      _
    // Predicated region
    $region146: #{tpu_custom_call.1} parent=1 // pred_check
      _
    $region147: #{tpu_custom_call.1} parent=1 // pred_check_branch
      %203 = sbr.rel (0) target = $region149
    $region148: #{tpu_custom_call.1} parent=1 // pred_region
      _
    $region149: #{tpu_custom_call.1} parent=1 // pred_fallthru
      _
    // Predicated region
    $region150: #{tpu_custom_call.1} parent=1 // pred_check
      _
    $region151: #{tpu_custom_call.1} parent=1 // pred_check_branch
      %205 = sbr.rel (0) target = $region153
    $region152: #{tpu_custom_call.1} parent=1 // pred_region
      _
    $region153: #{tpu_custom_call.1} parent=1 // pred_fallthru
      _
    // Predicated region
    $region154: #{tpu_custom_call.1} parent=1 // pred_check
      _
    $region155: #{tpu_custom_call.1} parent=1 // pred_check_branch
      %207 = sbr.rel (0) target = $region157
    $region156: #{tpu_custom_call.1} parent=1 // pred_region
      _
    $region157: #{tpu_custom_call.1} parent=1 // pred_fallthru
      _
    // Predicated region
    $region158: #{tpu_custom_call.1} parent=1 // pred_check
      _
    $region159: #{tpu_custom_call.1} parent=1 // pred_check_branch
      %209 = sbr.rel (0) target = $region161
    $region160: #{tpu_custom_call.1} parent=1 // pred_region
      %211 = vsyncadd [#allocation5], 0
      %s213 = sshll.u32 %s79, 4
      %s214 = int_to_ptr.hbm [resolvable:$true] %s213
      %s215 = sshll.u32 [#allocation4], 4
      %s216 = int_to_ptr.vmem [resolvable:$true] %s215
      %218 = dma.hbm_to_vmem [thread:$0]  %s214, 16, %s216, [#allocation5]
    $region161: #{tpu_custom_call.1} parent=1 // pred_fallthru
      _
    // Predicated region
    $region162: #{tpu_custom_call.1} parent=1 // pred_check
      _
    $region163: #{tpu_custom_call.1} parent=1 // pred_check_branch
      %220 = sbr.rel (0) target = $region165
    $region164: #{tpu_custom_call.1} parent=1 // pred_region
      _
    $region165: #{tpu_custom_call.1} parent=1 // pred_fallthru
      _
    // Predicated region
    $region166: #{tpu_custom_call.1} parent=1 // pred_check
      _
    $region167: #{tpu_custom_call.1} parent=1 // pred_check_branch
      %222 = sbr.rel (0) target = $region169
    $region168: #{tpu_custom_call.1} parent=1 // pred_region
      _
    $region169: #{tpu_custom_call.1} parent=1 // pred_fallthru
      _
    // Predicated region
    $region170: #{tpu_custom_call.1} parent=1 // pred_check
      _
    $region171: #{tpu_custom_call.1} parent=1 // pred_check_branch
      %224 = sbr.rel (0) target = $region173
    $region172: #{tpu_custom_call.1} parent=1 // pred_region
      %226 = vsyncadd [#allocation8], 0
      %s228 = sshll.u32 %s85, 4
      %s229 = int_to_ptr.hbm [resolvable:$true] %s228
      %s230 = sshll.u32 [#allocation7], 4
      %s231 = int_to_ptr.vmem [resolvable:$true] %s230
      %233 = dma.hbm_to_vmem [thread:$0]  %s229, 16, %s231, [#allocation8]
    $region173: #{tpu_custom_call.1} parent=1 // pred_fallthru
      _
    // Predicated region
    $region174: #{tpu_custom_call.1} parent=1 // pred_check
      _
    $region175: #{tpu_custom_call.1} parent=1 // pred_check_branch
      %235 = sbr.rel (0) target = $region177
    $region176: #{tpu_custom_call.1} parent=1 // pred_region
      %237 = vsyncadd [#allocation8], 0
      %s239 = sshll.u32 %s87, 4
      %s240 = int_to_ptr.hbm [resolvable:$true] %s239
      %s241 = sshll.u32 [#allocation9], 4
      %s242 = int_to_ptr.vmem [resolvable:$true] %s241
      %244 = dma.hbm_to_vmem [thread:$0]  %s240, 16, %s242, [#allocation8]
    $region177: #{tpu_custom_call.1} parent=1 // pred_fallthru
      _
    // Predicated region
    $region178: #{tpu_custom_call.1} parent=1 // pred_check
      _
    $region179: #{tpu_custom_call.1} parent=1 // pred_check_branch
      %246 = sbr.rel (0) target = $region181
    $region180: #{tpu_custom_call.1} parent=1 // pred_region
      %248 = vsyncadd [#allocation11], 0
      %s250 = sshll.u32 %s89, 4
      %s251 = int_to_ptr.hbm [resolvable:$true] %s250
      %s252 = sshll.u32 [#allocation10], 4
      %s253 = int_to_ptr.vmem [resolvable:$true] %s252
      %255 = dma.hbm_to_vmem [thread:$0]  %s251, 16, %s253, [#allocation11]
    $region181: #{tpu_custom_call.1} parent=1 // pred_fallthru
      _
    // Predicated region
    $region182: #{tpu_custom_call.1} parent=1 // pred_check
      _
    $region183: #{tpu_custom_call.1} parent=1 // pred_check_branch
      %257 = sbr.rel (0) target = $region185
    $region184: #{tpu_custom_call.1} parent=1 // pred_region
      _
    $region185: #{tpu_custom_call.1} parent=1 // pred_fallthru
      _
    // Predicated region
    $region186: #{tpu_custom_call.1} parent=1 // pred_check
      _
    $region187: #{tpu_custom_call.1} parent=1 // pred_check_branch
      %259 = sbr.rel (0) target = $region189
    $region188: #{tpu_custom_call.1} parent=1 // pred_region
      %261 = vsyncadd [#allocation11], 0
      %s263 = sshll.u32 %s93, 4
      %s264 = int_to_ptr.hbm [resolvable:$true] %s263
      %s265 = sshll.u32 [#allocation12], 4
      %s266 = int_to_ptr.vmem [resolvable:$true] %s265
      %268 = dma.hbm_to_vmem [thread:$0]  %s264, 16, %s266, [#allocation11]
    $region189: #{tpu_custom_call.1} parent=1 // pred_fallthru
      _
    // Predicated region
    $region190: #{tpu_custom_call.1} parent=1 // pred_check
      _
    $region191: #{tpu_custom_call.1} parent=1 // pred_check_branch
      %270 = sbr.rel (0) target = $region193
    $region192: #{tpu_custom_call.1} parent=1 // pred_region
      _
    $region193: #{tpu_custom_call.1} parent=1 // pred_fallthru
      _
    // Predicated region
    $region194: #{tpu_custom_call.1} parent=1 // pred_check
      _
    $region195: #{tpu_custom_call.1} parent=1 // pred_check_branch
      %272 = sbr.rel (0) target = $region197
    $region196: #{tpu_custom_call.1} parent=1 // pred_region
      _
    $region197: #{tpu_custom_call.1} parent=1 // pred_fallthru
      _
    // Predicated region
    $region198: #{tpu_custom_call.1} parent=1 // pred_check
      _
    $region199: #{tpu_custom_call.1} parent=1 // pred_check_branch
      %274 = sbr.rel (0) target = $region201
    $region200: #{tpu_custom_call.1} parent=1 // pred_region
      _
    $region201: #{tpu_custom_call.1} parent=1 // pred_fallthru
      _
    // Predicated region
    $region202: #{tpu_custom_call.1} parent=1 // pred_check
      _
    $region203: #{tpu_custom_call.1} parent=1 // pred_check_branch
      %276 = sbr.rel (0) target = $region205
    $region204: #{tpu_custom_call.1} parent=1 // pred_region
      _
    $region205: #{tpu_custom_call.1} parent=1 // pred_fallthru
      _
    // Predicated region
    $region206: #{tpu_custom_call.1} parent=1 // pred_check
      _
    $region207: #{tpu_custom_call.1} parent=1 // pred_check_branch
      %278 = sbr.rel (0) target = $region209
    $region208: #{tpu_custom_call.1} parent=1 // pred_region
      _
    $region209: #{tpu_custom_call.1} parent=1 // pred_fallthru
      _
    // Predicated region
    $region210: #{tpu_custom_call.1} parent=1 // pred_check
      _
    $region211: #{tpu_custom_call.1} parent=1 // pred_check_branch
      %280 = sbr.rel (0) target = $region213
    $region212: #{tpu_custom_call.1} parent=1 // pred_region
      %282 = vsyncadd [#allocation14], 0
      %s284 = sshll.u32 %s105, 4
      %s285 = int_to_ptr.hbm [resolvable:$true] %s284
      %s286 = sshll.u32 [#allocation13], 4
      %s287 = int_to_ptr.vmem [resolvable:$true] %s286
      %289 = dma.hbm_to_vmem [thread:$0]  %s285, 16, %s287, [#allocation14]
    $region213: #{tpu_custom_call.1} parent=1 // pred_fallthru
      _
    // Predicated region
    $region214: #{tpu_custom_call.1} parent=1 // pred_check
      _
    $region215: #{tpu_custom_call.1} parent=1 // pred_check_branch
      %291 = sbr.rel (0) target = $region217
    $region216: #{tpu_custom_call.1} parent=1 // pred_region
      _
    $region217: #{tpu_custom_call.1} parent=1 // pred_fallthru
      _
    // Predicated region
    $region218: #{tpu_custom_call.1} parent=1 // pred_check
      _
    $region219: #{tpu_custom_call.1} parent=1 // pred_check_branch
      %293 = sbr.rel (0) target = $region221
    $region220: #{tpu_custom_call.1} parent=1 // pred_region
      %295 = vsyncadd [#allocation14], 0
      %s297 = sshll.u32 %s109, 4
      %s298 = int_to_ptr.hbm [resolvable:$true] %s297
      %s299 = sshll.u32 [#allocation15], 4
      %s300 = int_to_ptr.vmem [resolvable:$true] %s299
      %302 = dma.hbm_to_vmem [thread:$0]  %s298, 16, %s300, [#allocation14]
    $region221: #{tpu_custom_call.1} parent=1 // pred_fallthru
      _
    // Predicated region
    $region222: #{tpu_custom_call.1} parent=1 // pred_check
      _
    $region223: #{tpu_custom_call.1} parent=1 // pred_check_branch
      %304 = sbr.rel (0) target = $region225
    $region224: #{tpu_custom_call.1} parent=1 // pred_region
      _
    $region225: #{tpu_custom_call.1} parent=1 // pred_fallthru
      _
    // Predicated region
    $region226: #{tpu_custom_call.1} parent=1 // pred_check
      _
    $region227: #{tpu_custom_call.1} parent=1 // pred_check_branch
      %306 = sbr.rel (0) target = $region229
    $region228: #{tpu_custom_call.1} parent=1 // pred_region
      %308 = vsyncadd [#allocation17], 0
      %s310 = sshll.u32 %s113, 4
      %s311 = int_to_ptr.hbm [resolvable:$true] %s310
      %s312 = sshll.u32 [#allocation16], 4
      %s313 = int_to_ptr.vmem [resolvable:$true] %s312
      %315 = dma.hbm_to_vmem [thread:$0]  %s311, 16, %s313, [#allocation17]
    $region229: #{tpu_custom_call.1} parent=1 // pred_fallthru
      _
    // Predicated region
    $region230: #{tpu_custom_call.1} parent=1 // pred_check
      _
    $region231: #{tpu_custom_call.1} parent=1 // pred_check_branch
      %317 = sbr.rel (0) target = $region233
    $region232: #{tpu_custom_call.1} parent=1 // pred_region
      %319 = dma.done [#allocation5], 16
    $region233: #{tpu_custom_call.1} parent=1 // pred_fallthru
      _
    // Predicated region
    $region234: #{tpu_custom_call.1} parent=1 // pred_check
      _
    $region235: #{tpu_custom_call.1} parent=1 // pred_check_branch
      %321 = sbr.rel (0) target = $region237
    $region236: #{tpu_custom_call.1} parent=1 // pred_region
      %323 = dma.done [#allocation8], 16
    $region237: #{tpu_custom_call.1} parent=1 // pred_fallthru
      _
    // Predicated region
    $region238: #{tpu_custom_call.1} parent=1 // pred_check
      _
    $region239: #{tpu_custom_call.1} parent=1 // pred_check_branch
      %325 = sbr.rel (0) target = $region241
    $region240: #{tpu_custom_call.1} parent=1 // pred_region
      %327 = dma.done [#allocation8], 16
    $region241: #{tpu_custom_call.1} parent=1 // pred_fallthru
      _
    // Predicated region
    $region242: #{tpu_custom_call.1} parent=1 // pred_check
      _
    $region243: #{tpu_custom_call.1} parent=1 // pred_check_branch
      %329 = sbr.rel (0) target = $region245
    $region244: #{tpu_custom_call.1} parent=1 // pred_region
      %331 = dma.done [#allocation11], 16
    $region245: #{tpu_custom_call.1} parent=1 // pred_fallthru
      _
    // Predicated region
    $region246: #{tpu_custom_call.1} parent=1 // pred_check
      _
    $region247: #{tpu_custom_call.1} parent=1 // pred_check_branch
      %333 = sbr.rel (0) target = $region249
    $region248: #{tpu_custom_call.1} parent=1 // pred_region
      %335 = dma.done [#allocation11], 16
    $region249: #{tpu_custom_call.1} parent=1 // pred_fallthru
      _
    // Predicated region
    $region250: #{tpu_custom_call.1} parent=1 // pred_check
      _
    $region251: #{tpu_custom_call.1} parent=1 // pred_check_branch
      %337 = sbr.rel (0) target = $region253
    $region252: #{tpu_custom_call.1} parent=1 // pred_region
      %339 = dma.done [#allocation14], 16
    $region253: #{tpu_custom_call.1} parent=1 // pred_fallthru
      _
    // Predicated region
    $region254: #{tpu_custom_call.1} parent=1 // pred_check
      _
    $region255: #{tpu_custom_call.1} parent=1 // pred_check_branch
      %341 = sbr.rel (0) target = $region257
    $region256: #{tpu_custom_call.1} parent=1 // pred_region
      %343 = dma.done [#allocation14], 16
    $region257: #{tpu_custom_call.1} parent=1 // pred_fallthru
      _
    // Predicated region
    $region258: #{tpu_custom_call.1} parent=1 // pred_check
      _
    $region259: #{tpu_custom_call.1} parent=1 // pred_check_branch
      %345 = sbr.rel (0) target = $region261
    $region260: #{tpu_custom_call.1} parent=1 // pred_region
      %347 = dma.done [#allocation17], 16
    $region261: #{tpu_custom_call.1} parent=1 // pred_fallthru
      _
    %v348 = vld [vmem:[%s1] sm:$0xff]
    %v349 = vld [vmem:[%s3] sm:$0xff]
    %v350 = vld [vmem:[%s3 + $0x8] sm:$0xf]
    %v351 = vld [vmem:[%s5] sm:$0xf]
    %v352 = vld [vmem:[%s7] sm:$0x3f]
    %v353 = vld [vmem:[%s9] sm:$0xff]
    %v354 = vld [vmem:[%s9 + $0x8] sm:$0xf]
    %v355 = vld [vmem:[%s11] sm:$0xff]
    %v356 = vld [vmem:[%s13] sm:$0x3f]
    %v357 = vld [vmem:[%s15] sm:$0xf]
    %v358 = vld [vmem:[%s17] sm:$0xf]
    %v359 = vld [vmem:[%s19] sm:$0x3]
    %v360 = vld [vmem:[%s21] sm:$0x3]
    %v361 = vld [vmem:[%s23] sm:$0xff]
    %v362 = vld [vmem:[%s25] sm:$0xf]
    %v363 = vld [vmem:[%s27] sm:$0xff]
    %v364 = vld [vmem:[%s27 + $0x8] sm:$0xff]
    %v365 = vld [vmem:[%s27 + $0x10] sm:$0xff]
    %v366 = vld [vmem:[%s27 + $0x18] sm:$0xff]
    %v367 = vld [vmem:[%s27 + $0x20] sm:$0xff]
    %v368 = vld [vmem:[%s27 + $0x28] sm:$0xff]
    %v369 = vld [vmem:[%s27 + $0x30] sm:$0xff]
    %v370 = vld [vmem:[%s27 + $0x38] sm:$0xff]
    %v371 = vld [vmem:[%s27 + $0x40] sm:$0xff]
    %v372 = vld [vmem:[%s27 + $0x48] sm:$0xff]
    %v373 = vld [vmem:[%s27 + $0x50] sm:$0xff]
    %v374 = vld [vmem:[%s27 + $0x58] sm:$0xff]
    %v375 = vld [vmem:[%s27 + $0x60] sm:$0xff]
    %v376 = vld [vmem:[%s27 + $0x68] sm:$0xff]
    %v377 = vld [vmem:[%s27 + $0x70] sm:$0xff]
    %v378 = vld [vmem:[%s27 + $0x78] sm:$0xff]
    %v379 = vld [vmem:[%s27 + $0x80] sm:$0xff]
    %v380 = vld [vmem:[%s27 + $0x88] sm:$0xff]
    %v381 = vld [vmem:[%s27 + $0x90] sm:$0xff]
    %v382 = vld [vmem:[%s27 + $0x98] sm:$0xff]
    %v383 = vld [vmem:[%s27 + $0xa0] sm:$0xff]
    %v384 = vld [vmem:[%s27 + $0xa8] sm:$0xff]
    %v385 = vld [vmem:[%s27 + $0xb0] sm:$0xff]
    %v386 = vld [vmem:[%s27 + $0xb8] sm:$0xff]
    %v387 = vld [vmem:[%s27 + $0xc0] sm:$0xff]
    %v388 = vld [vmem:[%s27 + $0xc8] sm:$0xff]
    %v389 = vld [vmem:[%s27 + $0xd0] sm:$0xff]
    %v390 = vld [vmem:[%s27 + $0xd8] sm:$0xff]
    %v391 = vld [vmem:[%s27 + $0xe0] sm:$0xff]
    %v392 = vld [vmem:[%s27 + $0xe8] sm:$0xff]
    %v393 = vld [vmem:[%s27 + $0xf0] sm:$0xff]
    %v394 = vld [vmem:[%s27 + $0xf8] sm:$0xff]
    %v395 = vld [vmem:[%s29] sm:$0xff]
    %v396 = vld [vmem:[%s29 + $0x8] sm:$0xff]
    %v397 = vld [vmem:[%s29 + $0x10] sm:$0xff]
    %v398 = vld [vmem:[%s29 + $0x18] sm:$0xff]
    %v399 = vld [vmem:[%s29 + $0x20] sm:$0xff]
    %v400 = vld [vmem:[%s29 + $0x28] sm:$0xff]
    %v401 = vld [vmem:[%s29 + $0x30] sm:$0xff]
    %v402 = vld [vmem:[%s29 + $0x38] sm:$0xff]
    %v403 = vld [vmem:[%s29 + $0x40] sm:$0xff]
    %v404 = vld [vmem:[%s29 + $0x48] sm:$0xff]
    %v405 = vld [vmem:[%s29 + $0x50] sm:$0xff]
    %v406 = vld [vmem:[%s29 + $0x58] sm:$0xff]
    %v407 = vld [vmem:[%s29 + $0x60] sm:$0xff]
    %v408 = vld [vmem:[%s29 + $0x68] sm:$0xff]
    %v409 = vld [vmem:[%s29 + $0x70] sm:$0xff]
    %v410 = vld [vmem:[%s29 + $0x78] sm:$0xff]
    %v411 = vld [vmem:[%s29 + $0x80] sm:$0xff]
    %v412 = vld [vmem:[%s29 + $0x88] sm:$0xff]
    %v413 = vld [vmem:[%s29 + $0x90] sm:$0xff]
    %v414 = vld [vmem:[%s29 + $0x98] sm:$0xff]
    %v415 = vld [vmem:[%s29 + $0xa0] sm:$0xff]
    %v416 = vld [vmem:[%s29 + $0xa8] sm:$0xff]
    %v417 = vld [vmem:[%s29 + $0xb0] sm:$0xff]
    %v418 = vld [vmem:[%s29 + $0xb8] sm:$0xff]
    %v419 = vld [vmem:[%s29 + $0xc0] sm:$0xff]
    %v420 = vld [vmem:[%s29 + $0xc8] sm:$0xff]
    %v421 = vld [vmem:[%s29 + $0xd0] sm:$0xff]
    %v422 = vld [vmem:[%s29 + $0xd8] sm:$0xff]
    %v423 = vld [vmem:[%s29 + $0xe0] sm:$0xff]
    %v424 = vld [vmem:[%s29 + $0xe8] sm:$0xff]
    %v425 = vld [vmem:[%s29 + $0xf0] sm:$0xff]
    %v426 = vld [vmem:[%s29 + $0xf8] sm:$0xff]
    %v427 = vld [vmem:[%s29 + $0x100] sm:$0xff]
    %v428 = vld [vmem:[%s29 + $0x108] sm:$0xff]
    %v429 = vld [vmem:[%s29 + $0x110] sm:$0xff]
    %v430 = vld [vmem:[%s29 + $0x118] sm:$0xff]
    %v431 = vld [vmem:[%s29 + $0x120] sm:$0xff]
    %v432 = vld [vmem:[%s29 + $0x128] sm:$0xff]
    %v433 = vld [vmem:[%s29 + $0x130] sm:$0xff]
    %v434 = vld [vmem:[%s29 + $0x138] sm:$0xff]
    %v435 = vld [vmem:[%s29 + $0x140] sm:$0xff]
    %v436 = vld [vmem:[%s29 + $0x148] sm:$0xff]
    %v437 = vld [vmem:[%s29 + $0x150] sm:$0xff]
    %v438 = vld [vmem:[%s29 + $0x158] sm:$0xff]
    %v439 = vld [vmem:[%s29 + $0x160] sm:$0xff]
    %v440 = vld [vmem:[%s29 + $0x168] sm:$0xff]
    %v441 = vld [vmem:[%s29 + $0x170] sm:$0xff]
    %v442 = vld [vmem:[%s29 + $0x178] sm:$0xff]
    %v443 = vld [vmem:[%s29 + $0x180] sm:$0xff]
    %v444 = vld [vmem:[%s29 + $0x188] sm:$0xff]
    %v445 = vld [vmem:[%s29 + $0x190] sm:$0xff]
    %v446 = vld [vmem:[%s29 + $0x198] sm:$0xff]
    %v447 = vld [vmem:[%s29 + $0x1a0] sm:$0xff]
    %v448 = vld [vmem:[%s29 + $0x1a8] sm:$0xff]
    %v449 = vld [vmem:[%s29 + $0x1b0] sm:$0xff]
    %v450 = vld [vmem:[%s29 + $0x1b8] sm:$0xff]
    %v451 = vld [vmem:[%s29 + $0x1c0] sm:$0xff]
    %v452 = vld [vmem:[%s29 + $0x1c8] sm:$0xff]
    %v453 = vld [vmem:[%s29 + $0x1d0] sm:$0xff]
    %v454 = vld [vmem:[%s29 + $0x1d8] sm:$0xff]
    %v455 = vld [vmem:[%s29 + $0x1e0] sm:$0xff]
    %v456 = vld [vmem:[%s29 + $0x1e8] sm:$0xff]
    %v457 = vld [vmem:[%s29 + $0x1f0] sm:$0xff]
    %v458 = vld [vmem:[%s29 + $0x1f8] sm:$0xff]
    %v459 = vld [vmem:[%s29 + $0x200] sm:$0xff]
    %v460 = vld [vmem:[%s29 + $0x208] sm:$0xff]
    %v461 = vld [vmem:[%s29 + $0x210] sm:$0xff]
    %v462 = vld [vmem:[%s29 + $0x218] sm:$0xff]
    %v463 = vld [vmem:[%s29 + $0x220] sm:$0xff]
    %v464 = vld [vmem:[%s29 + $0x228] sm:$0xff]
    %v465 = vld [vmem:[%s29 + $0x230] sm:$0xff]
    %v466 = vld [vmem:[%s29 + $0x238] sm:$0xff]
    %v467 = vld [vmem:[%s29 + $0x240] sm:$0xff]
    %v468 = vld [vmem:[%s29 + $0x248] sm:$0xff]
    %v469 = vld [vmem:[%s29 + $0x250] sm:$0xff]
    %v470 = vld [vmem:[%s29 + $0x258] sm:$0xff]
    %v471 = vld [vmem:[%s29 + $0x260] sm:$0xff]
    %v472 = vld [vmem:[%s29 + $0x268] sm:$0xff]
    %v473 = vld [vmem:[%s29 + $0x270] sm:$0xff]
    %v474 = vld [vmem:[%s29 + $0x278] sm:$0xff]
    %v475 = vld [vmem:[%s29 + $0x280] sm:$0xff]
    %v476 = vld [vmem:[%s29 + $0x288] sm:$0xff]
    %v477 = vld [vmem:[%s29 + $0x290] sm:$0xff]
    %v478 = vld [vmem:[%s29 + $0x298] sm:$0xff]
    %v479 = vld [vmem:[%s29 + $0x2a0] sm:$0xff]
    %v480 = vld [vmem:[%s29 + $0x2a8] sm:$0xff]
    %v481 = vld [vmem:[%s29 + $0x2b0] sm:$0xff]
    %v482 = vld [vmem:[%s29 + $0x2b8] sm:$0xff]
    %v483 = vld [vmem:[%s29 + $0x2c0] sm:$0xff]
    %v484 = vld [vmem:[%s29 + $0x2c8] sm:$0xff]
    %v485 = vld [vmem:[%s29 + $0x2d0] sm:$0xff]
    %v486 = vld [vmem:[%s29 + $0x2d8] sm:$0xff]
    %v487 = vld [vmem:[%s29 + $0x2e0] sm:$0xff]
    %v488 = vld [vmem:[%s29 + $0x2e8] sm:$0xff]
    %v489 = vld [vmem:[%s29 + $0x2f0] sm:$0xff]
    %v490 = vld [vmem:[%s29 + $0x2f8] sm:$0xff]
    %v491 = vld [vmem:[%s29 + $0x300] sm:$0xff]
    %v492 = vld [vmem:[%s29 + $0x308] sm:$0xff]
    %v493 = vld [vmem:[%s29 + $0x310] sm:$0xff]
    %v494 = vld [vmem:[%s29 + $0x318] sm:$0xff]
    %v495 = vld [vmem:[%s29 + $0x320] sm:$0xff]
    %v496 = vld [vmem:[%s29 + $0x328] sm:$0xff]
    %v497 = vld [vmem:[%s29 + $0x330] sm:$0xff]
    %v498 = vld [vmem:[%s29 + $0x338] sm:$0xff]
    %v499 = vld [vmem:[%s29 + $0x340] sm:$0xff]
    %v500 = vld [vmem:[%s29 + $0x348] sm:$0xff]
    %v501 = vld [vmem:[%s29 + $0x350] sm:$0xff]
    %v502 = vld [vmem:[%s29 + $0x358] sm:$0xff]
    %v503 = vld [vmem:[%s29 + $0x360] sm:$0xff]
    %v504 = vld [vmem:[%s29 + $0x368] sm:$0xff]
    %v505 = vld [vmem:[%s29 + $0x370] sm:$0xff]
    %v506 = vld [vmem:[%s29 + $0x378] sm:$0xff]
    %v507 = vld [vmem:[%s29 + $0x380] sm:$0xff]
    %v508 = vld [vmem:[%s29 + $0x388] sm:$0xff]
    %v509 = vld [vmem:[%s29 + $0x390] sm:$0xff]
    %v510 = vld [vmem:[%s29 + $0x398] sm:$0xff]
    %v511 = vld [vmem:[%s29 + $0x3a0] sm:$0xff]
    %v512 = vld [vmem:[%s29 + $0x3a8] sm:$0xff]
    %v513 = vld [vmem:[%s29 + $0x3b0] sm:$0xff]
    %v514 = vld [vmem:[%s29 + $0x3b8] sm:$0xff]
    %v515 = vld [vmem:[%s29 + $0x3c0] sm:$0xff]
    %v516 = vld [vmem:[%s29 + $0x3c8] sm:$0xff]
    %v517 = vld [vmem:[%s29 + $0x3d0] sm:$0xff]
    %v518 = vld [vmem:[%s29 + $0x3d8] sm:$0xff]
    %v519 = vld [vmem:[%s29 + $0x3e0] sm:$0xff]
    %v520 = vld [vmem:[%s29 + $0x3e8] sm:$0xff]
    %v521 = vld [vmem:[%s29 + $0x3f0] sm:$0xff]
    %v522 = vld [vmem:[%s29 + $0x3f8] sm:$0xff]
    %v523 = vld [vmem:[%s31] sm:$0xff]
    %v524 = vld [vmem:[%s31 + $0x8] sm:$0xff]
    %v525 = vld [vmem:[%s31 + $0x10] sm:$0xff]
    %v526 = vld [vmem:[%s31 + $0x18] sm:$0xff]
    %v527 = vld [vmem:[%s33] sm:$0xf]
    %v528 = vld [vmem:[%s35] sm:$0xff]
    %v529 = vld [vmem:[%s35 + $0x8] sm:$0xff]
    %v530 = vld [vmem:[%s37] sm:$0x1]
    %v531 = vld [vmem:[%s39] sm:$0xff]
    %v532 = vld [vmem:[%s39 + $0x8] sm:$0xff]
    %v533 = vld [vmem:[%s39 + $0x10] sm:$0xff]
    %v534 = vld [vmem:[%s39 + $0x18] sm:$0xff]
    %v535 = vld [vmem:[%s41] sm:$0x1]
    %v536 = vld [vmem:[%s43] sm:$0xff]
    %v537 = vld [vmem:[%s43 + $0x8] sm:$0xff]
    %v538 = vld [vmem:[%s45] sm:$0x1]
    %v539 = vld [vmem:[%s47] sm:$0xff]
    %v540 = vld [vmem:[%s47 + $0x8] sm:$0xff]
    %v541 = vld [vmem:[%s47 + $0x10] sm:$0xff]
    %v542 = vld [vmem:[%s47 + $0x18] sm:$0xff]
    %v543 = vld [vmem:[%s49] sm:$0x1]
    %v544 = vld [vmem:[%s51] sm:$0xff]
    %v545 = vld [vmem:[%s51 + $0x8] sm:$0xff]
    %v546 = vld [vmem:[%s51 + $0x10] sm:$0xff]
    %v547 = vld [vmem:[%s51 + $0x18] sm:$0xff]
    %v548 = vld [vmem:[%s51 + $0x20] sm:$0xff]
    %v549 = vld [vmem:[%s51 + $0x28] sm:$0xff]
    %v550 = vld [vmem:[%s51 + $0x30] sm:$0xff]
    %v551 = vld [vmem:[%s51 + $0x38] sm:$0xff]
    %v552 = vld [vmem:[%s53] sm:$0xff]
    %v553 = vld [vmem:[%s55] sm:$0x1]
    %v554 = vld [vmem:[%s57] sm:$0xff]
    %v555 = vld [vmem:[%s57 + $0x8] sm:$0xff]
    %v556 = vld [vmem:[%s57 + $0x10] sm:$0xff]
    %v557 = vld [vmem:[%s57 + $0x18] sm:$0xff]
    %v558 = vld [vmem:[%s57 + $0x20] sm:$0xff]
    %v559 = vld [vmem:[%s57 + $0x28] sm:$0xff]
    %v560 = vld [vmem:[%s57 + $0x30] sm:$0xff]
    %v561 = vld [vmem:[%s57 + $0x38] sm:$0xff]
    %v562 = vld [vmem:[%s59] sm:$0xff]
    %v563 = vld [vmem:[%s61] sm:$0x1]
    %v564 = vld [vmem:[%s63] sm:$0xff]
    %v565 = vld [vmem:[%s63 + $0x8] sm:$0xff]
    %v566 = vld [vmem:[%s63 + $0x10] sm:$0xff]
    %v567 = vld [vmem:[%s63 + $0x18] sm:$0xff]
    %v568 = vld [vmem:[%s65] sm:$0xff]
    %v569 = vld [vmem:[%s65 + $0x8] sm:$0xff]
    %v570 = vld [vmem:[%s65 + $0x10] sm:$0xff]
    %v571 = vld [vmem:[%s65 + $0x18] sm:$0xff]
    %v572 = vld [vmem:[%s67] sm:$0xff]
    %v573 = vld [vmem:[%s67 + $0x8] sm:$0xff]
    %v574 = vld [vmem:[%s67 + $0x10] sm:$0xff]
    %v575 = vld [vmem:[%s67 + $0x18] sm:$0xff]
    %v576 = vld [vmem:[%s69] sm:$0xff]
    %v577 = vld [vmem:[%s69 + $0x8] sm:$0xff]
    %v578 = vld [vmem:[%s69 + $0x10] sm:$0xff]
    %v579 = vld [vmem:[%s69 + $0x18] sm:$0xff]
    %v580 = vld [vmem:[%s71] sm:$0x1]
    %v581 = vld [vmem:[%s73] sm:$0xff]
    %v582 = vld [vmem:[%s73 + $0x8] sm:$0xff]
    %v583 = vld [vmem:[%s73 + $0x10] sm:$0xff]
    %v584 = vld [vmem:[%s73 + $0x18] sm:$0xff]
    %v585 = vld [vmem:[%s75] sm:$0xff]
    %v586 = vld [vmem:[%s75 + $0x8] sm:$0xff]
    %v587 = vld [vmem:[%s75 + $0x10] sm:$0xff]
    %v588 = vld [vmem:[%s75 + $0x18] sm:$0xff]
    %v589 = vld [vmem:[%s77] sm:$0x1]
    %v590 = vld [vmem:[#allocation4] sm:$0x1]
    %v591 = vld [vmem:[%s81] sm:$0xff]
    %v592 = vld [vmem:[%s81 + $0x8] sm:$0xff]
    %v593 = vld [vmem:[%s81 + $0x10] sm:$0xff]
    %v594 = vld [vmem:[%s81 + $0x18] sm:$0xff]
    %v595 = vld [vmem:[%s83] sm:$0xff]
    %v596 = vld [vmem:[%s83 + $0x8] sm:$0xff]
    %v597 = vld [vmem:[%s83 + $0x10] sm:$0xff]
    %v598 = vld [vmem:[%s83 + $0x18] sm:$0xff]
    %v599 = vld [vmem:[#allocation7] sm:$0x1]
    %v600 = vld [vmem:[#allocation9] sm:$0x1]
    %v601 = vld [vmem:[#allocation10] sm:$0x1]
    %v602 = vld [vmem:[#allocation2] sm:$0x1]
    %v603 = vld [vmem:[#allocation12] sm:$0x1]
    %v604 = vld [vmem:[#allocation3] sm:$0x1]
    %v605 = vld [vmem:[%s97] sm:$0xff]
    %v606 = vld [vmem:[%s97 + $0x8] sm:$0xff]
    %v607 = vld [vmem:[%s97 + $0x10] sm:$0xff]
    %v608 = vld [vmem:[%s97 + $0x18] sm:$0xff]
    %v609 = vld [vmem:[%s99] sm:$0xff]
    %v610 = vld [vmem:[%s99 + $0x8] sm:$0xff]
    %v611 = vld [vmem:[%s99 + $0x10] sm:$0xff]
    %v612 = vld [vmem:[%s99 + $0x18] sm:$0xff]
    %v613 = vld [vmem:[%s101] sm:$0xff]
    %v614 = vld [vmem:[%s101 + $0x8] sm:$0xff]
    %v615 = vld [vmem:[%s101 + $0x10] sm:$0xff]
    %v616 = vld [vmem:[%s101 + $0x18] sm:$0xff]
    %v617 = vld [vmem:[%s103] sm:$0xff]
    %v618 = vld [vmem:[%s103 + $0x8] sm:$0xff]
    %v619 = vld [vmem:[%s103 + $0x10] sm:$0xff]
    %v620 = vld [vmem:[%s103 + $0x18] sm:$0xff]
    %v621 = vld [vmem:[#allocation13] sm:$0x1]
    %v622 = vld [vmem:[%s107] sm:$0xff]
    %v623 = vld [vmem:[%s107 + $0x8] sm:$0xff]
    %v624 = vld [vmem:[%s107 + $0x10] sm:$0xff]
    %v625 = vld [vmem:[%s107 + $0x18] sm:$0xff]
    %v626 = vld [vmem:[%s107 + $0x20] sm:$0xff]
    %v627 = vld [vmem:[%s107 + $0x28] sm:$0xff]
    %v628 = vld [vmem:[%s107 + $0x30] sm:$0xff]
    %v629 = vld [vmem:[%s107 + $0x38] sm:$0xff]
    %v630 = vld [vmem:[#allocation15] sm:$0x1]
    %v631 = vld [vmem:[%s111] sm:$0x3]
    %v632 = vld [vmem:[#allocation16] sm:$0x1]
    %v634 = vperm.slane %v530, 0
    %vm636 = vcmask 130048
    %v638 = vsel %vm636, %v348, 0
    %640 = vmatpush.msra.mxu0 0.0
    %641 = vmatpush.msra.mxu0 0.0
    %642 = vmatpush.msra.mxu0 0.0
    %643 = vmatpush.msra.mxu0 0.0
    %644 = vmatpush.msra.mxu0 0.0
    %645 = vmatpush.msra.mxu0 0.0
    %646 = vmatpush.msra.mxu0 0.0
    %647 = vmatpush.msra.mxu0 0.0
    %648 = vmatpush.msra.mxu0 0.0
    %649 = vmatpush.msra.mxu0 0.0
    %650 = vmatpush.msra.mxu0 0.0
    %651 = vmatpush.msra.mxu0 0.0
    %652 = vmatpush.msra.mxu0 0.0
    %653 = vmatpush.msra.mxu0 0.0
    %654 = vmatpush.msra.mxu0 %v529
    %655 = vmatpush.msra.mxu0 %v528
    %656 = vmatmul.f32.gmra.mxu0 %v638
    %v657 = vpop.f32.mrf.mxu0
    %v658 = vadd.f32 %v634, %v657
    %659 = vdwg.mxu0
    %v660 = vmax.f32 %v658, 0.0
    %v662 = vperm.slane %v535, 0
    %vm664 = vcmask 261120
    %v666 = vsel %vm664, %v660, 0
    %668 = vmatpush.msra.mxu0 0.0
    %669 = vmatpush.msra.mxu0 0.0
    %670 = vmatpush.msra.mxu0 0.0
    %671 = vmatpush.msra.mxu0 0.0
    %672 = vmatpush.msra.mxu0 0.0
    %673 = vmatpush.msra.mxu0 0.0
    %674 = vmatpush.msra.mxu0 0.0
    %675 = vmatpush.msra.mxu0 0.0
    %676 = vmatpush.msra.mxu0 0.0
    %677 = vmatpush.msra.mxu0 0.0
    %678 = vmatpush.msra.mxu0 0.0
    %679 = vmatpush.msra.mxu0 0.0
    %680 = vmatpush.msra.mxu0 %v534
    %681 = vmatpush.msra.mxu0 %v533
    %682 = vmatpush.msra.mxu0 %v532
    %683 = vmatpush.msra.mxu0 %v531
    %684 = vmatmul.f32.gmra.mxu0 %v666
    %v685 = vpop.f32.mrf.mxu0
    %v686 = vadd.f32 %v662, %v685
    %687 = vdwg.mxu0
    %v688 = vmax.f32 %v686, 0.0
    %v690 = vperm.slane %v538, 0
    %v693 = vsel %vm636, %v351, 0
    %695 = vmatpush.msra.mxu0 0.0
    %696 = vmatpush.msra.mxu0 0.0
    %697 = vmatpush.msra.mxu0 0.0
    %698 = vmatpush.msra.mxu0 0.0
    %699 = vmatpush.msra.mxu0 0.0
    %700 = vmatpush.msra.mxu0 0.0
    %701 = vmatpush.msra.mxu0 0.0
    %702 = vmatpush.msra.mxu0 0.0
    %703 = vmatpush.msra.mxu0 0.0
    %704 = vmatpush.msra.mxu0 0.0
    %705 = vmatpush.msra.mxu0 0.0
    %706 = vmatpush.msra.mxu0 0.0
    %707 = vmatpush.msra.mxu0 0.0
    %708 = vmatpush.msra.mxu0 0.0
    %709 = vmatpush.msra.mxu0 %v537
    %710 = vmatpush.msra.mxu0 %v536
    %711 = vmatmul.f32.gmra.mxu0 %v693
    %v712 = vpop.f32.mrf.mxu0
    %v713 = vadd.f32 %v690, %v712
    %714 = vdwg.mxu0
    %v715 = vmax.f32 %v713, 0.0
    %v717 = vperm.slane %v543, 0
    %v720 = vsel %vm664, %v715, 0
    %722 = vmatpush.msra.mxu0 0.0
    %723 = vmatpush.msra.mxu0 0.0
    %724 = vmatpush.msra.mxu0 0.0
    %725 = vmatpush.msra.mxu0 0.0
    %726 = vmatpush.msra.mxu0 0.0
    %727 = vmatpush.msra.mxu0 0.0
    %728 = vmatpush.msra.mxu0 0.0
    %729 = vmatpush.msra.mxu0 0.0
    %730 = vmatpush.msra.mxu0 0.0
    %731 = vmatpush.msra.mxu0 0.0
    %732 = vmatpush.msra.mxu0 0.0
    %733 = vmatpush.msra.mxu0 0.0
    %734 = vmatpush.msra.mxu0 %v542
    %735 = vmatpush.msra.mxu0 %v541
    %736 = vmatpush.msra.mxu0 %v540
    %737 = vmatpush.msra.mxu0 %v539
    %738 = vmatmul.f32.gmra.mxu0 %v720
    %v739 = vpop.f32.mrf.mxu0
    %v740 = vadd.f32 %v717, %v739
    %741 = vdwg.mxu0
    %v742 = vmax.f32 %v740, 0.0
    %v744 = vperm.slane %v552, 0
    %v745 = vperm.slane %v552, 1
    %v746 = vperm.slane %v552, 2
    %v747 = vperm.slane %v552, 3
    %v748 = vperm.slane %v552, 4
    %v749 = vperm.slane %v552, 5
    %v750 = vperm.slane %v552, 6
    %v751 = vperm.slane %v552, 7
    %vm760 = vcmask 64512
    %v762 = vsel %vm760, %v352, 0
    %764 = vmatpush.msra.mxu0 0.0
    %765 = vmatpush.msra.mxu0 0.0
    %766 = vmatpush.msra.mxu0 0.0
    %767 = vmatpush.msra.mxu0 0.0
    %768 = vmatpush.msra.mxu0 0.0
    %769 = vmatpush.msra.mxu0 0.0
    %770 = vmatpush.msra.mxu0 0.0
    %771 = vmatpush.msra.mxu0 0.0
    %772 = vmatpush.msra.mxu0 0.0
    %773 = vmatpush.msra.mxu0 0.0
    %774 = vmatpush.msra.mxu0 0.0
    %775 = vmatpush.msra.mxu0 0.0
    %776 = vmatpush.msra.mxu0 0.0
    %777 = vmatpush.msra.mxu0 0.0
    %778 = vmatpush.msra.mxu0 0.0
    %779 = vmatpush.msra.mxu0 %v544
    %780 = vmatmul.f32.gmra.mxu0 %v762
    %v781 = vpop.f32.mrf.mxu0
    %v782 = vadd.f32 %v744, %v781
    %783 = vdwg.mxu0
    %784 = vmatpush.msra.mxu0 0.0
    %785 = vmatpush.msra.mxu0 0.0
    %786 = vmatpush.msra.mxu0 0.0
    %787 = vmatpush.msra.mxu0 0.0
    %788 = vmatpush.msra.mxu0 0.0
    %789 = vmatpush.msra.mxu0 0.0
    %790 = vmatpush.msra.mxu0 0.0
    %791 = vmatpush.msra.mxu0 0.0
    %792 = vmatpush.msra.mxu0 0.0
    %793 = vmatpush.msra.mxu0 0.0
    %794 = vmatpush.msra.mxu0 0.0
    %795 = vmatpush.msra.mxu0 0.0
    %796 = vmatpush.msra.mxu0 0.0
    %797 = vmatpush.msra.mxu0 0.0
    %798 = vmatpush.msra.mxu0 0.0
    %799 = vmatpush.msra.mxu0 %v545
    %800 = vmatmul.f32.gmra.mxu0 %v762
    %v801 = vpop.f32.mrf.mxu0
    %v802 = vadd.f32 %v745, %v801
    %803 = vdwg.mxu0
    %804 = vmatpush.msra.mxu0 0.0
    %805 = vmatpush.msra.mxu0 0.0
    %806 = vmatpush.msra.mxu0 0.0
    %807 = vmatpush.msra.mxu0 0.0
    %808 = vmatpush.msra.mxu0 0.0
    %809 = vmatpush.msra.mxu0 0.0
    %810 = vmatpush.msra.mxu0 0.0
    %811 = vmatpush.msra.mxu0 0.0
    %812 = vmatpush.msra.mxu0 0.0
    %813 = vmatpush.msra.mxu0 0.0
    %814 = vmatpush.msra.mxu0 0.0
    %815 = vmatpush.msra.mxu0 0.0
    %816 = vmatpush.msra.mxu0 0.0
    %817 = vmatpush.msra.mxu0 0.0
    %818 = vmatpush.msra.mxu0 0.0
    %819 = vmatpush.msra.mxu0 %v546
    %820 = vmatmul.f32.gmra.mxu0 %v762
    %v821 = vpop.f32.mrf.mxu0
    %v822 = vadd.f32 %v746, %v821
    %823 = vdwg.mxu0
    %824 = vmatpush.msra.mxu0 0.0
    %825 = vmatpush.msra.mxu0 0.0
    %826 = vmatpush.msra.mxu0 0.0
    %827 = vmatpush.msra.mxu0 0.0
    %828 = vmatpush.msra.mxu0 0.0
    %829 = vmatpush.msra.mxu0 0.0
    %830 = vmatpush.msra.mxu0 0.0
    %831 = vmatpush.msra.mxu0 0.0
    %832 = vmatpush.msra.mxu0 0.0
    %833 = vmatpush.msra.mxu0 0.0
    %834 = vmatpush.msra.mxu0 0.0
    %835 = vmatpush.msra.mxu0 0.0
    %836 = vmatpush.msra.mxu0 0.0
    %837 = vmatpush.msra.mxu0 0.0
    %838 = vmatpush.msra.mxu0 0.0
    %839 = vmatpush.msra.mxu0 %v547
    %840 = vmatmul.f32.gmra.mxu0 %v762
    %v841 = vpop.f32.mrf.mxu0
    %v842 = vadd.f32 %v747, %v841
    %843 = vdwg.mxu0
    %844 = vmatpush.msra.mxu0 0.0
    %845 = vmatpush.msra.mxu0 0.0
    %846 = vmatpush.msra.mxu0 0.0
    %847 = vmatpush.msra.mxu0 0.0
    %848 = vmatpush.msra.mxu0 0.0
    %849 = vmatpush.msra.mxu0 0.0
    %850 = vmatpush.msra.mxu0 0.0
    %851 = vmatpush.msra.mxu0 0.0
    %852 = vmatpush.msra.mxu0 0.0
    %853 = vmatpush.msra.mxu0 0.0
    %854 = vmatpush.msra.mxu0 0.0
    %855 = vmatpush.msra.mxu0 0.0
    %856 = vmatpush.msra.mxu0 0.0
    %857 = vmatpush.msra.mxu0 0.0
    %858 = vmatpush.msra.mxu0 0.0
    %859 = vmatpush.msra.mxu0 %v548
    %860 = vmatmul.f32.gmra.mxu0 %v762
    %v861 = vpop.f32.mrf.mxu0
    %v862 = vadd.f32 %v748, %v861
    %863 = vdwg.mxu0
    %864 = vmatpush.msra.mxu0 0.0
    %865 = vmatpush.msra.mxu0 0.0
    %866 = vmatpush.msra.mxu0 0.0
    %867 = vmatpush.msra.mxu0 0.0
    %868 = vmatpush.msra.mxu0 0.0
    %869 = vmatpush.msra.mxu0 0.0
    %870 = vmatpush.msra.mxu0 0.0
    %871 = vmatpush.msra.mxu0 0.0
    %872 = vmatpush.msra.mxu0 0.0
    %873 = vmatpush.msra.mxu0 0.0
    %874 = vmatpush.msra.mxu0 0.0
    %875 = vmatpush.msra.mxu0 0.0
    %876 = vmatpush.msra.mxu0 0.0
    %877 = vmatpush.msra.mxu0 0.0
    %878 = vmatpush.msra.mxu0 0.0
    %879 = vmatpush.msra.mxu0 %v549
    %880 = vmatmul.f32.gmra.mxu0 %v762
    %v881 = vpop.f32.mrf.mxu0
    %v882 = vadd.f32 %v749, %v881
    %883 = vdwg.mxu0
    %884 = vmatpush.msra.mxu0 0.0
    %885 = vmatpush.msra.mxu0 0.0
    %886 = vmatpush.msra.mxu0 0.0
    %887 = vmatpush.msra.mxu0 0.0
    %888 = vmatpush.msra.mxu0 0.0
    %889 = vmatpush.msra.mxu0 0.0
    %890 = vmatpush.msra.mxu0 0.0
    %891 = vmatpush.msra.mxu0 0.0
    %892 = vmatpush.msra.mxu0 0.0
    %893 = vmatpush.msra.mxu0 0.0
    %894 = vmatpush.msra.mxu0 0.0
    %895 = vmatpush.msra.mxu0 0.0
    %896 = vmatpush.msra.mxu0 0.0
    %897 = vmatpush.msra.mxu0 0.0
    %898 = vmatpush.msra.mxu0 0.0
    %899 = vmatpush.msra.mxu0 %v550
    %900 = vmatmul.f32.gmra.mxu0 %v762
    %v901 = vpop.f32.mrf.mxu0
    %v902 = vadd.f32 %v750, %v901
    %903 = vdwg.mxu0
    %904 = vmatpush.msra.mxu0 0.0
    %905 = vmatpush.msra.mxu0 0.0
    %906 = vmatpush.msra.mxu0 0.0
    %907 = vmatpush.msra.mxu0 0.0
    %908 = vmatpush.msra.mxu0 0.0
    %909 = vmatpush.msra.mxu0 0.0
    %910 = vmatpush.msra.mxu0 0.0
    %911 = vmatpush.msra.mxu0 0.0
    %912 = vmatpush.msra.mxu0 0.0
    %913 = vmatpush.msra.mxu0 0.0
    %914 = vmatpush.msra.mxu0 0.0
    %915 = vmatpush.msra.mxu0 0.0
    %916 = vmatpush.msra.mxu0 0.0
    %917 = vmatpush.msra.mxu0 0.0
    %918 = vmatpush.msra.mxu0 0.0
    %919 = vmatpush.msra.mxu0 %v551
    %920 = vmatmul.f32.gmra.mxu0 %v762
    %v921 = vpop.f32.mrf.mxu0
    %v922 = vadd.f32 %v751, %v921
    %923 = vdwg.mxu0
    %v925 = vperm.slane %v562, 0
    %v926 = vperm.slane %v562, 1
    %v927 = vperm.slane %v562, 2
    %v928 = vperm.slane %v562, 3
    %v929 = vperm.slane %v562, 4
    %v930 = vperm.slane %v562, 5
    %v931 = vperm.slane %v562, 6
    %v932 = vperm.slane %v562, 7
    %v942 = vsel %vm760, %v349, 0
    %v945 = vsel %vm760, %v350, 0
    %947 = vmatpush.msra.mxu0 0.0
    %948 = vmatpush.msra.mxu0 0.0
    %949 = vmatpush.msra.mxu0 0.0
    %950 = vmatpush.msra.mxu0 0.0
    %951 = vmatpush.msra.mxu0 0.0
    %952 = vmatpush.msra.mxu0 0.0
    %953 = vmatpush.msra.mxu0 0.0
    %954 = vmatpush.msra.mxu0 0.0
    %955 = vmatpush.msra.mxu0 0.0
    %956 = vmatpush.msra.mxu0 0.0
    %957 = vmatpush.msra.mxu0 0.0
    %958 = vmatpush.msra.mxu0 0.0
    %959 = vmatpush.msra.mxu0 0.0
    %960 = vmatpush.msra.mxu0 0.0
    %961 = vmatpush.msra.mxu0 0.0
    %962 = vmatpush.msra.mxu0 %v554
    %963 = vmatmul.f32.gmra.mxu0 %v942
    %v964 = vpop.f32.mrf.mxu0
    %v965 = vadd.f32 %v925, %v964
    %966 = vmatmul.f32.gmra.mxu0 %v945
    %v967 = vpop.f32.mrf.mxu0
    %v968 = vadd.f32 %v925, %v967
    %969 = vdwg.mxu0
    %970 = vmatpush.msra.mxu0 0.0
    %971 = vmatpush.msra.mxu0 0.0
    %972 = vmatpush.msra.mxu0 0.0
    %973 = vmatpush.msra.mxu0 0.0
    %974 = vmatpush.msra.mxu0 0.0
    %975 = vmatpush.msra.mxu0 0.0
    %976 = vmatpush.msra.mxu0 0.0
    %977 = vmatpush.msra.mxu0 0.0
    %978 = vmatpush.msra.mxu0 0.0
    %979 = vmatpush.msra.mxu0 0.0
    %980 = vmatpush.msra.mxu0 0.0
    %981 = vmatpush.msra.mxu0 0.0
    %982 = vmatpush.msra.mxu0 0.0
    %983 = vmatpush.msra.mxu0 0.0
    %984 = vmatpush.msra.mxu0 0.0
    %985 = vmatpush.msra.mxu0 %v555
    %986 = vmatmul.f32.gmra.mxu0 %v942
    %v987 = vpop.f32.mrf.mxu0
    %v988 = vadd.f32 %v926, %v987
    %989 = vmatmul.f32.gmra.mxu0 %v945
    %v990 = vpop.f32.mrf.mxu0
    %v991 = vadd.f32 %v926, %v990
    %992 = vdwg.mxu0
    %993 = vmatpush.msra.mxu0 0.0
    %994 = vmatpush.msra.mxu0 0.0
    %995 = vmatpush.msra.mxu0 0.0
    %996 = vmatpush.msra.mxu0 0.0
    %997 = vmatpush.msra.mxu0 0.0
    %998 = vmatpush.msra.mxu0 0.0
    %999 = vmatpush.msra.mxu0 0.0
    %1000 = vmatpush.msra.mxu0 0.0
    %1001 = vmatpush.msra.mxu0 0.0
    %1002 = vmatpush.msra.mxu0 0.0
    %1003 = vmatpush.msra.mxu0 0.0
    %1004 = vmatpush.msra.mxu0 0.0
    %1005 = vmatpush.msra.mxu0 0.0
    %1006 = vmatpush.msra.mxu0 0.0
    %1007 = vmatpush.msra.mxu0 0.0
    %1008 = vmatpush.msra.mxu0 %v556
    %1009 = vmatmul.f32.gmra.mxu0 %v942
    %v1010 = vpop.f32.mrf.mxu0
    %v1011 = vadd.f32 %v927, %v1010
    %1012 = vmatmul.f32.gmra.mxu0 %v945
    %v1013 = vpop.f32.mrf.mxu0
    %v1014 = vadd.f32 %v927, %v1013
    %1015 = vdwg.mxu0
    %1016 = vmatpush.msra.mxu0 0.0
    %1017 = vmatpush.msra.mxu0 0.0
    %1018 = vmatpush.msra.mxu0 0.0
    %1019 = vmatpush.msra.mxu0 0.0
    %1020 = vmatpush.msra.mxu0 0.0
    %1021 = vmatpush.msra.mxu0 0.0
    %1022 = vmatpush.msra.mxu0 0.0
    %1023 = vmatpush.msra.mxu0 0.0
    %1024 = vmatpush.msra.mxu0 0.0
    %1025 = vmatpush.msra.mxu0 0.0
    %1026 = vmatpush.msra.mxu0 0.0
    %1027 = vmatpush.msra.mxu0 0.0
    %1028 = vmatpush.msra.mxu0 0.0
    %1029 = vmatpush.msra.mxu0 0.0
    %1030 = vmatpush.msra.mxu0 0.0
    %1031 = vmatpush.msra.mxu0 %v557
    %1032 = vmatmul.f32.gmra.mxu0 %v942
    %v1033 = vpop.f32.mrf.mxu0
    %v1034 = vadd.f32 %v928, %v1033
    %1035 = vmatmul.f32.gmra.mxu0 %v945
    %v1036 = vpop.f32.mrf.mxu0
    %v1037 = vadd.f32 %v928, %v1036
    %1038 = vdwg.mxu0
    %1039 = vmatpush.msra.mxu0 0.0
    %1040 = vmatpush.msra.mxu0 0.0
    %1041 = vmatpush.msra.mxu0 0.0
    %1042 = vmatpush.msra.mxu0 0.0
    %1043 = vmatpush.msra.mxu0 0.0
    %1044 = vmatpush.msra.mxu0 0.0
    %1045 = vmatpush.msra.mxu0 0.0
    %1046 = vmatpush.msra.mxu0 0.0
    %1047 = vmatpush.msra.mxu0 0.0
    %1048 = vmatpush.msra.mxu0 0.0
    %1049 = vmatpush.msra.mxu0 0.0
    %1050 = vmatpush.msra.mxu0 0.0
    %1051 = vmatpush.msra.mxu0 0.0
    %1052 = vmatpush.msra.mxu0 0.0
    %1053 = vmatpush.msra.mxu0 0.0
    %1054 = vmatpush.msra.mxu0 %v558
    %1055 = vmatmul.f32.gmra.mxu0 %v942
    %v1056 = vpop.f32.mrf.mxu0
    %v1057 = vadd.f32 %v929, %v1056
    %1058 = vmatmul.f32.gmra.mxu0 %v945
    %v1059 = vpop.f32.mrf.mxu0
    %v1060 = vadd.f32 %v929, %v1059
    %1061 = vdwg.mxu0
    %1062 = vmatpush.msra.mxu0 0.0
    %1063 = vmatpush.msra.mxu0 0.0
    %1064 = vmatpush.msra.mxu0 0.0
    %1065 = vmatpush.msra.mxu0 0.0
    %1066 = vmatpush.msra.mxu0 0.0
    %1067 = vmatpush.msra.mxu0 0.0
    %1068 = vmatpush.msra.mxu0 0.0
    %1069 = vmatpush.msra.mxu0 0.0
    %1070 = vmatpush.msra.mxu0 0.0
    %1071 = vmatpush.msra.mxu0 0.0
    %1072 = vmatpush.msra.mxu0 0.0
    %1073 = vmatpush.msra.mxu0 0.0
    %1074 = vmatpush.msra.mxu0 0.0
    %1075 = vmatpush.msra.mxu0 0.0
    %1076 = vmatpush.msra.mxu0 0.0
    %1077 = vmatpush.msra.mxu0 %v559
    %1078 = vmatmul.f32.gmra.mxu0 %v942
    %v1079 = vpop.f32.mrf.mxu0
    %v1080 = vadd.f32 %v930, %v1079
    %1081 = vmatmul.f32.gmra.mxu0 %v945
    %v1082 = vpop.f32.mrf.mxu0
    %v1083 = vadd.f32 %v930, %v1082
    %1084 = vdwg.mxu0
    %1085 = vmatpush.msra.mxu0 0.0
    %1086 = vmatpush.msra.mxu0 0.0
    %1087 = vmatpush.msra.mxu0 0.0
    %1088 = vmatpush.msra.mxu0 0.0
    %1089 = vmatpush.msra.mxu0 0.0
    %1090 = vmatpush.msra.mxu0 0.0
    %1091 = vmatpush.msra.mxu0 0.0
    %1092 = vmatpush.msra.mxu0 0.0
    %1093 = vmatpush.msra.mxu0 0.0
    %1094 = vmatpush.msra.mxu0 0.0
    %1095 = vmatpush.msra.mxu0 0.0
    %1096 = vmatpush.msra.mxu0 0.0
    %1097 = vmatpush.msra.mxu0 0.0
    %1098 = vmatpush.msra.mxu0 0.0
    %1099 = vmatpush.msra.mxu0 0.0
    %1100 = vmatpush.msra.mxu0 %v560
    %1101 = vmatmul.f32.gmra.mxu0 %v942
    %v1102 = vpop.f32.mrf.mxu0
    %v1103 = vadd.f32 %v931, %v1102
    %1104 = vmatmul.f32.gmra.mxu0 %v945
    %v1105 = vpop.f32.mrf.mxu0
    %v1106 = vadd.f32 %v931, %v1105
    %1107 = vdwg.mxu0
    %1108 = vmatpush.msra.mxu0 0.0
    %1109 = vmatpush.msra.mxu0 0.0
    %1110 = vmatpush.msra.mxu0 0.0
    %1111 = vmatpush.msra.mxu0 0.0
    %1112 = vmatpush.msra.mxu0 0.0
    %1113 = vmatpush.msra.mxu0 0.0
    %1114 = vmatpush.msra.mxu0 0.0
    %1115 = vmatpush.msra.mxu0 0.0
    %1116 = vmatpush.msra.mxu0 0.0
    %1117 = vmatpush.msra.mxu0 0.0
    %1118 = vmatpush.msra.mxu0 0.0
    %1119 = vmatpush.msra.mxu0 0.0
    %1120 = vmatpush.msra.mxu0 0.0
    %1121 = vmatpush.msra.mxu0 0.0
    %1122 = vmatpush.msra.mxu0 0.0
    %1123 = vmatpush.msra.mxu0 %v561
    %1124 = vmatmul.f32.gmra.mxu0 %v942
    %v1125 = vpop.f32.mrf.mxu0
    %v1126 = vadd.f32 %v932, %v1125
    %1127 = vmatmul.f32.gmra.mxu0 %v945
    %v1128 = vpop.f32.mrf.mxu0
    %v1129 = vadd.f32 %v932, %v1128
    %1130 = vdwg.mxu0
    %vm1131 = vcmask 31744
    %v1133 = vsel %vm1131, %v356, 0
    %vm1135 = vcmask 1043456
    %v1137 = vsel %vm1135, %v742, 0
    %1139 = vmatpush.msra.mxu0 0.0
    %1140 = vmatpush.msra.mxu0 0.0
    %1141 = vmatpush.msra.mxu0 0.0
    %1142 = vmatpush.msra.mxu0 0.0
    %1143 = vmatpush.msra.mxu0 0.0
    %1144 = vmatpush.msra.mxu0 0.0
    %1145 = vmatpush.msra.mxu0 0.0
    %1146 = vmatpush.msra.mxu0 0.0
    %1147 = vmatpush.msra.mxu0 0.0
    %1148 = vmatpush.msra.mxu0 0.0
    %1149 = vmatpush.msra.mxu0 0.0
    %1150 = vmatpush.msra.mxu0 0.0
    %1151 = vmatpush.msra.mxu0 0.0
    %1152 = vmatpush.msra.mxu0 0.0
    %1153 = vmatpush.msra.mxu0 0.0
    %1154 = vmatpush.msra.mxu0 %v1137
    %1155 = vmatmul.f32.gmra.mxu0 %v1133
    %v1156 = vpop.f32.mrf.mxu0
    %v1157 = vadd.f32 0.0, %v1156
    %1158 = vdwg.mxu0
    %v1160 = vsel %vm664, %v1157, 0
    %1162 = vmatpush.msra.mxu0 0.0
    %1163 = vmatpush.msra.mxu0 0.0
    %1164 = vmatpush.msra.mxu0 0.0
    %1165 = vmatpush.msra.mxu0 0.0
    %1166 = vmatpush.msra.mxu0 0.0
    %1167 = vmatpush.msra.mxu0 0.0
    %1168 = vmatpush.msra.mxu0 0.0
    %1169 = vmatpush.msra.mxu0 0.0
    %1170 = vmatpush.msra.mxu0 0.0
    %1171 = vmatpush.msra.mxu0 0.0
    %1172 = vmatpush.msra.mxu0 0.0
    %1173 = vmatpush.msra.mxu0 0.0
    %1174 = vmatpush.msra.mxu0 %v387
    %1175 = vmatpush.msra.mxu0 %v379
    %1176 = vmatpush.msra.mxu0 %v371
    %1177 = vmatpush.msra.mxu0 %v363
    %1178 = vmatmul.f32.gmra.mxu0 %v1160
    %v1179 = vpop.f32.mrf.mxu0
    %v1180 = vadd.f32 0.0, %v1179
    %1181 = vdwg.mxu0
    %1182 = vmatpush.msra.mxu0 0.0
    %1183 = vmatpush.msra.mxu0 0.0
    %1184 = vmatpush.msra.mxu0 0.0
    %1185 = vmatpush.msra.mxu0 0.0
    %1186 = vmatpush.msra.mxu0 0.0
    %1187 = vmatpush.msra.mxu0 0.0
    %1188 = vmatpush.msra.mxu0 0.0
    %1189 = vmatpush.msra.mxu0 0.0
    %1190 = vmatpush.msra.mxu0 0.0
    %1191 = vmatpush.msra.mxu0 0.0
    %1192 = vmatpush.msra.mxu0 0.0
    %1193 = vmatpush.msra.mxu0 0.0
    %1194 = vmatpush.msra.mxu0 %v388
    %1195 = vmatpush.msra.mxu0 %v380
    %1196 = vmatpush.msra.mxu0 %v372
    %1197 = vmatpush.msra.mxu0 %v364
    %1198 = vmatmul.f32.gmra.mxu0 %v1160
    %v1199 = vpop.f32.mrf.mxu0
    %v1200 = vadd.f32 0.0, %v1199
    %1201 = vdwg.mxu0
    %1202 = vmatpush.msra.mxu0 0.0
    %1203 = vmatpush.msra.mxu0 0.0
    %1204 = vmatpush.msra.mxu0 0.0
    %1205 = vmatpush.msra.mxu0 0.0
    %1206 = vmatpush.msra.mxu0 0.0
    %1207 = vmatpush.msra.mxu0 0.0
    %1208 = vmatpush.msra.mxu0 0.0
    %1209 = vmatpush.msra.mxu0 0.0
    %1210 = vmatpush.msra.mxu0 0.0
    %1211 = vmatpush.msra.mxu0 0.0
    %1212 = vmatpush.msra.mxu0 0.0
    %1213 = vmatpush.msra.mxu0 0.0
    %1214 = vmatpush.msra.mxu0 %v389
    %1215 = vmatpush.msra.mxu0 %v381
    %1216 = vmatpush.msra.mxu0 %v373
    %1217 = vmatpush.msra.mxu0 %v365
    %1218 = vmatmul.f32.gmra.mxu0 %v1160
    %v1219 = vpop.f32.mrf.mxu0
    %v1220 = vadd.f32 0.0, %v1219
    %1221 = vdwg.mxu0
    %1222 = vmatpush.msra.mxu0 0.0
    %1223 = vmatpush.msra.mxu0 0.0
    %1224 = vmatpush.msra.mxu0 0.0
    %1225 = vmatpush.msra.mxu0 0.0
    %1226 = vmatpush.msra.mxu0 0.0
    %1227 = vmatpush.msra.mxu0 0.0
    %1228 = vmatpush.msra.mxu0 0.0
    %1229 = vmatpush.msra.mxu0 0.0
    %1230 = vmatpush.msra.mxu0 0.0
    %1231 = vmatpush.msra.mxu0 0.0
    %1232 = vmatpush.msra.mxu0 0.0
    %1233 = vmatpush.msra.mxu0 0.0
    %1234 = vmatpush.msra.mxu0 %v390
    %1235 = vmatpush.msra.mxu0 %v382
    %1236 = vmatpush.msra.mxu0 %v374
    %1237 = vmatpush.msra.mxu0 %v366
    %1238 = vmatmul.f32.gmra.mxu0 %v1160
    %v1239 = vpop.f32.mrf.mxu0
    %v1240 = vadd.f32 0.0, %v1239
    %1241 = vdwg.mxu0
    %1242 = vmatpush.msra.mxu0 0.0
    %1243 = vmatpush.msra.mxu0 0.0
    %1244 = vmatpush.msra.mxu0 0.0
    %1245 = vmatpush.msra.mxu0 0.0
    %1246 = vmatpush.msra.mxu0 0.0
    %1247 = vmatpush.msra.mxu0 0.0
    %1248 = vmatpush.msra.mxu0 0.0
    %1249 = vmatpush.msra.mxu0 0.0
    %1250 = vmatpush.msra.mxu0 0.0
    %1251 = vmatpush.msra.mxu0 0.0
    %1252 = vmatpush.msra.mxu0 0.0
    %1253 = vmatpush.msra.mxu0 0.0
    %1254 = vmatpush.msra.mxu0 %v391
    %1255 = vmatpush.msra.mxu0 %v383
    %1256 = vmatpush.msra.mxu0 %v375
    %1257 = vmatpush.msra.mxu0 %v367
    %1258 = vmatmul.f32.gmra.mxu0 %v1160
    %v1259 = vpop.f32.mrf.mxu0
    %v1260 = vadd.f32 0.0, %v1259
    %1261 = vdwg.mxu0
    %1262 = vmatpush.msra.mxu0 0.0
    %1263 = vmatpush.msra.mxu0 0.0
    %1264 = vmatpush.msra.mxu0 0.0
    %1265 = vmatpush.msra.mxu0 0.0
    %1266 = vmatpush.msra.mxu0 0.0
    %1267 = vmatpush.msra.mxu0 0.0
    %1268 = vmatpush.msra.mxu0 0.0
    %1269 = vmatpush.msra.mxu0 0.0
    %1270 = vmatpush.msra.mxu0 0.0
    %1271 = vmatpush.msra.mxu0 0.0
    %1272 = vmatpush.msra.mxu0 0.0
    %1273 = vmatpush.msra.mxu0 0.0
    %1274 = vmatpush.msra.mxu0 %v392
    %1275 = vmatpush.msra.mxu0 %v384
    %1276 = vmatpush.msra.mxu0 %v376
    %1277 = vmatpush.msra.mxu0 %v368
    %1278 = vmatmul.f32.gmra.mxu0 %v1160
    %v1279 = vpop.f32.mrf.mxu0
    %v1280 = vadd.f32 0.0, %v1279
    %1281 = vdwg.mxu0
    %1282 = vmatpush.msra.mxu0 0.0
    %1283 = vmatpush.msra.mxu0 0.0
    %1284 = vmatpush.msra.mxu0 0.0
    %1285 = vmatpush.msra.mxu0 0.0
    %1286 = vmatpush.msra.mxu0 0.0
    %1287 = vmatpush.msra.mxu0 0.0
    %1288 = vmatpush.msra.mxu0 0.0
    %1289 = vmatpush.msra.mxu0 0.0
    %1290 = vmatpush.msra.mxu0 0.0
    %1291 = vmatpush.msra.mxu0 0.0
    %1292 = vmatpush.msra.mxu0 0.0
    %1293 = vmatpush.msra.mxu0 0.0
    %1294 = vmatpush.msra.mxu0 %v393
    %1295 = vmatpush.msra.mxu0 %v385
    %1296 = vmatpush.msra.mxu0 %v377
    %1297 = vmatpush.msra.mxu0 %v369
    %1298 = vmatmul.f32.gmra.mxu0 %v1160
    %v1299 = vpop.f32.mrf.mxu0
    %v1300 = vadd.f32 0.0, %v1299
    %1301 = vdwg.mxu0
    %1302 = vmatpush.msra.mxu0 0.0
    %1303 = vmatpush.msra.mxu0 0.0
    %1304 = vmatpush.msra.mxu0 0.0
    %1305 = vmatpush.msra.mxu0 0.0
    %1306 = vmatpush.msra.mxu0 0.0
    %1307 = vmatpush.msra.mxu0 0.0
    %1308 = vmatpush.msra.mxu0 0.0
    %1309 = vmatpush.msra.mxu0 0.0
    %1310 = vmatpush.msra.mxu0 0.0
    %1311 = vmatpush.msra.mxu0 0.0
    %1312 = vmatpush.msra.mxu0 0.0
    %1313 = vmatpush.msra.mxu0 0.0
    %1314 = vmatpush.msra.mxu0 %v394
    %1315 = vmatpush.msra.mxu0 %v386
    %1316 = vmatpush.msra.mxu0 %v378
    %1317 = vmatpush.msra.mxu0 %v370
    %1318 = vmatmul.f32.gmra.mxu0 %v1160
    %v1319 = vpop.f32.mrf.mxu0
    %v1320 = vadd.f32 0.0, %v1319
    %1321 = vdwg.mxu0
    %v1322 = vmul.f32 %v1180, %v782
    %v1323 = vmul.f32 %v1200, %v802
    %v1324 = vmul.f32 %v1220, %v822
    %v1325 = vmul.f32 %v1240, %v842
    %v1326 = vmul.f32 %v1260, %v862
    %v1327 = vmul.f32 %v1280, %v882
    %v1328 = vmul.f32 %v1300, %v902
    %v1329 = vmul.f32 %v1320, %v922
    %1330 = vmatpush.msra.mxu0 %v410
    %1331 = vmatpush.msra.mxu0 %v409
    %1332 = vmatpush.msra.mxu0 %v408
    %1333 = vmatpush.msra.mxu0 %v407
    %1334 = vmatpush.msra.mxu0 %v406
    %1335 = vmatpush.msra.mxu0 %v405
    %1336 = vmatpush.msra.mxu0 %v404
    %1337 = vmatpush.msra.mxu0 %v403
    %1338 = vmatpush.msra.mxu0 %v402
    %1339 = vmatpush.msra.mxu0 %v401
    %1340 = vmatpush.msra.mxu0 %v400
    %1341 = vmatpush.msra.mxu0 %v399
    %1342 = vmatpush.msra.mxu0 %v398
    %1343 = vmatpush.msra.mxu0 %v397
    %1344 = vmatpush.msra.mxu0 %v396
    %1345 = vmatpush.msra.mxu0 %v395
    %1346 = vmatmul.f32.gmra.mxu0 %v1322
    %v1347 = vpop.f32.mrf.mxu0
    %v1348 = vadd.f32 0.0, %v1347
    %1349 = vdwg.mxu0
    %1350 = vmatpush.msra.mxu0 %v426
    %1351 = vmatpush.msra.mxu0 %v425
    %1352 = vmatpush.msra.mxu0 %v424
    %1353 = vmatpush.msra.mxu0 %v423
    %1354 = vmatpush.msra.mxu0 %v422
    %1355 = vmatpush.msra.mxu0 %v421
    %1356 = vmatpush.msra.mxu0 %v420
    %1357 = vmatpush.msra.mxu0 %v419
    %1358 = vmatpush.msra.mxu0 %v418
    %1359 = vmatpush.msra.mxu0 %v417
    %1360 = vmatpush.msra.mxu0 %v416
    %1361 = vmatpush.msra.mxu0 %v415
    %1362 = vmatpush.msra.mxu0 %v414
    %1363 = vmatpush.msra.mxu0 %v413
    %1364 = vmatpush.msra.mxu0 %v412
    %1365 = vmatpush.msra.mxu0 %v411
    %1366 = vmatmul.f32.gmra.mxu0 %v1323
    %v1367 = vpop.f32.mrf.mxu0
    %v1368 = vadd.f32 %v1348, %v1367
    %1369 = vdwg.mxu0
    %1370 = vmatpush.msra.mxu0 %v442
    %1371 = vmatpush.msra.mxu0 %v441
    %1372 = vmatpush.msra.mxu0 %v440
    %1373 = vmatpush.msra.mxu0 %v439
    %1374 = vmatpush.msra.mxu0 %v438
    %1375 = vmatpush.msra.mxu0 %v437
    %1376 = vmatpush.msra.mxu0 %v436
    %1377 = vmatpush.msra.mxu0 %v435
    %1378 = vmatpush.msra.mxu0 %v434
    %1379 = vmatpush.msra.mxu0 %v433
    %1380 = vmatpush.msra.mxu0 %v432
    %1381 = vmatpush.msra.mxu0 %v431
    %1382 = vmatpush.msra.mxu0 %v430
    %1383 = vmatpush.msra.mxu0 %v429
    %1384 = vmatpush.msra.mxu0 %v428
    %1385 = vmatpush.msra.mxu0 %v427
    %1386 = vmatmul.f32.gmra.mxu0 %v1324
    %v1387 = vpop.f32.mrf.mxu0
    %v1388 = vadd.f32 %v1368, %v1387
    %1389 = vdwg.mxu0
    %1390 = vmatpush.msra.mxu0 %v458
    %1391 = vmatpush.msra.mxu0 %v457
    %1392 = vmatpush.msra.mxu0 %v456
    %1393 = vmatpush.msra.mxu0 %v455
    %1394 = vmatpush.msra.mxu0 %v454
    %1395 = vmatpush.msra.mxu0 %v453
    %1396 = vmatpush.msra.mxu0 %v452
    %1397 = vmatpush.msra.mxu0 %v451
    %1398 = vmatpush.msra.mxu0 %v450
    %1399 = vmatpush.msra.mxu0 %v449
    %1400 = vmatpush.msra.mxu0 %v448
    %1401 = vmatpush.msra.mxu0 %v447
    %1402 = vmatpush.msra.mxu0 %v446
    %1403 = vmatpush.msra.mxu0 %v445
    %1404 = vmatpush.msra.mxu0 %v444
    %1405 = vmatpush.msra.mxu0 %v443
    %1406 = vmatmul.f32.gmra.mxu0 %v1325
    %v1407 = vpop.f32.mrf.mxu0
    %v1408 = vadd.f32 %v1388, %v1407
    %1409 = vdwg.mxu0
    %1410 = vmatpush.msra.mxu0 %v474
    %1411 = vmatpush.msra.mxu0 %v473
    %1412 = vmatpush.msra.mxu0 %v472
    %1413 = vmatpush.msra.mxu0 %v471
    %1414 = vmatpush.msra.mxu0 %v470
    %1415 = vmatpush.msra.mxu0 %v469
    %1416 = vmatpush.msra.mxu0 %v468
    %1417 = vmatpush.msra.mxu0 %v467
    %1418 = vmatpush.msra.mxu0 %v466
    %1419 = vmatpush.msra.mxu0 %v465
    %1420 = vmatpush.msra.mxu0 %v464
    %1421 = vmatpush.msra.mxu0 %v463
    %1422 = vmatpush.msra.mxu0 %v462
    %1423 = vmatpush.msra.mxu0 %v461
    %1424 = vmatpush.msra.mxu0 %v460
    %1425 = vmatpush.msra.mxu0 %v459
    %1426 = vmatmul.f32.gmra.mxu0 %v1326
    %v1427 = vpop.f32.mrf.mxu0
    %v1428 = vadd.f32 %v1408, %v1427
    %1429 = vdwg.mxu0
    %1430 = vmatpush.msra.mxu0 %v490
    %1431 = vmatpush.msra.mxu0 %v489
    %1432 = vmatpush.msra.mxu0 %v488
    %1433 = vmatpush.msra.mxu0 %v487
    %1434 = vmatpush.msra.mxu0 %v486
    %1435 = vmatpush.msra.mxu0 %v485
    %1436 = vmatpush.msra.mxu0 %v484
    %1437 = vmatpush.msra.mxu0 %v483
    %1438 = vmatpush.msra.mxu0 %v482
    %1439 = vmatpush.msra.mxu0 %v481
    %1440 = vmatpush.msra.mxu0 %v480
    %1441 = vmatpush.msra.mxu0 %v479
    %1442 = vmatpush.msra.mxu0 %v478
    %1443 = vmatpush.msra.mxu0 %v477
    %1444 = vmatpush.msra.mxu0 %v476
    %1445 = vmatpush.msra.mxu0 %v475
    %1446 = vmatmul.f32.gmra.mxu0 %v1327
    %v1447 = vpop.f32.mrf.mxu0
    %v1448 = vadd.f32 %v1428, %v1447
    %1449 = vdwg.mxu0
    %1450 = vmatpush.msra.mxu0 %v506
    %1451 = vmatpush.msra.mxu0 %v505
    %1452 = vmatpush.msra.mxu0 %v504
    %1453 = vmatpush.msra.mxu0 %v503
    %1454 = vmatpush.msra.mxu0 %v502
    %1455 = vmatpush.msra.mxu0 %v501
    %1456 = vmatpush.msra.mxu0 %v500
    %1457 = vmatpush.msra.mxu0 %v499
    %1458 = vmatpush.msra.mxu0 %v498
    %1459 = vmatpush.msra.mxu0 %v497
    %1460 = vmatpush.msra.mxu0 %v496
    %1461 = vmatpush.msra.mxu0 %v495
    %1462 = vmatpush.msra.mxu0 %v494
    %1463 = vmatpush.msra.mxu0 %v493
    %1464 = vmatpush.msra.mxu0 %v492
    %1465 = vmatpush.msra.mxu0 %v491
    %1466 = vmatmul.f32.gmra.mxu0 %v1328
    %v1467 = vpop.f32.mrf.mxu0
    %v1468 = vadd.f32 %v1448, %v1467
    %1469 = vdwg.mxu0
    %1470 = vmatpush.msra.mxu0 %v522
    %1471 = vmatpush.msra.mxu0 %v521
    %1472 = vmatpush.msra.mxu0 %v520
    %1473 = vmatpush.msra.mxu0 %v519
    %1474 = vmatpush.msra.mxu0 %v518
    %1475 = vmatpush.msra.mxu0 %v517
    %1476 = vmatpush.msra.mxu0 %v516
    %1477 = vmatpush.msra.mxu0 %v515
    %1478 = vmatpush.msra.mxu0 %v514
    %1479 = vmatpush.msra.mxu0 %v513
    %1480 = vmatpush.msra.mxu0 %v512
    %1481 = vmatpush.msra.mxu0 %v511
    %1482 = vmatpush.msra.mxu0 %v510
    %1483 = vmatpush.msra.mxu0 %v509
    %1484 = vmatpush.msra.mxu0 %v508
    %1485 = vmatpush.msra.mxu0 %v507
    %1486 = vmatmul.f32.gmra.mxu0 %v1329
    %v1487 = vpop.f32.mrf.mxu0
    %v1488 = vadd.f32 %v1468, %v1487
    %1489 = vdwg.mxu0
    %v1491 = vperm.slane %v553, 0
    %vm1493 = vcmask 48128
    %v1495 = vsel %vm1493, %v357, 0
    %vm1497 = vcmask 1045504
    %v1499 = vsel %vm1497, %v1488, 0
    %1501 = vmatpush.msra.mxu0 0.0
    %1502 = vmatpush.msra.mxu0 0.0
    %1503 = vmatpush.msra.mxu0 0.0
    %1504 = vmatpush.msra.mxu0 0.0
    %1505 = vmatpush.msra.mxu0 0.0
    %1506 = vmatpush.msra.mxu0 0.0
    %1507 = vmatpush.msra.mxu0 0.0
    %1508 = vmatpush.msra.mxu0 0.0
    %1509 = vmatpush.msra.mxu0 0.0
    %1510 = vmatpush.msra.mxu0 0.0
    %1511 = vmatpush.msra.mxu0 0.0
    %1512 = vmatpush.msra.mxu0 0.0
    %1513 = vmatpush.msra.mxu0 0.0
    %1514 = vmatpush.msra.mxu0 0.0
    %1515 = vmatpush.msra.mxu0 0.0
    %1516 = vmatpush.msra.mxu0 %v1499
    %1517 = vmatmul.f32.gmra.mxu0 %v1495
    %v1518 = vpop.f32.mrf.mxu0
    %v1519 = vadd.f32 %v1491, %v1518
    %1520 = vdwg.mxu0
    %v1522 = vsel %vm760, %v353, 0
    %v1525 = vsel %vm760, %v354, 0
    %1527 = vmatpush.msra.mxu0 0.0
    %1528 = vmatpush.msra.mxu0 0.0
    %1529 = vmatpush.msra.mxu0 0.0
    %1530 = vmatpush.msra.mxu0 0.0
    %1531 = vmatpush.msra.mxu0 0.0
    %1532 = vmatpush.msra.mxu0 0.0
    %1533 = vmatpush.msra.mxu0 0.0
    %1534 = vmatpush.msra.mxu0 0.0
    %1535 = vmatpush.msra.mxu0 0.0
    %1536 = vmatpush.msra.mxu0 0.0
    %1537 = vmatpush.msra.mxu0 0.0
    %1538 = vmatpush.msra.mxu0 0.0
    %1539 = vmatpush.msra.mxu0 0.0
    %1540 = vmatpush.msra.mxu0 0.0
    %1541 = vmatpush.msra.mxu0 0.0
    %1542 = vmatpush.msra.mxu0 %v688
    %1543 = vmatmul.f32.gmra.mxu0 %v1522
    %v1544 = vpop.f32.mrf.mxu0
    %v1545 = vadd.f32 0.0, %v1544
    %1546 = vmatmul.f32.gmra.mxu0 %v1525
    %v1547 = vpop.f32.mrf.mxu0
    %v1548 = vadd.f32 0.0, %v1547
    %1549 = vdwg.mxu0
    %v1551 = vsel %vm664, %v1545, 0
    %v1554 = vsel %vm664, %v1548, 0
    %1556 = vmatpush.msra.mxu0 0.0
    %1557 = vmatpush.msra.mxu0 0.0
    %1558 = vmatpush.msra.mxu0 0.0
    %1559 = vmatpush.msra.mxu0 0.0
    %1560 = vmatpush.msra.mxu0 0.0
    %1561 = vmatpush.msra.mxu0 0.0
    %1562 = vmatpush.msra.mxu0 0.0
    %1563 = vmatpush.msra.mxu0 0.0
    %1564 = vmatpush.msra.mxu0 0.0
    %1565 = vmatpush.msra.mxu0 0.0
    %1566 = vmatpush.msra.mxu0 0.0
    %1567 = vmatpush.msra.mxu0 0.0
    %1568 = vmatpush.msra.mxu0 %v387
    %1569 = vmatpush.msra.mxu0 %v379
    %1570 = vmatpush.msra.mxu0 %v371
    %1571 = vmatpush.msra.mxu0 %v363
    %1572 = vmatmul.f32.gmra.mxu0 %v1551
    %v1573 = vpop.f32.mrf.mxu0
    %v1574 = vadd.f32 0.0, %v1573
    %1575 = vmatmul.f32.gmra.mxu0 %v1554
    %v1576 = vpop.f32.mrf.mxu0
    %v1577 = vadd.f32 0.0, %v1576
    %1578 = vdwg.mxu0
    %1579 = vmatpush.msra.mxu0 0.0
    %1580 = vmatpush.msra.mxu0 0.0
    %1581 = vmatpush.msra.mxu0 0.0
    %1582 = vmatpush.msra.mxu0 0.0
    %1583 = vmatpush.msra.mxu0 0.0
    %1584 = vmatpush.msra.mxu0 0.0
    %1585 = vmatpush.msra.mxu0 0.0
    %1586 = vmatpush.msra.mxu0 0.0
    %1587 = vmatpush.msra.mxu0 0.0
    %1588 = vmatpush.msra.mxu0 0.0
    %1589 = vmatpush.msra.mxu0 0.0
    %1590 = vmatpush.msra.mxu0 0.0
    %1591 = vmatpush.msra.mxu0 %v388
    %1592 = vmatpush.msra.mxu0 %v380
    %1593 = vmatpush.msra.mxu0 %v372
    %1594 = vmatpush.msra.mxu0 %v364
    %1595 = vmatmul.f32.gmra.mxu0 %v1551
    %v1596 = vpop.f32.mrf.mxu0
    %v1597 = vadd.f32 0.0, %v1596
    %1598 = vmatmul.f32.gmra.mxu0 %v1554
    %v1599 = vpop.f32.mrf.mxu0
    %v1600 = vadd.f32 0.0, %v1599
    %1601 = vdwg.mxu0
    %1602 = vmatpush.msra.mxu0 0.0
    %1603 = vmatpush.msra.mxu0 0.0
    %1604 = vmatpush.msra.mxu0 0.0
    %1605 = vmatpush.msra.mxu0 0.0
    %1606 = vmatpush.msra.mxu0 0.0
    %1607 = vmatpush.msra.mxu0 0.0
    %1608 = vmatpush.msra.mxu0 0.0
    %1609 = vmatpush.msra.mxu0 0.0
    %1610 = vmatpush.msra.mxu0 0.0
    %1611 = vmatpush.msra.mxu0 0.0
    %1612 = vmatpush.msra.mxu0 0.0
    %1613 = vmatpush.msra.mxu0 0.0
    %1614 = vmatpush.msra.mxu0 %v389
    %1615 = vmatpush.msra.mxu0 %v381
    %1616 = vmatpush.msra.mxu0 %v373
    %1617 = vmatpush.msra.mxu0 %v365
    %1618 = vmatmul.f32.gmra.mxu0 %v1551
    %v1619 = vpop.f32.mrf.mxu0
    %v1620 = vadd.f32 0.0, %v1619
    %1621 = vmatmul.f32.gmra.mxu0 %v1554
    %v1622 = vpop.f32.mrf.mxu0
    %v1623 = vadd.f32 0.0, %v1622
    %1624 = vdwg.mxu0
    %1625 = vmatpush.msra.mxu0 0.0
    %1626 = vmatpush.msra.mxu0 0.0
    %1627 = vmatpush.msra.mxu0 0.0
    %1628 = vmatpush.msra.mxu0 0.0
    %1629 = vmatpush.msra.mxu0 0.0
    %1630 = vmatpush.msra.mxu0 0.0
    %1631 = vmatpush.msra.mxu0 0.0
    %1632 = vmatpush.msra.mxu0 0.0
    %1633 = vmatpush.msra.mxu0 0.0
    %1634 = vmatpush.msra.mxu0 0.0
    %1635 = vmatpush.msra.mxu0 0.0
    %1636 = vmatpush.msra.mxu0 0.0
    %1637 = vmatpush.msra.mxu0 %v390
    %1638 = vmatpush.msra.mxu0 %v382
    %1639 = vmatpush.msra.mxu0 %v374
    %1640 = vmatpush.msra.mxu0 %v366
    %1641 = vmatmul.f32.gmra.mxu0 %v1551
    %v1642 = vpop.f32.mrf.mxu0
    %v1643 = vadd.f32 0.0, %v1642
    %1644 = vmatmul.f32.gmra.mxu0 %v1554
    %v1645 = vpop.f32.mrf.mxu0
    %v1646 = vadd.f32 0.0, %v1645
    %1647 = vdwg.mxu0
    %1648 = vmatpush.msra.mxu0 0.0
    %1649 = vmatpush.msra.mxu0 0.0
    %1650 = vmatpush.msra.mxu0 0.0
    %1651 = vmatpush.msra.mxu0 0.0
    %1652 = vmatpush.msra.mxu0 0.0
    %1653 = vmatpush.msra.mxu0 0.0
    %1654 = vmatpush.msra.mxu0 0.0
    %1655 = vmatpush.msra.mxu0 0.0
    %1656 = vmatpush.msra.mxu0 0.0
    %1657 = vmatpush.msra.mxu0 0.0
    %1658 = vmatpush.msra.mxu0 0.0
    %1659 = vmatpush.msra.mxu0 0.0
    %1660 = vmatpush.msra.mxu0 %v391
    %1661 = vmatpush.msra.mxu0 %v383
    %1662 = vmatpush.msra.mxu0 %v375
    %1663 = vmatpush.msra.mxu0 %v367
    %1664 = vmatmul.f32.gmra.mxu0 %v1551
    %v1665 = vpop.f32.mrf.mxu0
    %v1666 = vadd.f32 0.0, %v1665
    %1667 = vmatmul.f32.gmra.mxu0 %v1554
    %v1668 = vpop.f32.mrf.mxu0
    %v1669 = vadd.f32 0.0, %v1668
    %1670 = vdwg.mxu0
    %1671 = vmatpush.msra.mxu0 0.0
    %1672 = vmatpush.msra.mxu0 0.0
    %1673 = vmatpush.msra.mxu0 0.0
    %1674 = vmatpush.msra.mxu0 0.0
    %1675 = vmatpush.msra.mxu0 0.0
    %1676 = vmatpush.msra.mxu0 0.0
    %1677 = vmatpush.msra.mxu0 0.0
    %1678 = vmatpush.msra.mxu0 0.0
    %1679 = vmatpush.msra.mxu0 0.0
    %1680 = vmatpush.msra.mxu0 0.0
    %1681 = vmatpush.msra.mxu0 0.0
    %1682 = vmatpush.msra.mxu0 0.0
    %1683 = vmatpush.msra.mxu0 %v392
    %1684 = vmatpush.msra.mxu0 %v384
    %1685 = vmatpush.msra.mxu0 %v376
    %1686 = vmatpush.msra.mxu0 %v368
    %1687 = vmatmul.f32.gmra.mxu0 %v1551
    %v1688 = vpop.f32.mrf.mxu0
    %v1689 = vadd.f32 0.0, %v1688
    %1690 = vmatmul.f32.gmra.mxu0 %v1554
    %v1691 = vpop.f32.mrf.mxu0
    %v1692 = vadd.f32 0.0, %v1691
    %1693 = vdwg.mxu0
    %1694 = vmatpush.msra.mxu0 0.0
    %1695 = vmatpush.msra.mxu0 0.0
    %1696 = vmatpush.msra.mxu0 0.0
    %1697 = vmatpush.msra.mxu0 0.0
    %1698 = vmatpush.msra.mxu0 0.0
    %1699 = vmatpush.msra.mxu0 0.0
    %1700 = vmatpush.msra.mxu0 0.0
    %1701 = vmatpush.msra.mxu0 0.0
    %1702 = vmatpush.msra.mxu0 0.0
    %1703 = vmatpush.msra.mxu0 0.0
    %1704 = vmatpush.msra.mxu0 0.0
    %1705 = vmatpush.msra.mxu0 0.0
    %1706 = vmatpush.msra.mxu0 %v393
    %1707 = vmatpush.msra.mxu0 %v385
    %1708 = vmatpush.msra.mxu0 %v377
    %1709 = vmatpush.msra.mxu0 %v369
    %1710 = vmatmul.f32.gmra.mxu0 %v1551
    %v1711 = vpop.f32.mrf.mxu0
    %v1712 = vadd.f32 0.0, %v1711
    %1713 = vmatmul.f32.gmra.mxu0 %v1554
    %v1714 = vpop.f32.mrf.mxu0
    %v1715 = vadd.f32 0.0, %v1714
    %1716 = vdwg.mxu0
    %1717 = vmatpush.msra.mxu0 0.0
    %1718 = vmatpush.msra.mxu0 0.0
    %1719 = vmatpush.msra.mxu0 0.0
    %1720 = vmatpush.msra.mxu0 0.0
    %1721 = vmatpush.msra.mxu0 0.0
    %1722 = vmatpush.msra.mxu0 0.0
    %1723 = vmatpush.msra.mxu0 0.0
    %1724 = vmatpush.msra.mxu0 0.0
    %1725 = vmatpush.msra.mxu0 0.0
    %1726 = vmatpush.msra.mxu0 0.0
    %1727 = vmatpush.msra.mxu0 0.0
    %1728 = vmatpush.msra.mxu0 0.0
    %1729 = vmatpush.msra.mxu0 %v394
    %1730 = vmatpush.msra.mxu0 %v386
    %1731 = vmatpush.msra.mxu0 %v378
    %1732 = vmatpush.msra.mxu0 %v370
    %1733 = vmatmul.f32.gmra.mxu0 %v1551
    %v1734 = vpop.f32.mrf.mxu0
    %v1735 = vadd.f32 0.0, %v1734
    %1736 = vmatmul.f32.gmra.mxu0 %v1554
    %v1737 = vpop.f32.mrf.mxu0
    %v1738 = vadd.f32 0.0, %v1737
    %1739 = vdwg.mxu0
    %v1740 = vmul.f32 %v1574, %v965
    %v1741 = vmul.f32 %v1597, %v988
    %v1742 = vmul.f32 %v1620, %v1011
    %v1743 = vmul.f32 %v1643, %v1034
    %v1744 = vmul.f32 %v1666, %v1057
    %v1745 = vmul.f32 %v1689, %v1080
    %v1746 = vmul.f32 %v1712, %v1103
    %v1747 = vmul.f32 %v1735, %v1126
    %v1748 = vmul.f32 %v1577, %v968
    %v1749 = vmul.f32 %v1600, %v991
    %v1750 = vmul.f32 %v1623, %v1014
    %v1751 = vmul.f32 %v1646, %v1037
    %v1752 = vmul.f32 %v1669, %v1060
    %v1753 = vmul.f32 %v1692, %v1083
    %v1754 = vmul.f32 %v1715, %v1106
    %v1755 = vmul.f32 %v1738, %v1129
    %1756 = vmatpush.msra.mxu0 %v410
    %1757 = vmatpush.msra.mxu0 %v409
    %1758 = vmatpush.msra.mxu0 %v408
    %1759 = vmatpush.msra.mxu0 %v407
    %1760 = vmatpush.msra.mxu0 %v406
    %1761 = vmatpush.msra.mxu0 %v405
    %1762 = vmatpush.msra.mxu0 %v404
    %1763 = vmatpush.msra.mxu0 %v403
    %1764 = vmatpush.msra.mxu0 %v402
    %1765 = vmatpush.msra.mxu0 %v401
    %1766 = vmatpush.msra.mxu0 %v400
    %1767 = vmatpush.msra.mxu0 %v399
    %1768 = vmatpush.msra.mxu0 %v398
    %1769 = vmatpush.msra.mxu0 %v397
    %1770 = vmatpush.msra.mxu0 %v396
    %1771 = vmatpush.msra.mxu0 %v395
    %1772 = vmatmul.f32.gmra.mxu0 %v1740
    %v1773 = vpop.f32.mrf.mxu0
    %v1774 = vadd.f32 0.0, %v1773
    %1775 = vmatmul.f32.gmra.mxu0 %v1748
    %v1776 = vpop.f32.mrf.mxu0
    %v1777 = vadd.f32 0.0, %v1776
    %1778 = vdwg.mxu0
    %1779 = vmatpush.msra.mxu0 %v426
    %1780 = vmatpush.msra.mxu0 %v425
    %1781 = vmatpush.msra.mxu0 %v424
    %1782 = vmatpush.msra.mxu0 %v423
    %1783 = vmatpush.msra.mxu0 %v422
    %1784 = vmatpush.msra.mxu0 %v421
    %1785 = vmatpush.msra.mxu0 %v420
    %1786 = vmatpush.msra.mxu0 %v419
    %1787 = vmatpush.msra.mxu0 %v418
    %1788 = vmatpush.msra.mxu0 %v417
    %1789 = vmatpush.msra.mxu0 %v416
    %1790 = vmatpush.msra.mxu0 %v415
    %1791 = vmatpush.msra.mxu0 %v414
    %1792 = vmatpush.msra.mxu0 %v413
    %1793 = vmatpush.msra.mxu0 %v412
    %1794 = vmatpush.msra.mxu0 %v411
    %1795 = vmatmul.f32.gmra.mxu0 %v1741
    %v1796 = vpop.f32.mrf.mxu0
    %v1797 = vadd.f32 %v1774, %v1796
    %1798 = vmatmul.f32.gmra.mxu0 %v1749
    %v1799 = vpop.f32.mrf.mxu0
    %v1800 = vadd.f32 %v1777, %v1799
    %1801 = vdwg.mxu0
    %1802 = vmatpush.msra.mxu0 %v442
    %1803 = vmatpush.msra.mxu0 %v441
    %1804 = vmatpush.msra.mxu0 %v440
    %1805 = vmatpush.msra.mxu0 %v439
    %1806 = vmatpush.msra.mxu0 %v438
    %1807 = vmatpush.msra.mxu0 %v437
    %1808 = vmatpush.msra.mxu0 %v436
    %1809 = vmatpush.msra.mxu0 %v435
    %1810 = vmatpush.msra.mxu0 %v434
    %1811 = vmatpush.msra.mxu0 %v433
    %1812 = vmatpush.msra.mxu0 %v432
    %1813 = vmatpush.msra.mxu0 %v431
    %1814 = vmatpush.msra.mxu0 %v430
    %1815 = vmatpush.msra.mxu0 %v429
    %1816 = vmatpush.msra.mxu0 %v428
    %1817 = vmatpush.msra.mxu0 %v427
    %1818 = vmatmul.f32.gmra.mxu0 %v1742
    %v1819 = vpop.f32.mrf.mxu0
    %v1820 = vadd.f32 %v1797, %v1819
    %1821 = vmatmul.f32.gmra.mxu0 %v1750
    %v1822 = vpop.f32.mrf.mxu0
    %v1823 = vadd.f32 %v1800, %v1822
    %1824 = vdwg.mxu0
    %1825 = vmatpush.msra.mxu0 %v458
    %1826 = vmatpush.msra.mxu0 %v457
    %1827 = vmatpush.msra.mxu0 %v456
    %1828 = vmatpush.msra.mxu0 %v455
    %1829 = vmatpush.msra.mxu0 %v454
    %1830 = vmatpush.msra.mxu0 %v453
    %1831 = vmatpush.msra.mxu0 %v452
    %1832 = vmatpush.msra.mxu0 %v451
    %1833 = vmatpush.msra.mxu0 %v450
    %1834 = vmatpush.msra.mxu0 %v449
    %1835 = vmatpush.msra.mxu0 %v448
    %1836 = vmatpush.msra.mxu0 %v447
    %1837 = vmatpush.msra.mxu0 %v446
    %1838 = vmatpush.msra.mxu0 %v445
    %1839 = vmatpush.msra.mxu0 %v444
    %1840 = vmatpush.msra.mxu0 %v443
    %1841 = vmatmul.f32.gmra.mxu0 %v1743
    %v1842 = vpop.f32.mrf.mxu0
    %v1843 = vadd.f32 %v1820, %v1842
    %1844 = vmatmul.f32.gmra.mxu0 %v1751
    %v1845 = vpop.f32.mrf.mxu0
    %v1846 = vadd.f32 %v1823, %v1845
    %1847 = vdwg.mxu0
    %1848 = vmatpush.msra.mxu0 %v474
    %1849 = vmatpush.msra.mxu0 %v473
    %1850 = vmatpush.msra.mxu0 %v472
    %1851 = vmatpush.msra.mxu0 %v471
    %1852 = vmatpush.msra.mxu0 %v470
    %1853 = vmatpush.msra.mxu0 %v469
    %1854 = vmatpush.msra.mxu0 %v468
    %1855 = vmatpush.msra.mxu0 %v467
    %1856 = vmatpush.msra.mxu0 %v466
    %1857 = vmatpush.msra.mxu0 %v465
    %1858 = vmatpush.msra.mxu0 %v464
    %1859 = vmatpush.msra.mxu0 %v463
    %1860 = vmatpush.msra.mxu0 %v462
    %1861 = vmatpush.msra.mxu0 %v461
    %1862 = vmatpush.msra.mxu0 %v460
    %1863 = vmatpush.msra.mxu0 %v459
    %1864 = vmatmul.f32.gmra.mxu0 %v1744
    %v1865 = vpop.f32.mrf.mxu0
    %v1866 = vadd.f32 %v1843, %v1865
    %1867 = vmatmul.f32.gmra.mxu0 %v1752
    %v1868 = vpop.f32.mrf.mxu0
    %v1869 = vadd.f32 %v1846, %v1868
    %1870 = vdwg.mxu0
    %1871 = vmatpush.msra.mxu0 %v490
    %1872 = vmatpush.msra.mxu0 %v489
    %1873 = vmatpush.msra.mxu0 %v488
    %1874 = vmatpush.msra.mxu0 %v487
    %1875 = vmatpush.msra.mxu0 %v486
    %1876 = vmatpush.msra.mxu0 %v485
    %1877 = vmatpush.msra.mxu0 %v484
    %1878 = vmatpush.msra.mxu0 %v483
    %1879 = vmatpush.msra.mxu0 %v482
    %1880 = vmatpush.msra.mxu0 %v481
    %1881 = vmatpush.msra.mxu0 %v480
    %1882 = vmatpush.msra.mxu0 %v479
    %1883 = vmatpush.msra.mxu0 %v478
    %1884 = vmatpush.msra.mxu0 %v477
    %1885 = vmatpush.msra.mxu0 %v476
    %1886 = vmatpush.msra.mxu0 %v475
    %1887 = vmatmul.f32.gmra.mxu0 %v1745
    %v1888 = vpop.f32.mrf.mxu0
    %v1889 = vadd.f32 %v1866, %v1888
    %1890 = vmatmul.f32.gmra.mxu0 %v1753
    %v1891 = vpop.f32.mrf.mxu0
    %v1892 = vadd.f32 %v1869, %v1891
    %1893 = vdwg.mxu0
    %1894 = vmatpush.msra.mxu0 %v506
    %1895 = vmatpush.msra.mxu0 %v505
    %1896 = vmatpush.msra.mxu0 %v504
    %1897 = vmatpush.msra.mxu0 %v503
    %1898 = vmatpush.msra.mxu0 %v502
    %1899 = vmatpush.msra.mxu0 %v501
    %1900 = vmatpush.msra.mxu0 %v500
    %1901 = vmatpush.msra.mxu0 %v499
    %1902 = vmatpush.msra.mxu0 %v498
    %1903 = vmatpush.msra.mxu0 %v497
    %1904 = vmatpush.msra.mxu0 %v496
    %1905 = vmatpush.msra.mxu0 %v495
    %1906 = vmatpush.msra.mxu0 %v494
    %1907 = vmatpush.msra.mxu0 %v493
    %1908 = vmatpush.msra.mxu0 %v492
    %1909 = vmatpush.msra.mxu0 %v491
    %1910 = vmatmul.f32.gmra.mxu0 %v1746
    %v1911 = vpop.f32.mrf.mxu0
    %v1912 = vadd.f32 %v1889, %v1911
    %1913 = vmatmul.f32.gmra.mxu0 %v1754
    %v1914 = vpop.f32.mrf.mxu0
    %v1915 = vadd.f32 %v1892, %v1914
    %1916 = vdwg.mxu0
    %1917 = vmatpush.msra.mxu0 %v522
    %1918 = vmatpush.msra.mxu0 %v521
    %1919 = vmatpush.msra.mxu0 %v520
    %1920 = vmatpush.msra.mxu0 %v519
    %1921 = vmatpush.msra.mxu0 %v518
    %1922 = vmatpush.msra.mxu0 %v517
    %1923 = vmatpush.msra.mxu0 %v516
    %1924 = vmatpush.msra.mxu0 %v515
    %1925 = vmatpush.msra.mxu0 %v514
    %1926 = vmatpush.msra.mxu0 %v513
    %1927 = vmatpush.msra.mxu0 %v512
    %1928 = vmatpush.msra.mxu0 %v511
    %1929 = vmatpush.msra.mxu0 %v510
    %1930 = vmatpush.msra.mxu0 %v509
    %1931 = vmatpush.msra.mxu0 %v508
    %1932 = vmatpush.msra.mxu0 %v507
    %1933 = vmatmul.f32.gmra.mxu0 %v1747
    %v1934 = vpop.f32.mrf.mxu0
    %v1935 = vadd.f32 %v1912, %v1934
    %1936 = vmatmul.f32.gmra.mxu0 %v1755
    %v1937 = vpop.f32.mrf.mxu0
    %v1938 = vadd.f32 %v1915, %v1937
    %1939 = vdwg.mxu0
    %v1941 = vperm.slane %v563, 0
    %vm1943 = vcmask 97280
    %v1945 = vsel %vm1943, %v355, 0
    %v1948 = vsel %vm1135, %v1938, 0
    %1950 = vmatpush.msra.mxu0 0.0
    %1951 = vmatpush.msra.mxu0 0.0
    %1952 = vmatpush.msra.mxu0 0.0
    %1953 = vmatpush.msra.mxu0 0.0
    %1954 = vmatpush.msra.mxu0 0.0
    %1955 = vmatpush.msra.mxu0 0.0
    %1956 = vmatpush.msra.mxu0 0.0
    %1957 = vmatpush.msra.mxu0 0.0
    %1958 = vmatpush.msra.mxu0 0.0
    %1959 = vmatpush.msra.mxu0 0.0
    %1960 = vmatpush.msra.mxu0 0.0
    %1961 = vmatpush.msra.mxu0 0.0
    %1962 = vmatpush.msra.mxu0 0.0
    %1963 = vmatpush.msra.mxu0 0.0
    %1964 = vmatpush.msra.mxu0 %v1948
    %1965 = vmatpush.msra.mxu0 %v1935
    %1966 = vmatmul.f32.gmra.mxu0 %v1945
    %v1967 = vpop.f32.mrf.mxu0
    %v1968 = vadd.f32 %v1941, %v1967
    %1969 = vdwg.mxu0
    %v1971 = vsel %vm760, %v358, 0
    %1973 = vmatpush.msra.mxu0 0.0
    %1974 = vmatpush.msra.mxu0 0.0
    %1975 = vmatpush.msra.mxu0 0.0
    %1976 = vmatpush.msra.mxu0 0.0
    %1977 = vmatpush.msra.mxu0 0.0
    %1978 = vmatpush.msra.mxu0 0.0
    %1979 = vmatpush.msra.mxu0 0.0
    %1980 = vmatpush.msra.mxu0 0.0
    %1981 = vmatpush.msra.mxu0 0.0
    %1982 = vmatpush.msra.mxu0 0.0
    %1983 = vmatpush.msra.mxu0 0.0
    %1984 = vmatpush.msra.mxu0 0.0
    %1985 = vmatpush.msra.mxu0 0.0
    %1986 = vmatpush.msra.mxu0 0.0
    %1987 = vmatpush.msra.mxu0 0.0
    %1988 = vmatpush.msra.mxu0 %v1968
    %1989 = vmatmul.f32.gmra.mxu0 %v1971
    %v1990 = vpop.f32.mrf.mxu0
    %v1991 = vadd.f32 0.0, %v1990
    %1992 = vdwg.mxu0
    %v1993 = vsel %vm664, %v742, 0
    %1995 = vmatpush.msra.mxu0 0.0
    %1996 = vmatpush.msra.mxu0 0.0
    %1997 = vmatpush.msra.mxu0 0.0
    %1998 = vmatpush.msra.mxu0 0.0
    %1999 = vmatpush.msra.mxu0 0.0
    %2000 = vmatpush.msra.mxu0 0.0
    %2001 = vmatpush.msra.mxu0 0.0
    %2002 = vmatpush.msra.mxu0 0.0
    %2003 = vmatpush.msra.mxu0 0.0
    %2004 = vmatpush.msra.mxu0 0.0
    %2005 = vmatpush.msra.mxu0 0.0
    %2006 = vmatpush.msra.mxu0 0.0
    %2007 = vmatpush.msra.mxu0 %v567
    %2008 = vmatpush.msra.mxu0 %v566
    %2009 = vmatpush.msra.mxu0 %v565
    %2010 = vmatpush.msra.mxu0 %v564
    %2011 = vmatmul.f32.gmra.mxu0 %v1993
    %v2012 = vpop.f32.mrf.mxu0
    %v2013 = vadd.f32 0.0, %v2012
    %2014 = vdwg.mxu0
    %v2016 = vsel %vm664, %v1991, 0
    %2018 = vmatpush.msra.mxu0 0.0
    %2019 = vmatpush.msra.mxu0 0.0
    %2020 = vmatpush.msra.mxu0 0.0
    %2021 = vmatpush.msra.mxu0 0.0
    %2022 = vmatpush.msra.mxu0 0.0
    %2023 = vmatpush.msra.mxu0 0.0
    %2024 = vmatpush.msra.mxu0 0.0
    %2025 = vmatpush.msra.mxu0 0.0
    %2026 = vmatpush.msra.mxu0 0.0
    %2027 = vmatpush.msra.mxu0 0.0
    %2028 = vmatpush.msra.mxu0 0.0
    %2029 = vmatpush.msra.mxu0 0.0
    %2030 = vmatpush.msra.mxu0 %v571
    %2031 = vmatpush.msra.mxu0 %v570
    %2032 = vmatpush.msra.mxu0 %v569
    %2033 = vmatpush.msra.mxu0 %v568
    %2034 = vmatmul.f32.gmra.mxu0 %v2016
    %v2035 = vpop.f32.mrf.mxu0
    %v2036 = vadd.f32 0.0, %v2035
    %2037 = vdwg.mxu0
    %v2039 = vsel %vm664, %v1519, 0
    %2041 = vmatpush.msra.mxu0 0.0
    %2042 = vmatpush.msra.mxu0 0.0
    %2043 = vmatpush.msra.mxu0 0.0
    %2044 = vmatpush.msra.mxu0 0.0
    %2045 = vmatpush.msra.mxu0 0.0
    %2046 = vmatpush.msra.mxu0 0.0
    %2047 = vmatpush.msra.mxu0 0.0
    %2048 = vmatpush.msra.mxu0 0.0
    %2049 = vmatpush.msra.mxu0 0.0
    %2050 = vmatpush.msra.mxu0 0.0
    %2051 = vmatpush.msra.mxu0 0.0
    %2052 = vmatpush.msra.mxu0 0.0
    %2053 = vmatpush.msra.mxu0 %v571
    %2054 = vmatpush.msra.mxu0 %v570
    %2055 = vmatpush.msra.mxu0 %v569
    %2056 = vmatpush.msra.mxu0 %v568
    %2057 = vmatmul.f32.gmra.mxu0 %v2039
    %v2058 = vpop.f32.mrf.mxu0
    %v2059 = vadd.f32 0.0, %v2058
    %2060 = vdwg.mxu0
    %2061 = vmatpush.msra.mxu0 0.0
    %2062 = vmatpush.msra.mxu0 0.0
    %2063 = vmatpush.msra.mxu0 0.0
    %2064 = vmatpush.msra.mxu0 0.0
    %2065 = vmatpush.msra.mxu0 0.0
    %2066 = vmatpush.msra.mxu0 0.0
    %2067 = vmatpush.msra.mxu0 0.0
    %2068 = vmatpush.msra.mxu0 0.0
    %2069 = vmatpush.msra.mxu0 0.0
    %2070 = vmatpush.msra.mxu0 0.0
    %2071 = vmatpush.msra.mxu0 0.0
    %2072 = vmatpush.msra.mxu0 0.0
    %2073 = vmatpush.msra.mxu0 %v575
    %2074 = vmatpush.msra.mxu0 %v574
    %2075 = vmatpush.msra.mxu0 %v573
    %2076 = vmatpush.msra.mxu0 %v572
    %2077 = vmatmul.f32.gmra.mxu0 %v2016
    %v2078 = vpop.f32.mrf.mxu0
    %v2079 = vadd.f32 0.0, %v2078
    %2080 = vdwg.mxu0
    %2081 = vmatpush.msra.mxu0 0.0
    %2082 = vmatpush.msra.mxu0 0.0
    %2083 = vmatpush.msra.mxu0 0.0
    %2084 = vmatpush.msra.mxu0 0.0
    %2085 = vmatpush.msra.mxu0 0.0
    %2086 = vmatpush.msra.mxu0 0.0
    %2087 = vmatpush.msra.mxu0 0.0
    %2088 = vmatpush.msra.mxu0 0.0
    %2089 = vmatpush.msra.mxu0 0.0
    %2090 = vmatpush.msra.mxu0 0.0
    %2091 = vmatpush.msra.mxu0 0.0
    %2092 = vmatpush.msra.mxu0 0.0
    %2093 = vmatpush.msra.mxu0 %v575
    %2094 = vmatpush.msra.mxu0 %v574
    %2095 = vmatpush.msra.mxu0 %v573
    %2096 = vmatpush.msra.mxu0 %v572
    %2097 = vmatmul.f32.gmra.mxu0 %v2039
    %v2098 = vpop.f32.mrf.mxu0
    %v2099 = vadd.f32 0.0, %v2098
    %2100 = vdwg.mxu0
    %v2101 = vmul.f32 %v2013, %v2036
    %v2103 = vsel %vm664, %v2101, 0
    %2105 = vmatpush.msra.mxu0 0.0
    %2106 = vmatpush.msra.mxu0 0.0
    %2107 = vmatpush.msra.mxu0 0.0
    %2108 = vmatpush.msra.mxu0 0.0
    %2109 = vmatpush.msra.mxu0 0.0
    %2110 = vmatpush.msra.mxu0 0.0
    %2111 = vmatpush.msra.mxu0 0.0
    %2112 = vmatpush.msra.mxu0 0.0
    %2113 = vmatpush.msra.mxu0 0.0
    %2114 = vmatpush.msra.mxu0 0.0
    %2115 = vmatpush.msra.mxu0 0.0
    %2116 = vmatpush.msra.mxu0 0.0
    %2117 = vmatpush.msra.mxu0 %v526
    %2118 = vmatpush.msra.mxu0 %v525
    %2119 = vmatpush.msra.mxu0 %v524
    %2120 = vmatpush.msra.mxu0 %v523
    %2121 = vmatmul.f32.gmra.mxu0 %v2103
    %v2122 = vpop.f32.mrf.mxu0
    %v2123 = vadd.f32 0.0, %v2122
    %2124 = vdwg.mxu0
    %v2125 = vmul.f32 %v2123, 0.125
    %v2126 = vmul.f32 %v2013, %v2059
    %v2128 = vsel %vm664, %v2126, 0
    %2130 = vmatpush.msra.mxu0 0.0
    %2131 = vmatpush.msra.mxu0 0.0
    %2132 = vmatpush.msra.mxu0 0.0
    %2133 = vmatpush.msra.mxu0 0.0
    %2134 = vmatpush.msra.mxu0 0.0
    %2135 = vmatpush.msra.mxu0 0.0
    %2136 = vmatpush.msra.mxu0 0.0
    %2137 = vmatpush.msra.mxu0 0.0
    %2138 = vmatpush.msra.mxu0 0.0
    %2139 = vmatpush.msra.mxu0 0.0
    %2140 = vmatpush.msra.mxu0 0.0
    %2141 = vmatpush.msra.mxu0 0.0
    %2142 = vmatpush.msra.mxu0 %v526
    %2143 = vmatpush.msra.mxu0 %v525
    %2144 = vmatpush.msra.mxu0 %v524
    %2145 = vmatpush.msra.mxu0 %v523
    %2146 = vmatmul.f32.gmra.mxu0 %v2128
    %v2147 = vpop.f32.mrf.mxu0
    %v2148 = vadd.f32 0.0, %v2147
    %2149 = vdwg.mxu0
    %v2150 = vmul.f32 %v2148, 0.125
    %v2151 = vmax.f32 %v2125, %v2150
    %v2152 = vsub.f32 %v2125, %v2151
    %v2153 = vmul.f32 %v2152, 1.442695
    %v2154 = vpow.pop %v2153
    %v2155 = vsub.f32 %v2150, %v2151
    %v2156 = vmul.f32 %v2155, 1.442695
    %v2157 = vpow.pop %v2156
    %v2158 = vadd.f32 %v2154, %v2157
    %v2159 = vrcp.pop %v2158
    %v2160 = vmul.f32 %v2158, %v2159
    %v2161 = vsub.f32 1.0, %v2160
    %v2162 = vmul.f32 %v2159, %v2161
    %v2163 = vadd.f32 %v2159, %v2162
    %vm2164 = vweird.f32 %v2158
    %vm2165 = vweird.f32 %v2159
    %vm2166 = vmor %vm2164, %vm2165
    %v2167 = vsel %vm2166, %v2159, %v2163
    %v2168 = vand.u32 2147483647, %v2158
    %vm2169 = vcmp.eq.f32.partialorder %v2168, 8.507059e+37
    %v2170 = vand.u32 %v2158, 2147483648
    %v2171 = vor.u32 1.1754944e-38, %v2170
    %v2172 = vsel %vm2169, %v2171, %v2167
    %v2173 = vmul.f32 1.0, %v2172
    %v2174 = vmul.f32 %v2154, %v2173
    %v2176 = vsel %vm1131, %v2174, 0
    %v2179 = vsel %vm1135, %v527, 0
    %2181 = vmatpush.msra.mxu0 0.0
    %2182 = vmatpush.msra.mxu0 0.0
    %2183 = vmatpush.msra.mxu0 0.0
    %2184 = vmatpush.msra.mxu0 0.0
    %2185 = vmatpush.msra.mxu0 0.0
    %2186 = vmatpush.msra.mxu0 0.0
    %2187 = vmatpush.msra.mxu0 0.0
    %2188 = vmatpush.msra.mxu0 0.0
    %2189 = vmatpush.msra.mxu0 0.0
    %2190 = vmatpush.msra.mxu0 0.0
    %2191 = vmatpush.msra.mxu0 0.0
    %2192 = vmatpush.msra.mxu0 0.0
    %2193 = vmatpush.msra.mxu0 0.0
    %2194 = vmatpush.msra.mxu0 0.0
    %2195 = vmatpush.msra.mxu0 0.0
    %2196 = vmatpush.msra.mxu0 %v2179
    %2197 = vmatmul.f32.gmra.mxu0 %v2176
    %v2198 = vpop.f32.mrf.mxu0
    %v2199 = vadd.f32 0.0, %v2198
    %2200 = vdwg.mxu0
    %v2201 = vmul.f32 %v2157, %v2173
    %v2203 = vsel %vm1131, %v2201, 0
    %2205 = vmatpush.msra.mxu0 0.0
    %2206 = vmatpush.msra.mxu0 0.0
    %2207 = vmatpush.msra.mxu0 0.0
    %2208 = vmatpush.msra.mxu0 0.0
    %2209 = vmatpush.msra.mxu0 0.0
    %2210 = vmatpush.msra.mxu0 0.0
    %2211 = vmatpush.msra.mxu0 0.0
    %2212 = vmatpush.msra.mxu0 0.0
    %2213 = vmatpush.msra.mxu0 0.0
    %2214 = vmatpush.msra.mxu0 0.0
    %2215 = vmatpush.msra.mxu0 0.0
    %2216 = vmatpush.msra.mxu0 0.0
    %2217 = vmatpush.msra.mxu0 0.0
    %2218 = vmatpush.msra.mxu0 0.0
    %2219 = vmatpush.msra.mxu0 0.0
    %2220 = vmatpush.msra.mxu0 %v2179
    %2221 = vmatmul.f32.gmra.mxu0 %v2203
    %v2222 = vpop.f32.mrf.mxu0
    %v2223 = vadd.f32 0.0, %v2222
    %2224 = vdwg.mxu0
    %v2225 = vmul.f32 %v2199, %v2079
    %v2226 = vmul.f32 %v2223, %v2099
    %v2227 = vadd.f32 %v2225, %v2226
    %v2229 = vperm.slane %v580, 0
    %v2232 = vsel %vm664, %v2227, 0
    %2234 = vmatpush.msra.mxu0 0.0
    %2235 = vmatpush.msra.mxu0 0.0
    %2236 = vmatpush.msra.mxu0 0.0
    %2237 = vmatpush.msra.mxu0 0.0
    %2238 = vmatpush.msra.mxu0 0.0
    %2239 = vmatpush.msra.mxu0 0.0
    %2240 = vmatpush.msra.mxu0 0.0
    %2241 = vmatpush.msra.mxu0 0.0
    %2242 = vmatpush.msra.mxu0 0.0
    %2243 = vmatpush.msra.mxu0 0.0
    %2244 = vmatpush.msra.mxu0 0.0
    %2245 = vmatpush.msra.mxu0 0.0
    %2246 = vmatpush.msra.mxu0 %v579
    %2247 = vmatpush.msra.mxu0 %v578
    %2248 = vmatpush.msra.mxu0 %v577
    %2249 = vmatpush.msra.mxu0 %v576
    %2250 = vmatmul.f32.gmra.mxu0 %v2232
    %v2251 = vpop.f32.mrf.mxu0
    %v2252 = vadd.f32 %v2229, %v2251
    %2253 = vdwg.mxu0
    %v2255 = vperm.slane %v589, 0
    %v2258 = vsel %vm664, %v2252, 0
    %2260 = vmatpush.msra.mxu0 0.0
    %2261 = vmatpush.msra.mxu0 0.0
    %2262 = vmatpush.msra.mxu0 0.0
    %2263 = vmatpush.msra.mxu0 0.0
    %2264 = vmatpush.msra.mxu0 0.0
    %2265 = vmatpush.msra.mxu0 0.0
    %2266 = vmatpush.msra.mxu0 0.0
    %2267 = vmatpush.msra.mxu0 0.0
    %2268 = vmatpush.msra.mxu0 0.0
    %2269 = vmatpush.msra.mxu0 0.0
    %2270 = vmatpush.msra.mxu0 0.0
    %2271 = vmatpush.msra.mxu0 0.0
    %2272 = vmatpush.msra.mxu0 %v584
    %2273 = vmatpush.msra.mxu0 %v583
    %2274 = vmatpush.msra.mxu0 %v582
    %2275 = vmatpush.msra.mxu0 %v581
    %2276 = vmatmul.f32.gmra.mxu0 %v2258
    %v2277 = vpop.f32.mrf.mxu0
    %v2278 = vadd.f32 %v2255, %v2277
    %2279 = vdwg.mxu0
    %v2281 = vperm.slane %v590, 0
    %2283 = vmatpush.msra.mxu0 0.0
    %2284 = vmatpush.msra.mxu0 0.0
    %2285 = vmatpush.msra.mxu0 0.0
    %2286 = vmatpush.msra.mxu0 0.0
    %2287 = vmatpush.msra.mxu0 0.0
    %2288 = vmatpush.msra.mxu0 0.0
    %2289 = vmatpush.msra.mxu0 0.0
    %2290 = vmatpush.msra.mxu0 0.0
    %2291 = vmatpush.msra.mxu0 0.0
    %2292 = vmatpush.msra.mxu0 0.0
    %2293 = vmatpush.msra.mxu0 0.0
    %2294 = vmatpush.msra.mxu0 0.0
    %2295 = vmatpush.msra.mxu0 %v588
    %2296 = vmatpush.msra.mxu0 %v587
    %2297 = vmatpush.msra.mxu0 %v586
    %2298 = vmatpush.msra.mxu0 %v585
    %2299 = vmatmul.f32.gmra.mxu0 %v1993
    %v2300 = vpop.f32.mrf.mxu0
    %v2301 = vadd.f32 %v2281, %v2300
    %2302 = vdwg.mxu0
    %v2303 = vadd.f32 %v2278, %v2301
    %v2304 = vxor.u32 %v2303, 2147483648
    %v2305 = vmul.f32 %v2304, 1.442695
    %v2306 = vpow.pop %v2305
    %v2307 = vadd.f32 %v2306, 1.0
    %v2308 = vrcp.pop %v2307
    %v2309 = vmul.f32 %v2307, %v2308
    %v2310 = vsub.f32 1.0, %v2309
    %v2311 = vmul.f32 %v2308, %v2310
    %v2312 = vadd.f32 %v2308, %v2311
    %vm2313 = vweird.f32 %v2307
    %vm2314 = vweird.f32 %v2308
    %vm2315 = vmor %vm2313, %vm2314
    %v2316 = vsel %vm2315, %v2308, %v2312
    %v2317 = vand.u32 2147483647, %v2307
    %vm2318 = vcmp.eq.f32.partialorder %v2317, 8.507059e+37
    %v2319 = vand.u32 %v2307, 2147483648
    %v2320 = vor.u32 1.1754944e-38, %v2319
    %v2321 = vsel %vm2318, %v2320, %v2316
    %v2322 = vmul.f32 1.0, %v2321
    %2324 = vrot.lane.b32.xlu0 %v2301, 64
    %v2325 = vpop.permute.xlu0 %2324
    %v2327 = vmul.f32 %v2322, %v2325
    %2329 = vrot.lane.b32.xlu0 %v2327, 64
    %v2330 = vpop.permute.xlu0 %2329
    %v2332 = vadd.f32 %v2278, %v2330
    %v2333 = vtanh.pop %v2332
    %v2334 = vsub.f32 1.0, %v2322
    %2336 = vrot.lane.b32.xlu0 %v2333, 96
    %v2337 = vpop.permute.xlu0 %2336
    %v2339 = vmul.f32 %v2334, %v2337
    %2340 = vrot.lane.b32.xlu0 %v742, 32
    %v2341 = vpop.permute.xlu0 %2340
    %v2343 = vmul.f32 %v2322, %v2341
    %v2344 = vadd.f32 %v2339, %v2343
    %v2346 = vperm.slane %v599, 0
    %v2349 = vsel %vm664, %v1968, 0
    %2351 = vmatpush.msra.mxu0 0.0
    %2352 = vmatpush.msra.mxu0 0.0
    %2353 = vmatpush.msra.mxu0 0.0
    %2354 = vmatpush.msra.mxu0 0.0
    %2355 = vmatpush.msra.mxu0 0.0
    %2356 = vmatpush.msra.mxu0 0.0
    %2357 = vmatpush.msra.mxu0 0.0
    %2358 = vmatpush.msra.mxu0 0.0
    %2359 = vmatpush.msra.mxu0 0.0
    %2360 = vmatpush.msra.mxu0 0.0
    %2361 = vmatpush.msra.mxu0 0.0
    %2362 = vmatpush.msra.mxu0 0.0
    %2363 = vmatpush.msra.mxu0 %v594
    %2364 = vmatpush.msra.mxu0 %v593
    %2365 = vmatpush.msra.mxu0 %v592
    %2366 = vmatpush.msra.mxu0 %v591
    %2367 = vmatmul.f32.gmra.mxu0 %v2349
    %v2368 = vpop.f32.mrf.mxu0
    %v2369 = vadd.f32 %v2346, %v2368
    %2370 = vdwg.mxu0
    %v2372 = vperm.slane %v600, 0
    %v2375 = vsel %vm664, %v688, 0
    %2377 = vmatpush.msra.mxu0 0.0
    %2378 = vmatpush.msra.mxu0 0.0
    %2379 = vmatpush.msra.mxu0 0.0
    %2380 = vmatpush.msra.mxu0 0.0
    %2381 = vmatpush.msra.mxu0 0.0
    %2382 = vmatpush.msra.mxu0 0.0
    %2383 = vmatpush.msra.mxu0 0.0
    %2384 = vmatpush.msra.mxu0 0.0
    %2385 = vmatpush.msra.mxu0 0.0
    %2386 = vmatpush.msra.mxu0 0.0
    %2387 = vmatpush.msra.mxu0 0.0
    %2388 = vmatpush.msra.mxu0 0.0
    %2389 = vmatpush.msra.mxu0 %v598
    %2390 = vmatpush.msra.mxu0 %v597
    %2391 = vmatpush.msra.mxu0 %v596
    %2392 = vmatpush.msra.mxu0 %v595
    %2393 = vmatmul.f32.gmra.mxu0 %v2375
    %v2394 = vpop.f32.mrf.mxu0
    %v2395 = vadd.f32 %v2372, %v2394
    %2396 = vdwg.mxu0
    %v2397 = vadd.f32 %v2369, %v2395
    %v2398 = vxor.u32 %v2397, 2147483648
    %v2399 = vmul.f32 %v2398, 1.442695
    %v2400 = vpow.pop %v2399
    %v2401 = vadd.f32 %v2400, 1.0
    %v2402 = vrcp.pop %v2401
    %v2403 = vmul.f32 %v2401, %v2402
    %v2404 = vsub.f32 1.0, %v2403
    %v2405 = vmul.f32 %v2402, %v2404
    %v2406 = vadd.f32 %v2402, %v2405
    %vm2407 = vweird.f32 %v2401
    %vm2408 = vweird.f32 %v2402
    %vm2409 = vmor %vm2407, %vm2408
    %v2410 = vsel %vm2409, %v2402, %v2406
    %v2411 = vand.u32 2147483647, %v2401
    %vm2412 = vcmp.eq.f32.partialorder %v2411, 8.507059e+37
    %v2413 = vand.u32 %v2401, 2147483648
    %v2414 = vor.u32 1.1754944e-38, %v2413
    %v2415 = vsel %vm2412, %v2414, %v2410
    %v2416 = vmul.f32 1.0, %v2415
    %2418 = vrot.lane.b32.xlu0 %v2395, 64
    %v2419 = vpop.permute.xlu0 %2418
    %v2421 = vmul.f32 %v2416, %v2419
    %2423 = vrot.lane.b32.xlu0 %v2421, 64
    %v2424 = vpop.permute.xlu0 %2423
    %v2426 = vadd.f32 %v2369, %v2424
    %v2427 = vtanh.pop %v2426
    %v2428 = vsub.f32 1.0, %v2416
    %2430 = vrot.lane.b32.xlu0 %v2427, 96
    %v2431 = vpop.permute.xlu0 %2430
    %v2433 = vmul.f32 %v2428, %v2431
    %2434 = vrot.lane.b32.xlu0 %v688, 32
    %v2435 = vpop.permute.xlu0 %2434
    %v2437 = vmul.f32 %v2416, %v2435
    %v2438 = vadd.f32 %v2433, %v2437
    %2440 = vrot.lane.b32.xlu0 %v2344, 96
    %v2441 = vpop.permute.xlu0 %2440
    %v2442 = vsel %vm1135, %v2441, 0
    %2444 = vmatpush.msra.mxu0 0.0
    %2445 = vmatpush.msra.mxu0 0.0
    %2446 = vmatpush.msra.mxu0 0.0
    %2447 = vmatpush.msra.mxu0 0.0
    %2448 = vmatpush.msra.mxu0 0.0
    %2449 = vmatpush.msra.mxu0 0.0
    %2450 = vmatpush.msra.mxu0 0.0
    %2451 = vmatpush.msra.mxu0 0.0
    %2452 = vmatpush.msra.mxu0 0.0
    %2453 = vmatpush.msra.mxu0 0.0
    %2454 = vmatpush.msra.mxu0 0.0
    %2455 = vmatpush.msra.mxu0 0.0
    %2456 = vmatpush.msra.mxu0 0.0
    %2457 = vmatpush.msra.mxu0 0.0
    %2458 = vmatpush.msra.mxu0 0.0
    %2459 = vmatpush.msra.mxu0 %v2442
    %2460 = vmatmul.f32.gmra.mxu0 %v1133
    %v2461 = vpop.f32.mrf.mxu0
    %v2462 = vadd.f32 0.0, %v2461
    %2463 = vdwg.mxu0
    %v2465 = vsel %vm664, %v2462, 0
    %2467 = vmatpush.msra.mxu0 0.0
    %2468 = vmatpush.msra.mxu0 0.0
    %2469 = vmatpush.msra.mxu0 0.0
    %2470 = vmatpush.msra.mxu0 0.0
    %2471 = vmatpush.msra.mxu0 0.0
    %2472 = vmatpush.msra.mxu0 0.0
    %2473 = vmatpush.msra.mxu0 0.0
    %2474 = vmatpush.msra.mxu0 0.0
    %2475 = vmatpush.msra.mxu0 0.0
    %2476 = vmatpush.msra.mxu0 0.0
    %2477 = vmatpush.msra.mxu0 0.0
    %2478 = vmatpush.msra.mxu0 0.0
    %2479 = vmatpush.msra.mxu0 %v387
    %2480 = vmatpush.msra.mxu0 %v379
    %2481 = vmatpush.msra.mxu0 %v371
    %2482 = vmatpush.msra.mxu0 %v363
    %2483 = vmatmul.f32.gmra.mxu0 %v2465
    %v2484 = vpop.f32.mrf.mxu0
    %v2485 = vadd.f32 0.0, %v2484
    %2486 = vdwg.mxu0
    %2487 = vmatpush.msra.mxu0 0.0
    %2488 = vmatpush.msra.mxu0 0.0
    %2489 = vmatpush.msra.mxu0 0.0
    %2490 = vmatpush.msra.mxu0 0.0
    %2491 = vmatpush.msra.mxu0 0.0
    %2492 = vmatpush.msra.mxu0 0.0
    %2493 = vmatpush.msra.mxu0 0.0
    %2494 = vmatpush.msra.mxu0 0.0
    %2495 = vmatpush.msra.mxu0 0.0
    %2496 = vmatpush.msra.mxu0 0.0
    %2497 = vmatpush.msra.mxu0 0.0
    %2498 = vmatpush.msra.mxu0 0.0
    %2499 = vmatpush.msra.mxu0 %v388
    %2500 = vmatpush.msra.mxu0 %v380
    %2501 = vmatpush.msra.mxu0 %v372
    %2502 = vmatpush.msra.mxu0 %v364
    %2503 = vmatmul.f32.gmra.mxu0 %v2465
    %v2504 = vpop.f32.mrf.mxu0
    %v2505 = vadd.f32 0.0, %v2504
    %2506 = vdwg.mxu0
    %2507 = vmatpush.msra.mxu0 0.0
    %2508 = vmatpush.msra.mxu0 0.0
    %2509 = vmatpush.msra.mxu0 0.0
    %2510 = vmatpush.msra.mxu0 0.0
    %2511 = vmatpush.msra.mxu0 0.0
    %2512 = vmatpush.msra.mxu0 0.0
    %2513 = vmatpush.msra.mxu0 0.0
    %2514 = vmatpush.msra.mxu0 0.0
    %2515 = vmatpush.msra.mxu0 0.0
    %2516 = vmatpush.msra.mxu0 0.0
    %2517 = vmatpush.msra.mxu0 0.0
    %2518 = vmatpush.msra.mxu0 0.0
    %2519 = vmatpush.msra.mxu0 %v389
    %2520 = vmatpush.msra.mxu0 %v381
    %2521 = vmatpush.msra.mxu0 %v373
    %2522 = vmatpush.msra.mxu0 %v365
    %2523 = vmatmul.f32.gmra.mxu0 %v2465
    %v2524 = vpop.f32.mrf.mxu0
    %v2525 = vadd.f32 0.0, %v2524
    %2526 = vdwg.mxu0
    %2527 = vmatpush.msra.mxu0 0.0
    %2528 = vmatpush.msra.mxu0 0.0
    %2529 = vmatpush.msra.mxu0 0.0
    %2530 = vmatpush.msra.mxu0 0.0
    %2531 = vmatpush.msra.mxu0 0.0
    %2532 = vmatpush.msra.mxu0 0.0
    %2533 = vmatpush.msra.mxu0 0.0
    %2534 = vmatpush.msra.mxu0 0.0
    %2535 = vmatpush.msra.mxu0 0.0
    %2536 = vmatpush.msra.mxu0 0.0
    %2537 = vmatpush.msra.mxu0 0.0
    %2538 = vmatpush.msra.mxu0 0.0
    %2539 = vmatpush.msra.mxu0 %v390
    %2540 = vmatpush.msra.mxu0 %v382
    %2541 = vmatpush.msra.mxu0 %v374
    %2542 = vmatpush.msra.mxu0 %v366
    %2543 = vmatmul.f32.gmra.mxu0 %v2465
    %v2544 = vpop.f32.mrf.mxu0
    %v2545 = vadd.f32 0.0, %v2544
    %2546 = vdwg.mxu0
    %2547 = vmatpush.msra.mxu0 0.0
    %2548 = vmatpush.msra.mxu0 0.0
    %2549 = vmatpush.msra.mxu0 0.0
    %2550 = vmatpush.msra.mxu0 0.0
    %2551 = vmatpush.msra.mxu0 0.0
    %2552 = vmatpush.msra.mxu0 0.0
    %2553 = vmatpush.msra.mxu0 0.0
    %2554 = vmatpush.msra.mxu0 0.0
    %2555 = vmatpush.msra.mxu0 0.0
    %2556 = vmatpush.msra.mxu0 0.0
    %2557 = vmatpush.msra.mxu0 0.0
    %2558 = vmatpush.msra.mxu0 0.0
    %2559 = vmatpush.msra.mxu0 %v391
    %2560 = vmatpush.msra.mxu0 %v383
    %2561 = vmatpush.msra.mxu0 %v375
    %2562 = vmatpush.msra.mxu0 %v367
    %2563 = vmatmul.f32.gmra.mxu0 %v2465
    %v2564 = vpop.f32.mrf.mxu0
    %v2565 = vadd.f32 0.0, %v2564
    %2566 = vdwg.mxu0
    %2567 = vmatpush.msra.mxu0 0.0
    %2568 = vmatpush.msra.mxu0 0.0
    %2569 = vmatpush.msra.mxu0 0.0
    %2570 = vmatpush.msra.mxu0 0.0
    %2571 = vmatpush.msra.mxu0 0.0
    %2572 = vmatpush.msra.mxu0 0.0
    %2573 = vmatpush.msra.mxu0 0.0
    %2574 = vmatpush.msra.mxu0 0.0
    %2575 = vmatpush.msra.mxu0 0.0
    %2576 = vmatpush.msra.mxu0 0.0
    %2577 = vmatpush.msra.mxu0 0.0
    %2578 = vmatpush.msra.mxu0 0.0
    %2579 = vmatpush.msra.mxu0 %v392
    %2580 = vmatpush.msra.mxu0 %v384
    %2581 = vmatpush.msra.mxu0 %v376
    %2582 = vmatpush.msra.mxu0 %v368
    %2583 = vmatmul.f32.gmra.mxu0 %v2465
    %v2584 = vpop.f32.mrf.mxu0
    %v2585 = vadd.f32 0.0, %v2584
    %2586 = vdwg.mxu0
    %2587 = vmatpush.msra.mxu0 0.0
    %2588 = vmatpush.msra.mxu0 0.0
    %2589 = vmatpush.msra.mxu0 0.0
    %2590 = vmatpush.msra.mxu0 0.0
    %2591 = vmatpush.msra.mxu0 0.0
    %2592 = vmatpush.msra.mxu0 0.0
    %2593 = vmatpush.msra.mxu0 0.0
    %2594 = vmatpush.msra.mxu0 0.0
    %2595 = vmatpush.msra.mxu0 0.0
    %2596 = vmatpush.msra.mxu0 0.0
    %2597 = vmatpush.msra.mxu0 0.0
    %2598 = vmatpush.msra.mxu0 0.0
    %2599 = vmatpush.msra.mxu0 %v393
    %2600 = vmatpush.msra.mxu0 %v385
    %2601 = vmatpush.msra.mxu0 %v377
    %2602 = vmatpush.msra.mxu0 %v369
    %2603 = vmatmul.f32.gmra.mxu0 %v2465
    %v2604 = vpop.f32.mrf.mxu0
    %v2605 = vadd.f32 0.0, %v2604
    %2606 = vdwg.mxu0
    %2607 = vmatpush.msra.mxu0 0.0
    %2608 = vmatpush.msra.mxu0 0.0
    %2609 = vmatpush.msra.mxu0 0.0
    %2610 = vmatpush.msra.mxu0 0.0
    %2611 = vmatpush.msra.mxu0 0.0
    %2612 = vmatpush.msra.mxu0 0.0
    %2613 = vmatpush.msra.mxu0 0.0
    %2614 = vmatpush.msra.mxu0 0.0
    %2615 = vmatpush.msra.mxu0 0.0
    %2616 = vmatpush.msra.mxu0 0.0
    %2617 = vmatpush.msra.mxu0 0.0
    %2618 = vmatpush.msra.mxu0 0.0
    %2619 = vmatpush.msra.mxu0 %v394
    %2620 = vmatpush.msra.mxu0 %v386
    %2621 = vmatpush.msra.mxu0 %v378
    %2622 = vmatpush.msra.mxu0 %v370
    %2623 = vmatmul.f32.gmra.mxu0 %v2465
    %v2624 = vpop.f32.mrf.mxu0
    %v2625 = vadd.f32 0.0, %v2624
    %2626 = vdwg.mxu0
    %v2627 = vmul.f32 %v2485, %v782
    %v2628 = vmul.f32 %v2505, %v802
    %v2629 = vmul.f32 %v2525, %v822
    %v2630 = vmul.f32 %v2545, %v842
    %v2631 = vmul.f32 %v2565, %v862
    %v2632 = vmul.f32 %v2585, %v882
    %v2633 = vmul.f32 %v2605, %v902
    %v2634 = vmul.f32 %v2625, %v922
    %2635 = vmatpush.msra.mxu0 %v410
    %2636 = vmatpush.msra.mxu0 %v409
    %2637 = vmatpush.msra.mxu0 %v408
    %2638 = vmatpush.msra.mxu0 %v407
    %2639 = vmatpush.msra.mxu0 %v406
    %2640 = vmatpush.msra.mxu0 %v405
    %2641 = vmatpush.msra.mxu0 %v404
    %2642 = vmatpush.msra.mxu0 %v403
    %2643 = vmatpush.msra.mxu0 %v402
    %2644 = vmatpush.msra.mxu0 %v401
    %2645 = vmatpush.msra.mxu0 %v400
    %2646 = vmatpush.msra.mxu0 %v399
    %2647 = vmatpush.msra.mxu0 %v398
    %2648 = vmatpush.msra.mxu0 %v397
    %2649 = vmatpush.msra.mxu0 %v396
    %2650 = vmatpush.msra.mxu0 %v395
    %2651 = vmatmul.f32.gmra.mxu0 %v2627
    %v2652 = vpop.f32.mrf.mxu0
    %v2653 = vadd.f32 0.0, %v2652
    %2654 = vdwg.mxu0
    %2655 = vmatpush.msra.mxu0 %v426
    %2656 = vmatpush.msra.mxu0 %v425
    %2657 = vmatpush.msra.mxu0 %v424
    %2658 = vmatpush.msra.mxu0 %v423
    %2659 = vmatpush.msra.mxu0 %v422
    %2660 = vmatpush.msra.mxu0 %v421
    %2661 = vmatpush.msra.mxu0 %v420
    %2662 = vmatpush.msra.mxu0 %v419
    %2663 = vmatpush.msra.mxu0 %v418
    %2664 = vmatpush.msra.mxu0 %v417
    %2665 = vmatpush.msra.mxu0 %v416
    %2666 = vmatpush.msra.mxu0 %v415
    %2667 = vmatpush.msra.mxu0 %v414
    %2668 = vmatpush.msra.mxu0 %v413
    %2669 = vmatpush.msra.mxu0 %v412
    %2670 = vmatpush.msra.mxu0 %v411
    %2671 = vmatmul.f32.gmra.mxu0 %v2628
    %v2672 = vpop.f32.mrf.mxu0
    %v2673 = vadd.f32 %v2653, %v2672
    %2674 = vdwg.mxu0
    %2675 = vmatpush.msra.mxu0 %v442
    %2676 = vmatpush.msra.mxu0 %v441
    %2677 = vmatpush.msra.mxu0 %v440
    %2678 = vmatpush.msra.mxu0 %v439
    %2679 = vmatpush.msra.mxu0 %v438
    %2680 = vmatpush.msra.mxu0 %v437
    %2681 = vmatpush.msra.mxu0 %v436
    %2682 = vmatpush.msra.mxu0 %v435
    %2683 = vmatpush.msra.mxu0 %v434
    %2684 = vmatpush.msra.mxu0 %v433
    %2685 = vmatpush.msra.mxu0 %v432
    %2686 = vmatpush.msra.mxu0 %v431
    %2687 = vmatpush.msra.mxu0 %v430
    %2688 = vmatpush.msra.mxu0 %v429
    %2689 = vmatpush.msra.mxu0 %v428
    %2690 = vmatpush.msra.mxu0 %v427
    %2691 = vmatmul.f32.gmra.mxu0 %v2629
    %v2692 = vpop.f32.mrf.mxu0
    %v2693 = vadd.f32 %v2673, %v2692
    %2694 = vdwg.mxu0
    %2695 = vmatpush.msra.mxu0 %v458
    %2696 = vmatpush.msra.mxu0 %v457
    %2697 = vmatpush.msra.mxu0 %v456
    %2698 = vmatpush.msra.mxu0 %v455
    %2699 = vmatpush.msra.mxu0 %v454
    %2700 = vmatpush.msra.mxu0 %v453
    %2701 = vmatpush.msra.mxu0 %v452
    %2702 = vmatpush.msra.mxu0 %v451
    %2703 = vmatpush.msra.mxu0 %v450
    %2704 = vmatpush.msra.mxu0 %v449
    %2705 = vmatpush.msra.mxu0 %v448
    %2706 = vmatpush.msra.mxu0 %v447
    %2707 = vmatpush.msra.mxu0 %v446
    %2708 = vmatpush.msra.mxu0 %v445
    %2709 = vmatpush.msra.mxu0 %v444
    %2710 = vmatpush.msra.mxu0 %v443
    %2711 = vmatmul.f32.gmra.mxu0 %v2630
    %v2712 = vpop.f32.mrf.mxu0
    %v2713 = vadd.f32 %v2693, %v2712
    %2714 = vdwg.mxu0
    %2715 = vmatpush.msra.mxu0 %v474
    %2716 = vmatpush.msra.mxu0 %v473
    %2717 = vmatpush.msra.mxu0 %v472
    %2718 = vmatpush.msra.mxu0 %v471
    %2719 = vmatpush.msra.mxu0 %v470
    %2720 = vmatpush.msra.mxu0 %v469
    %2721 = vmatpush.msra.mxu0 %v468
    %2722 = vmatpush.msra.mxu0 %v467
    %2723 = vmatpush.msra.mxu0 %v466
    %2724 = vmatpush.msra.mxu0 %v465
    %2725 = vmatpush.msra.mxu0 %v464
    %2726 = vmatpush.msra.mxu0 %v463
    %2727 = vmatpush.msra.mxu0 %v462
    %2728 = vmatpush.msra.mxu0 %v461
    %2729 = vmatpush.msra.mxu0 %v460
    %2730 = vmatpush.msra.mxu0 %v459
    %2731 = vmatmul.f32.gmra.mxu0 %v2631
    %v2732 = vpop.f32.mrf.mxu0
    %v2733 = vadd.f32 %v2713, %v2732
    %2734 = vdwg.mxu0
    %2735 = vmatpush.msra.mxu0 %v490
    %2736 = vmatpush.msra.mxu0 %v489
    %2737 = vmatpush.msra.mxu0 %v488
    %2738 = vmatpush.msra.mxu0 %v487
    %2739 = vmatpush.msra.mxu0 %v486
    %2740 = vmatpush.msra.mxu0 %v485
    %2741 = vmatpush.msra.mxu0 %v484
    %2742 = vmatpush.msra.mxu0 %v483
    %2743 = vmatpush.msra.mxu0 %v482
    %2744 = vmatpush.msra.mxu0 %v481
    %2745 = vmatpush.msra.mxu0 %v480
    %2746 = vmatpush.msra.mxu0 %v479
    %2747 = vmatpush.msra.mxu0 %v478
    %2748 = vmatpush.msra.mxu0 %v477
    %2749 = vmatpush.msra.mxu0 %v476
    %2750 = vmatpush.msra.mxu0 %v475
    %2751 = vmatmul.f32.gmra.mxu0 %v2632
    %v2752 = vpop.f32.mrf.mxu0
    %v2753 = vadd.f32 %v2733, %v2752
    %2754 = vdwg.mxu0
    %2755 = vmatpush.msra.mxu0 %v506
    %2756 = vmatpush.msra.mxu0 %v505
    %2757 = vmatpush.msra.mxu0 %v504
    %2758 = vmatpush.msra.mxu0 %v503
    %2759 = vmatpush.msra.mxu0 %v502
    %2760 = vmatpush.msra.mxu0 %v501
    %2761 = vmatpush.msra.mxu0 %v500
    %2762 = vmatpush.msra.mxu0 %v499
    %2763 = vmatpush.msra.mxu0 %v498
    %2764 = vmatpush.msra.mxu0 %v497
    %2765 = vmatpush.msra.mxu0 %v496
    %2766 = vmatpush.msra.mxu0 %v495
    %2767 = vmatpush.msra.mxu0 %v494
    %2768 = vmatpush.msra.mxu0 %v493
    %2769 = vmatpush.msra.mxu0 %v492
    %2770 = vmatpush.msra.mxu0 %v491
    %2771 = vmatmul.f32.gmra.mxu0 %v2633
    %v2772 = vpop.f32.mrf.mxu0
    %v2773 = vadd.f32 %v2753, %v2772
    %2774 = vdwg.mxu0
    %2775 = vmatpush.msra.mxu0 %v522
    %2776 = vmatpush.msra.mxu0 %v521
    %2777 = vmatpush.msra.mxu0 %v520
    %2778 = vmatpush.msra.mxu0 %v519
    %2779 = vmatpush.msra.mxu0 %v518
    %2780 = vmatpush.msra.mxu0 %v517
    %2781 = vmatpush.msra.mxu0 %v516
    %2782 = vmatpush.msra.mxu0 %v515
    %2783 = vmatpush.msra.mxu0 %v514
    %2784 = vmatpush.msra.mxu0 %v513
    %2785 = vmatpush.msra.mxu0 %v512
    %2786 = vmatpush.msra.mxu0 %v511
    %2787 = vmatpush.msra.mxu0 %v510
    %2788 = vmatpush.msra.mxu0 %v509
    %2789 = vmatpush.msra.mxu0 %v508
    %2790 = vmatpush.msra.mxu0 %v507
    %2791 = vmatmul.f32.gmra.mxu0 %v2634
    %v2792 = vpop.f32.mrf.mxu0
    %v2793 = vadd.f32 %v2773, %v2792
    %2794 = vdwg.mxu0
    %v2796 = vsel %vm1497, %v2793, 0
    %2798 = vmatpush.msra.mxu0 0.0
    %2799 = vmatpush.msra.mxu0 0.0
    %2800 = vmatpush.msra.mxu0 0.0
    %2801 = vmatpush.msra.mxu0 0.0
    %2802 = vmatpush.msra.mxu0 0.0
    %2803 = vmatpush.msra.mxu0 0.0
    %2804 = vmatpush.msra.mxu0 0.0
    %2805 = vmatpush.msra.mxu0 0.0
    %2806 = vmatpush.msra.mxu0 0.0
    %2807 = vmatpush.msra.mxu0 0.0
    %2808 = vmatpush.msra.mxu0 0.0
    %2809 = vmatpush.msra.mxu0 0.0
    %2810 = vmatpush.msra.mxu0 0.0
    %2811 = vmatpush.msra.mxu0 0.0
    %2812 = vmatpush.msra.mxu0 0.0
    %2813 = vmatpush.msra.mxu0 %v2796
    %2814 = vmatmul.f32.gmra.mxu0 %v1495
    %v2815 = vpop.f32.mrf.mxu0
    %v2816 = vadd.f32 %v1491, %v2815
    %2817 = vdwg.mxu0
    %2819 = vrot.lane.b32.xlu0 %v2438, 96
    %v2820 = vpop.permute.xlu0 %2819
    %2822 = vmatpush.msra.mxu0 0.0
    %2823 = vmatpush.msra.mxu0 0.0
    %2824 = vmatpush.msra.mxu0 0.0
    %2825 = vmatpush.msra.mxu0 0.0
    %2826 = vmatpush.msra.mxu0 0.0
    %2827 = vmatpush.msra.mxu0 0.0
    %2828 = vmatpush.msra.mxu0 0.0
    %2829 = vmatpush.msra.mxu0 0.0
    %2830 = vmatpush.msra.mxu0 0.0
    %2831 = vmatpush.msra.mxu0 0.0
    %2832 = vmatpush.msra.mxu0 0.0
    %2833 = vmatpush.msra.mxu0 0.0
    %2834 = vmatpush.msra.mxu0 0.0
    %2835 = vmatpush.msra.mxu0 0.0
    %2836 = vmatpush.msra.mxu0 0.0
    %2837 = vmatpush.msra.mxu0 %v2820
    %2838 = vmatmul.f32.gmra.mxu0 %v1522
    %v2839 = vpop.f32.mrf.mxu0
    %v2840 = vadd.f32 0.0, %v2839
    %2841 = vmatmul.f32.gmra.mxu0 %v1525
    %v2842 = vpop.f32.mrf.mxu0
    %v2843 = vadd.f32 0.0, %v2842
    %2844 = vdwg.mxu0
    %v2846 = vsel %vm664, %v2840, 0
    %v2849 = vsel %vm664, %v2843, 0
    %2851 = vmatpush.msra.mxu0 0.0
    %2852 = vmatpush.msra.mxu0 0.0
    %2853 = vmatpush.msra.mxu0 0.0
    %2854 = vmatpush.msra.mxu0 0.0
    %2855 = vmatpush.msra.mxu0 0.0
    %2856 = vmatpush.msra.mxu0 0.0
    %2857 = vmatpush.msra.mxu0 0.0
    %2858 = vmatpush.msra.mxu0 0.0
    %2859 = vmatpush.msra.mxu0 0.0
    %2860 = vmatpush.msra.mxu0 0.0
    %2861 = vmatpush.msra.mxu0 0.0
    %2862 = vmatpush.msra.mxu0 0.0
    %2863 = vmatpush.msra.mxu0 %v387
    %2864 = vmatpush.msra.mxu0 %v379
    %2865 = vmatpush.msra.mxu0 %v371
    %2866 = vmatpush.msra.mxu0 %v363
    %2867 = vmatmul.f32.gmra.mxu0 %v2846
    %v2868 = vpop.f32.mrf.mxu0
    %v2869 = vadd.f32 0.0, %v2868
    %2870 = vmatmul.f32.gmra.mxu0 %v2849
    %v2871 = vpop.f32.mrf.mxu0
    %v2872 = vadd.f32 0.0, %v2871
    %2873 = vdwg.mxu0
    %2874 = vmatpush.msra.mxu0 0.0
    %2875 = vmatpush.msra.mxu0 0.0
    %2876 = vmatpush.msra.mxu0 0.0
    %2877 = vmatpush.msra.mxu0 0.0
    %2878 = vmatpush.msra.mxu0 0.0
    %2879 = vmatpush.msra.mxu0 0.0
    %2880 = vmatpush.msra.mxu0 0.0
    %2881 = vmatpush.msra.mxu0 0.0
    %2882 = vmatpush.msra.mxu0 0.0
    %2883 = vmatpush.msra.mxu0 0.0
    %2884 = vmatpush.msra.mxu0 0.0
    %2885 = vmatpush.msra.mxu0 0.0
    %2886 = vmatpush.msra.mxu0 %v388
    %2887 = vmatpush.msra.mxu0 %v380
    %2888 = vmatpush.msra.mxu0 %v372
    %2889 = vmatpush.msra.mxu0 %v364
    %2890 = vmatmul.f32.gmra.mxu0 %v2846
    %v2891 = vpop.f32.mrf.mxu0
    %v2892 = vadd.f32 0.0, %v2891
    %2893 = vmatmul.f32.gmra.mxu0 %v2849
    %v2894 = vpop.f32.mrf.mxu0
    %v2895 = vadd.f32 0.0, %v2894
    %2896 = vdwg.mxu0
    %2897 = vmatpush.msra.mxu0 0.0
    %2898 = vmatpush.msra.mxu0 0.0
    %2899 = vmatpush.msra.mxu0 0.0
    %2900 = vmatpush.msra.mxu0 0.0
    %2901 = vmatpush.msra.mxu0 0.0
    %2902 = vmatpush.msra.mxu0 0.0
    %2903 = vmatpush.msra.mxu0 0.0
    %2904 = vmatpush.msra.mxu0 0.0
    %2905 = vmatpush.msra.mxu0 0.0
    %2906 = vmatpush.msra.mxu0 0.0
    %2907 = vmatpush.msra.mxu0 0.0
    %2908 = vmatpush.msra.mxu0 0.0
    %2909 = vmatpush.msra.mxu0 %v389
    %2910 = vmatpush.msra.mxu0 %v381
    %2911 = vmatpush.msra.mxu0 %v373
    %2912 = vmatpush.msra.mxu0 %v365
    %2913 = vmatmul.f32.gmra.mxu0 %v2846
    %v2914 = vpop.f32.mrf.mxu0
    %v2915 = vadd.f32 0.0, %v2914
    %2916 = vmatmul.f32.gmra.mxu0 %v2849
    %v2917 = vpop.f32.mrf.mxu0
    %v2918 = vadd.f32 0.0, %v2917
    %2919 = vdwg.mxu0
    %2920 = vmatpush.msra.mxu0 0.0
    %2921 = vmatpush.msra.mxu0 0.0
    %2922 = vmatpush.msra.mxu0 0.0
    %2923 = vmatpush.msra.mxu0 0.0
    %2924 = vmatpush.msra.mxu0 0.0
    %2925 = vmatpush.msra.mxu0 0.0
    %2926 = vmatpush.msra.mxu0 0.0
    %2927 = vmatpush.msra.mxu0 0.0
    %2928 = vmatpush.msra.mxu0 0.0
    %2929 = vmatpush.msra.mxu0 0.0
    %2930 = vmatpush.msra.mxu0 0.0
    %2931 = vmatpush.msra.mxu0 0.0
    %2932 = vmatpush.msra.mxu0 %v390
    %2933 = vmatpush.msra.mxu0 %v382
    %2934 = vmatpush.msra.mxu0 %v374
    %2935 = vmatpush.msra.mxu0 %v366
    %2936 = vmatmul.f32.gmra.mxu0 %v2846
    %v2937 = vpop.f32.mrf.mxu0
    %v2938 = vadd.f32 0.0, %v2937
    %2939 = vmatmul.f32.gmra.mxu0 %v2849
    %v2940 = vpop.f32.mrf.mxu0
    %v2941 = vadd.f32 0.0, %v2940
    %2942 = vdwg.mxu0
    %2943 = vmatpush.msra.mxu0 0.0
    %2944 = vmatpush.msra.mxu0 0.0
    %2945 = vmatpush.msra.mxu0 0.0
    %2946 = vmatpush.msra.mxu0 0.0
    %2947 = vmatpush.msra.mxu0 0.0
    %2948 = vmatpush.msra.mxu0 0.0
    %2949 = vmatpush.msra.mxu0 0.0
    %2950 = vmatpush.msra.mxu0 0.0
    %2951 = vmatpush.msra.mxu0 0.0
    %2952 = vmatpush.msra.mxu0 0.0
    %2953 = vmatpush.msra.mxu0 0.0
    %2954 = vmatpush.msra.mxu0 0.0
    %2955 = vmatpush.msra.mxu0 %v391
    %2956 = vmatpush.msra.mxu0 %v383
    %2957 = vmatpush.msra.mxu0 %v375
    %2958 = vmatpush.msra.mxu0 %v367
    %2959 = vmatmul.f32.gmra.mxu0 %v2846
    %v2960 = vpop.f32.mrf.mxu0
    %v2961 = vadd.f32 0.0, %v2960
    %2962 = vmatmul.f32.gmra.mxu0 %v2849
    %v2963 = vpop.f32.mrf.mxu0
    %v2964 = vadd.f32 0.0, %v2963
    %2965 = vdwg.mxu0
    %2966 = vmatpush.msra.mxu0 0.0
    %2967 = vmatpush.msra.mxu0 0.0
    %2968 = vmatpush.msra.mxu0 0.0
    %2969 = vmatpush.msra.mxu0 0.0
    %2970 = vmatpush.msra.mxu0 0.0
    %2971 = vmatpush.msra.mxu0 0.0
    %2972 = vmatpush.msra.mxu0 0.0
    %2973 = vmatpush.msra.mxu0 0.0
    %2974 = vmatpush.msra.mxu0 0.0
    %2975 = vmatpush.msra.mxu0 0.0
    %2976 = vmatpush.msra.mxu0 0.0
    %2977 = vmatpush.msra.mxu0 0.0
    %2978 = vmatpush.msra.mxu0 %v392
    %2979 = vmatpush.msra.mxu0 %v384
    %2980 = vmatpush.msra.mxu0 %v376
    %2981 = vmatpush.msra.mxu0 %v368
    %2982 = vmatmul.f32.gmra.mxu0 %v2846
    %v2983 = vpop.f32.mrf.mxu0
    %v2984 = vadd.f32 0.0, %v2983
    %2985 = vmatmul.f32.gmra.mxu0 %v2849
    %v2986 = vpop.f32.mrf.mxu0
    %v2987 = vadd.f32 0.0, %v2986
    %2988 = vdwg.mxu0
    %2989 = vmatpush.msra.mxu0 0.0
    %2990 = vmatpush.msra.mxu0 0.0
    %2991 = vmatpush.msra.mxu0 0.0
    %2992 = vmatpush.msra.mxu0 0.0
    %2993 = vmatpush.msra.mxu0 0.0
    %2994 = vmatpush.msra.mxu0 0.0
    %2995 = vmatpush.msra.mxu0 0.0
    %2996 = vmatpush.msra.mxu0 0.0
    %2997 = vmatpush.msra.mxu0 0.0
    %2998 = vmatpush.msra.mxu0 0.0
    %2999 = vmatpush.msra.mxu0 0.0
    %3000 = vmatpush.msra.mxu0 0.0
    %3001 = vmatpush.msra.mxu0 %v393
    %3002 = vmatpush.msra.mxu0 %v385
    %3003 = vmatpush.msra.mxu0 %v377
    %3004 = vmatpush.msra.mxu0 %v369
    %3005 = vmatmul.f32.gmra.mxu0 %v2846
    %v3006 = vpop.f32.mrf.mxu0
    %v3007 = vadd.f32 0.0, %v3006
    %3008 = vmatmul.f32.gmra.mxu0 %v2849
    %v3009 = vpop.f32.mrf.mxu0
    %v3010 = vadd.f32 0.0, %v3009
    %3011 = vdwg.mxu0
    %3012 = vmatpush.msra.mxu0 0.0
    %3013 = vmatpush.msra.mxu0 0.0
    %3014 = vmatpush.msra.mxu0 0.0
    %3015 = vmatpush.msra.mxu0 0.0
    %3016 = vmatpush.msra.mxu0 0.0
    %3017 = vmatpush.msra.mxu0 0.0
    %3018 = vmatpush.msra.mxu0 0.0
    %3019 = vmatpush.msra.mxu0 0.0
    %3020 = vmatpush.msra.mxu0 0.0
    %3021 = vmatpush.msra.mxu0 0.0
    %3022 = vmatpush.msra.mxu0 0.0
    %3023 = vmatpush.msra.mxu0 0.0
    %3024 = vmatpush.msra.mxu0 %v394
    %3025 = vmatpush.msra.mxu0 %v386
    %3026 = vmatpush.msra.mxu0 %v378
    %3027 = vmatpush.msra.mxu0 %v370
    %3028 = vmatmul.f32.gmra.mxu0 %v2846
    %v3029 = vpop.f32.mrf.mxu0
    %v3030 = vadd.f32 0.0, %v3029
    %3031 = vmatmul.f32.gmra.mxu0 %v2849
    %v3032 = vpop.f32.mrf.mxu0
    %v3033 = vadd.f32 0.0, %v3032
    %3034 = vdwg.mxu0
    %v3035 = vmul.f32 %v2869, %v965
    %v3036 = vmul.f32 %v2892, %v988
    %v3037 = vmul.f32 %v2915, %v1011
    %v3038 = vmul.f32 %v2938, %v1034
    %v3039 = vmul.f32 %v2961, %v1057
    %v3040 = vmul.f32 %v2984, %v1080
    %v3041 = vmul.f32 %v3007, %v1103
    %v3042 = vmul.f32 %v3030, %v1126
    %v3043 = vmul.f32 %v2872, %v968
    %v3044 = vmul.f32 %v2895, %v991
    %v3045 = vmul.f32 %v2918, %v1014
    %v3046 = vmul.f32 %v2941, %v1037
    %v3047 = vmul.f32 %v2964, %v1060
    %v3048 = vmul.f32 %v2987, %v1083
    %v3049 = vmul.f32 %v3010, %v1106
    %v3050 = vmul.f32 %v3033, %v1129
    %3051 = vmatpush.msra.mxu0 %v410
    %3052 = vmatpush.msra.mxu0 %v409
    %3053 = vmatpush.msra.mxu0 %v408
    %3054 = vmatpush.msra.mxu0 %v407
    %3055 = vmatpush.msra.mxu0 %v406
    %3056 = vmatpush.msra.mxu0 %v405
    %3057 = vmatpush.msra.mxu0 %v404
    %3058 = vmatpush.msra.mxu0 %v403
    %3059 = vmatpush.msra.mxu0 %v402
    %3060 = vmatpush.msra.mxu0 %v401
    %3061 = vmatpush.msra.mxu0 %v400
    %3062 = vmatpush.msra.mxu0 %v399
    %3063 = vmatpush.msra.mxu0 %v398
    %3064 = vmatpush.msra.mxu0 %v397
    %3065 = vmatpush.msra.mxu0 %v396
    %3066 = vmatpush.msra.mxu0 %v395
    %3067 = vmatmul.f32.gmra.mxu0 %v3035
    %v3068 = vpop.f32.mrf.mxu0
    %v3069 = vadd.f32 0.0, %v3068
    %3070 = vmatmul.f32.gmra.mxu0 %v3043
    %v3071 = vpop.f32.mrf.mxu0
    %v3072 = vadd.f32 0.0, %v3071
    %3073 = vdwg.mxu0
    %3074 = vmatpush.msra.mxu0 %v426
    %3075 = vmatpush.msra.mxu0 %v425
    %3076 = vmatpush.msra.mxu0 %v424
    %3077 = vmatpush.msra.mxu0 %v423
    %3078 = vmatpush.msra.mxu0 %v422
    %3079 = vmatpush.msra.mxu0 %v421
    %3080 = vmatpush.msra.mxu0 %v420
    %3081 = vmatpush.msra.mxu0 %v419
    %3082 = vmatpush.msra.mxu0 %v418
    %3083 = vmatpush.msra.mxu0 %v417
    %3084 = vmatpush.msra.mxu0 %v416
    %3085 = vmatpush.msra.mxu0 %v415
    %3086 = vmatpush.msra.mxu0 %v414
    %3087 = vmatpush.msra.mxu0 %v413
    %3088 = vmatpush.msra.mxu0 %v412
    %3089 = vmatpush.msra.mxu0 %v411
    %3090 = vmatmul.f32.gmra.mxu0 %v3036
    %v3091 = vpop.f32.mrf.mxu0
    %v3092 = vadd.f32 %v3069, %v3091
    %3093 = vmatmul.f32.gmra.mxu0 %v3044
    %v3094 = vpop.f32.mrf.mxu0
    %v3095 = vadd.f32 %v3072, %v3094
    %3096 = vdwg.mxu0
    %3097 = vmatpush.msra.mxu0 %v442
    %3098 = vmatpush.msra.mxu0 %v441
    %3099 = vmatpush.msra.mxu0 %v440
    %3100 = vmatpush.msra.mxu0 %v439
    %3101 = vmatpush.msra.mxu0 %v438
    %3102 = vmatpush.msra.mxu0 %v437
    %3103 = vmatpush.msra.mxu0 %v436
    %3104 = vmatpush.msra.mxu0 %v435
    %3105 = vmatpush.msra.mxu0 %v434
    %3106 = vmatpush.msra.mxu0 %v433
    %3107 = vmatpush.msra.mxu0 %v432
    %3108 = vmatpush.msra.mxu0 %v431
    %3109 = vmatpush.msra.mxu0 %v430
    %3110 = vmatpush.msra.mxu0 %v429
    %3111 = vmatpush.msra.mxu0 %v428
    %3112 = vmatpush.msra.mxu0 %v427
    %3113 = vmatmul.f32.gmra.mxu0 %v3037
    %v3114 = vpop.f32.mrf.mxu0
    %v3115 = vadd.f32 %v3092, %v3114
    %3116 = vmatmul.f32.gmra.mxu0 %v3045
    %v3117 = vpop.f32.mrf.mxu0
    %v3118 = vadd.f32 %v3095, %v3117
    %3119 = vdwg.mxu0
    %3120 = vmatpush.msra.mxu0 %v458
    %3121 = vmatpush.msra.mxu0 %v457
    %3122 = vmatpush.msra.mxu0 %v456
    %3123 = vmatpush.msra.mxu0 %v455
    %3124 = vmatpush.msra.mxu0 %v454
    %3125 = vmatpush.msra.mxu0 %v453
    %3126 = vmatpush.msra.mxu0 %v452
    %3127 = vmatpush.msra.mxu0 %v451
    %3128 = vmatpush.msra.mxu0 %v450
    %3129 = vmatpush.msra.mxu0 %v449
    %3130 = vmatpush.msra.mxu0 %v448
    %3131 = vmatpush.msra.mxu0 %v447
    %3132 = vmatpush.msra.mxu0 %v446
    %3133 = vmatpush.msra.mxu0 %v445
    %3134 = vmatpush.msra.mxu0 %v444
    %3135 = vmatpush.msra.mxu0 %v443
    %3136 = vmatmul.f32.gmra.mxu0 %v3038
    %v3137 = vpop.f32.mrf.mxu0
    %v3138 = vadd.f32 %v3115, %v3137
    %3139 = vmatmul.f32.gmra.mxu0 %v3046
    %v3140 = vpop.f32.mrf.mxu0
    %v3141 = vadd.f32 %v3118, %v3140
    %3142 = vdwg.mxu0
    %3143 = vmatpush.msra.mxu0 %v474
    %3144 = vmatpush.msra.mxu0 %v473
    %3145 = vmatpush.msra.mxu0 %v472
    %3146 = vmatpush.msra.mxu0 %v471
    %3147 = vmatpush.msra.mxu0 %v470
    %3148 = vmatpush.msra.mxu0 %v469
    %3149 = vmatpush.msra.mxu0 %v468
    %3150 = vmatpush.msra.mxu0 %v467
    %3151 = vmatpush.msra.mxu0 %v466
    %3152 = vmatpush.msra.mxu0 %v465
    %3153 = vmatpush.msra.mxu0 %v464
    %3154 = vmatpush.msra.mxu0 %v463
    %3155 = vmatpush.msra.mxu0 %v462
    %3156 = vmatpush.msra.mxu0 %v461
    %3157 = vmatpush.msra.mxu0 %v460
    %3158 = vmatpush.msra.mxu0 %v459
    %3159 = vmatmul.f32.gmra.mxu0 %v3039
    %v3160 = vpop.f32.mrf.mxu0
    %v3161 = vadd.f32 %v3138, %v3160
    %3162 = vmatmul.f32.gmra.mxu0 %v3047
    %v3163 = vpop.f32.mrf.mxu0
    %v3164 = vadd.f32 %v3141, %v3163
    %3165 = vdwg.mxu0
    %3166 = vmatpush.msra.mxu0 %v490
    %3167 = vmatpush.msra.mxu0 %v489
    %3168 = vmatpush.msra.mxu0 %v488
    %3169 = vmatpush.msra.mxu0 %v487
    %3170 = vmatpush.msra.mxu0 %v486
    %3171 = vmatpush.msra.mxu0 %v485
    %3172 = vmatpush.msra.mxu0 %v484
    %3173 = vmatpush.msra.mxu0 %v483
    %3174 = vmatpush.msra.mxu0 %v482
    %3175 = vmatpush.msra.mxu0 %v481
    %3176 = vmatpush.msra.mxu0 %v480
    %3177 = vmatpush.msra.mxu0 %v479
    %3178 = vmatpush.msra.mxu0 %v478
    %3179 = vmatpush.msra.mxu0 %v477
    %3180 = vmatpush.msra.mxu0 %v476
    %3181 = vmatpush.msra.mxu0 %v475
    %3182 = vmatmul.f32.gmra.mxu0 %v3040
    %v3183 = vpop.f32.mrf.mxu0
    %v3184 = vadd.f32 %v3161, %v3183
    %3185 = vmatmul.f32.gmra.mxu0 %v3048
    %v3186 = vpop.f32.mrf.mxu0
    %v3187 = vadd.f32 %v3164, %v3186
    %3188 = vdwg.mxu0
    %3189 = vmatpush.msra.mxu0 %v506
    %3190 = vmatpush.msra.mxu0 %v505
    %3191 = vmatpush.msra.mxu0 %v504
    %3192 = vmatpush.msra.mxu0 %v503
    %3193 = vmatpush.msra.mxu0 %v502
    %3194 = vmatpush.msra.mxu0 %v501
    %3195 = vmatpush.msra.mxu0 %v500
    %3196 = vmatpush.msra.mxu0 %v499
    %3197 = vmatpush.msra.mxu0 %v498
    %3198 = vmatpush.msra.mxu0 %v497
    %3199 = vmatpush.msra.mxu0 %v496
    %3200 = vmatpush.msra.mxu0 %v495
    %3201 = vmatpush.msra.mxu0 %v494
    %3202 = vmatpush.msra.mxu0 %v493
    %3203 = vmatpush.msra.mxu0 %v492
    %3204 = vmatpush.msra.mxu0 %v491
    %3205 = vmatmul.f32.gmra.mxu0 %v3041
    %v3206 = vpop.f32.mrf.mxu0
    %v3207 = vadd.f32 %v3184, %v3206
    %3208 = vmatmul.f32.gmra.mxu0 %v3049
    %v3209 = vpop.f32.mrf.mxu0
    %v3210 = vadd.f32 %v3187, %v3209
    %3211 = vdwg.mxu0
    %3212 = vmatpush.msra.mxu0 %v522
    %3213 = vmatpush.msra.mxu0 %v521
    %3214 = vmatpush.msra.mxu0 %v520
    %3215 = vmatpush.msra.mxu0 %v519
    %3216 = vmatpush.msra.mxu0 %v518
    %3217 = vmatpush.msra.mxu0 %v517
    %3218 = vmatpush.msra.mxu0 %v516
    %3219 = vmatpush.msra.mxu0 %v515
    %3220 = vmatpush.msra.mxu0 %v514
    %3221 = vmatpush.msra.mxu0 %v513
    %3222 = vmatpush.msra.mxu0 %v512
    %3223 = vmatpush.msra.mxu0 %v511
    %3224 = vmatpush.msra.mxu0 %v510
    %3225 = vmatpush.msra.mxu0 %v509
    %3226 = vmatpush.msra.mxu0 %v508
    %3227 = vmatpush.msra.mxu0 %v507
    %3228 = vmatmul.f32.gmra.mxu0 %v3042
    %v3229 = vpop.f32.mrf.mxu0
    %v3230 = vadd.f32 %v3207, %v3229
    %3231 = vmatmul.f32.gmra.mxu0 %v3050
    %v3232 = vpop.f32.mrf.mxu0
    %v3233 = vadd.f32 %v3210, %v3232
    %3234 = vdwg.mxu0
    %v3236 = vsel %vm1135, %v3233, 0
    %3238 = vmatpush.msra.mxu0 0.0
    %3239 = vmatpush.msra.mxu0 0.0
    %3240 = vmatpush.msra.mxu0 0.0
    %3241 = vmatpush.msra.mxu0 0.0
    %3242 = vmatpush.msra.mxu0 0.0
    %3243 = vmatpush.msra.mxu0 0.0
    %3244 = vmatpush.msra.mxu0 0.0
    %3245 = vmatpush.msra.mxu0 0.0
    %3246 = vmatpush.msra.mxu0 0.0
    %3247 = vmatpush.msra.mxu0 0.0
    %3248 = vmatpush.msra.mxu0 0.0
    %3249 = vmatpush.msra.mxu0 0.0
    %3250 = vmatpush.msra.mxu0 0.0
    %3251 = vmatpush.msra.mxu0 0.0
    %3252 = vmatpush.msra.mxu0 %v3236
    %3253 = vmatpush.msra.mxu0 %v3230
    %3254 = vmatmul.f32.gmra.mxu0 %v1945
    %v3255 = vpop.f32.mrf.mxu0
    %v3256 = vadd.f32 %v1941, %v3255
    %3257 = vdwg.mxu0
    %3258 = vmatpush.msra.mxu0 0.0
    %3259 = vmatpush.msra.mxu0 0.0
    %3260 = vmatpush.msra.mxu0 0.0
    %3261 = vmatpush.msra.mxu0 0.0
    %3262 = vmatpush.msra.mxu0 0.0
    %3263 = vmatpush.msra.mxu0 0.0
    %3264 = vmatpush.msra.mxu0 0.0
    %3265 = vmatpush.msra.mxu0 0.0
    %3266 = vmatpush.msra.mxu0 0.0
    %3267 = vmatpush.msra.mxu0 0.0
    %3268 = vmatpush.msra.mxu0 0.0
    %3269 = vmatpush.msra.mxu0 0.0
    %3270 = vmatpush.msra.mxu0 0.0
    %3271 = vmatpush.msra.mxu0 0.0
    %3272 = vmatpush.msra.mxu0 0.0
    %3273 = vmatpush.msra.mxu0 %v3256
    %3274 = vmatmul.f32.gmra.mxu0 %v1971
    %v3275 = vpop.f32.mrf.mxu0
    %v3276 = vadd.f32 0.0, %v3275
    %3277 = vdwg.mxu0
    %v3278 = vsel %vm664, %v2441, 0
    %3280 = vmatpush.msra.mxu0 0.0
    %3281 = vmatpush.msra.mxu0 0.0
    %3282 = vmatpush.msra.mxu0 0.0
    %3283 = vmatpush.msra.mxu0 0.0
    %3284 = vmatpush.msra.mxu0 0.0
    %3285 = vmatpush.msra.mxu0 0.0
    %3286 = vmatpush.msra.mxu0 0.0
    %3287 = vmatpush.msra.mxu0 0.0
    %3288 = vmatpush.msra.mxu0 0.0
    %3289 = vmatpush.msra.mxu0 0.0
    %3290 = vmatpush.msra.mxu0 0.0
    %3291 = vmatpush.msra.mxu0 0.0
    %3292 = vmatpush.msra.mxu0 %v567
    %3293 = vmatpush.msra.mxu0 %v566
    %3294 = vmatpush.msra.mxu0 %v565
    %3295 = vmatpush.msra.mxu0 %v564
    %3296 = vmatmul.f32.gmra.mxu0 %v3278
    %v3297 = vpop.f32.mrf.mxu0
    %v3298 = vadd.f32 0.0, %v3297
    %3299 = vdwg.mxu0
    %v3301 = vsel %vm664, %v3276, 0
    %3303 = vmatpush.msra.mxu0 0.0
    %3304 = vmatpush.msra.mxu0 0.0
    %3305 = vmatpush.msra.mxu0 0.0
    %3306 = vmatpush.msra.mxu0 0.0
    %3307 = vmatpush.msra.mxu0 0.0
    %3308 = vmatpush.msra.mxu0 0.0
    %3309 = vmatpush.msra.mxu0 0.0
    %3310 = vmatpush.msra.mxu0 0.0
    %3311 = vmatpush.msra.mxu0 0.0
    %3312 = vmatpush.msra.mxu0 0.0
    %3313 = vmatpush.msra.mxu0 0.0
    %3314 = vmatpush.msra.mxu0 0.0
    %3315 = vmatpush.msra.mxu0 %v571
    %3316 = vmatpush.msra.mxu0 %v570
    %3317 = vmatpush.msra.mxu0 %v569
    %3318 = vmatpush.msra.mxu0 %v568
    %3319 = vmatmul.f32.gmra.mxu0 %v3301
    %v3320 = vpop.f32.mrf.mxu0
    %v3321 = vadd.f32 0.0, %v3320
    %3322 = vdwg.mxu0
    %v3324 = vsel %vm664, %v2816, 0
    %3326 = vmatpush.msra.mxu0 0.0
    %3327 = vmatpush.msra.mxu0 0.0
    %3328 = vmatpush.msra.mxu0 0.0
    %3329 = vmatpush.msra.mxu0 0.0
    %3330 = vmatpush.msra.mxu0 0.0
    %3331 = vmatpush.msra.mxu0 0.0
    %3332 = vmatpush.msra.mxu0 0.0
    %3333 = vmatpush.msra.mxu0 0.0
    %3334 = vmatpush.msra.mxu0 0.0
    %3335 = vmatpush.msra.mxu0 0.0
    %3336 = vmatpush.msra.mxu0 0.0
    %3337 = vmatpush.msra.mxu0 0.0
    %3338 = vmatpush.msra.mxu0 %v571
    %3339 = vmatpush.msra.mxu0 %v570
    %3340 = vmatpush.msra.mxu0 %v569
    %3341 = vmatpush.msra.mxu0 %v568
    %3342 = vmatmul.f32.gmra.mxu0 %v3324
    %v3343 = vpop.f32.mrf.mxu0
    %v3344 = vadd.f32 0.0, %v3343
    %3345 = vdwg.mxu0
    %3346 = vmatpush.msra.mxu0 0.0
    %3347 = vmatpush.msra.mxu0 0.0
    %3348 = vmatpush.msra.mxu0 0.0
    %3349 = vmatpush.msra.mxu0 0.0
    %3350 = vmatpush.msra.mxu0 0.0
    %3351 = vmatpush.msra.mxu0 0.0
    %3352 = vmatpush.msra.mxu0 0.0
    %3353 = vmatpush.msra.mxu0 0.0
    %3354 = vmatpush.msra.mxu0 0.0
    %3355 = vmatpush.msra.mxu0 0.0
    %3356 = vmatpush.msra.mxu0 0.0
    %3357 = vmatpush.msra.mxu0 0.0
    %3358 = vmatpush.msra.mxu0 %v575
    %3359 = vmatpush.msra.mxu0 %v574
    %3360 = vmatpush.msra.mxu0 %v573
    %3361 = vmatpush.msra.mxu0 %v572
    %3362 = vmatmul.f32.gmra.mxu0 %v3301
    %v3363 = vpop.f32.mrf.mxu0
    %v3364 = vadd.f32 0.0, %v3363
    %3365 = vdwg.mxu0
    %3366 = vmatpush.msra.mxu0 0.0
    %3367 = vmatpush.msra.mxu0 0.0
    %3368 = vmatpush.msra.mxu0 0.0
    %3369 = vmatpush.msra.mxu0 0.0
    %3370 = vmatpush.msra.mxu0 0.0
    %3371 = vmatpush.msra.mxu0 0.0
    %3372 = vmatpush.msra.mxu0 0.0
    %3373 = vmatpush.msra.mxu0 0.0
    %3374 = vmatpush.msra.mxu0 0.0
    %3375 = vmatpush.msra.mxu0 0.0
    %3376 = vmatpush.msra.mxu0 0.0
    %3377 = vmatpush.msra.mxu0 0.0
    %3378 = vmatpush.msra.mxu0 %v575
    %3379 = vmatpush.msra.mxu0 %v574
    %3380 = vmatpush.msra.mxu0 %v573
    %3381 = vmatpush.msra.mxu0 %v572
    %3382 = vmatmul.f32.gmra.mxu0 %v3324
    %v3383 = vpop.f32.mrf.mxu0
    %v3384 = vadd.f32 0.0, %v3383
    %3385 = vdwg.mxu0
    %v3386 = vmul.f32 %v3298, %v3321
    %v3388 = vsel %vm664, %v3386, 0
    %3390 = vmatpush.msra.mxu0 0.0
    %3391 = vmatpush.msra.mxu0 0.0
    %3392 = vmatpush.msra.mxu0 0.0
    %3393 = vmatpush.msra.mxu0 0.0
    %3394 = vmatpush.msra.mxu0 0.0
    %3395 = vmatpush.msra.mxu0 0.0
    %3396 = vmatpush.msra.mxu0 0.0
    %3397 = vmatpush.msra.mxu0 0.0
    %3398 = vmatpush.msra.mxu0 0.0
    %3399 = vmatpush.msra.mxu0 0.0
    %3400 = vmatpush.msra.mxu0 0.0
    %3401 = vmatpush.msra.mxu0 0.0
    %3402 = vmatpush.msra.mxu0 %v526
    %3403 = vmatpush.msra.mxu0 %v525
    %3404 = vmatpush.msra.mxu0 %v524
    %3405 = vmatpush.msra.mxu0 %v523
    %3406 = vmatmul.f32.gmra.mxu0 %v3388
    %v3407 = vpop.f32.mrf.mxu0
    %v3408 = vadd.f32 0.0, %v3407
    %3409 = vdwg.mxu0
    %v3410 = vmul.f32 %v3408, 0.125
    %v3411 = vmul.f32 %v3298, %v3344
    %v3413 = vsel %vm664, %v3411, 0
    %3415 = vmatpush.msra.mxu0 0.0
    %3416 = vmatpush.msra.mxu0 0.0
    %3417 = vmatpush.msra.mxu0 0.0
    %3418 = vmatpush.msra.mxu0 0.0
    %3419 = vmatpush.msra.mxu0 0.0
    %3420 = vmatpush.msra.mxu0 0.0
    %3421 = vmatpush.msra.mxu0 0.0
    %3422 = vmatpush.msra.mxu0 0.0
    %3423 = vmatpush.msra.mxu0 0.0
    %3424 = vmatpush.msra.mxu0 0.0
    %3425 = vmatpush.msra.mxu0 0.0
    %3426 = vmatpush.msra.mxu0 0.0
    %3427 = vmatpush.msra.mxu0 %v526
    %3428 = vmatpush.msra.mxu0 %v525
    %3429 = vmatpush.msra.mxu0 %v524
    %3430 = vmatpush.msra.mxu0 %v523
    %3431 = vmatmul.f32.gmra.mxu0 %v3413
    %v3432 = vpop.f32.mrf.mxu0
    %v3433 = vadd.f32 0.0, %v3432
    %3434 = vdwg.mxu0
    %v3435 = vmul.f32 %v3433, 0.125
    %v3436 = vmax.f32 %v3410, %v3435
    %v3437 = vsub.f32 %v3410, %v3436
    %v3438 = vmul.f32 %v3437, 1.442695
    %v3439 = vpow.pop %v3438
    %v3440 = vsub.f32 %v3435, %v3436
    %v3441 = vmul.f32 %v3440, 1.442695
    %v3442 = vpow.pop %v3441
    %v3443 = vadd.f32 %v3439, %v3442
    %v3444 = vrcp.pop %v3443
    %v3445 = vmul.f32 %v3443, %v3444
    %v3446 = vsub.f32 1.0, %v3445
    %v3447 = vmul.f32 %v3444, %v3446
    %v3448 = vadd.f32 %v3444, %v3447
    %vm3449 = vweird.f32 %v3443
    %vm3450 = vweird.f32 %v3444
    %vm3451 = vmor %vm3449, %vm3450
    %v3452 = vsel %vm3451, %v3444, %v3448
    %v3453 = vand.u32 2147483647, %v3443
    %vm3454 = vcmp.eq.f32.partialorder %v3453, 8.507059e+37
    %v3455 = vand.u32 %v3443, 2147483648
    %v3456 = vor.u32 1.1754944e-38, %v3455
    %v3457 = vsel %vm3454, %v3456, %v3452
    %v3458 = vmul.f32 1.0, %v3457
    %v3459 = vmul.f32 %v3439, %v3458
    %v3461 = vsel %vm1131, %v3459, 0
    %3463 = vmatpush.msra.mxu0 0.0
    %3464 = vmatpush.msra.mxu0 0.0
    %3465 = vmatpush.msra.mxu0 0.0
    %3466 = vmatpush.msra.mxu0 0.0
    %3467 = vmatpush.msra.mxu0 0.0
    %3468 = vmatpush.msra.mxu0 0.0
    %3469 = vmatpush.msra.mxu0 0.0
    %3470 = vmatpush.msra.mxu0 0.0
    %3471 = vmatpush.msra.mxu0 0.0
    %3472 = vmatpush.msra.mxu0 0.0
    %3473 = vmatpush.msra.mxu0 0.0
    %3474 = vmatpush.msra.mxu0 0.0
    %3475 = vmatpush.msra.mxu0 0.0
    %3476 = vmatpush.msra.mxu0 0.0
    %3477 = vmatpush.msra.mxu0 0.0
    %3478 = vmatpush.msra.mxu0 %v2179
    %3479 = vmatmul.f32.gmra.mxu0 %v3461
    %v3480 = vpop.f32.mrf.mxu0
    %v3481 = vadd.f32 0.0, %v3480
    %3482 = vdwg.mxu0
    %v3483 = vmul.f32 %v3442, %v3458
    %v3485 = vsel %vm1131, %v3483, 0
    %3487 = vmatpush.msra.mxu0 0.0
    %3488 = vmatpush.msra.mxu0 0.0
    %3489 = vmatpush.msra.mxu0 0.0
    %3490 = vmatpush.msra.mxu0 0.0
    %3491 = vmatpush.msra.mxu0 0.0
    %3492 = vmatpush.msra.mxu0 0.0
    %3493 = vmatpush.msra.mxu0 0.0
    %3494 = vmatpush.msra.mxu0 0.0
    %3495 = vmatpush.msra.mxu0 0.0
    %3496 = vmatpush.msra.mxu0 0.0
    %3497 = vmatpush.msra.mxu0 0.0
    %3498 = vmatpush.msra.mxu0 0.0
    %3499 = vmatpush.msra.mxu0 0.0
    %3500 = vmatpush.msra.mxu0 0.0
    %3501 = vmatpush.msra.mxu0 0.0
    %3502 = vmatpush.msra.mxu0 %v2179
    %3503 = vmatmul.f32.gmra.mxu0 %v3485
    %v3504 = vpop.f32.mrf.mxu0
    %v3505 = vadd.f32 0.0, %v3504
    %3506 = vdwg.mxu0
    %v3507 = vmul.f32 %v3481, %v3364
    %v3508 = vmul.f32 %v3505, %v3384
    %v3509 = vadd.f32 %v3507, %v3508
    %v3511 = vsel %vm664, %v3509, 0
    %3513 = vmatpush.msra.mxu0 0.0
    %3514 = vmatpush.msra.mxu0 0.0
    %3515 = vmatpush.msra.mxu0 0.0
    %3516 = vmatpush.msra.mxu0 0.0
    %3517 = vmatpush.msra.mxu0 0.0
    %3518 = vmatpush.msra.mxu0 0.0
    %3519 = vmatpush.msra.mxu0 0.0
    %3520 = vmatpush.msra.mxu0 0.0
    %3521 = vmatpush.msra.mxu0 0.0
    %3522 = vmatpush.msra.mxu0 0.0
    %3523 = vmatpush.msra.mxu0 0.0
    %3524 = vmatpush.msra.mxu0 0.0
    %3525 = vmatpush.msra.mxu0 %v579
    %3526 = vmatpush.msra.mxu0 %v578
    %3527 = vmatpush.msra.mxu0 %v577
    %3528 = vmatpush.msra.mxu0 %v576
    %3529 = vmatmul.f32.gmra.mxu0 %v3511
    %v3530 = vpop.f32.mrf.mxu0
    %v3531 = vadd.f32 %v2229, %v3530
    %3532 = vdwg.mxu0
    %v3534 = vsel %vm664, %v3531, 0
    %3536 = vmatpush.msra.mxu0 0.0
    %3537 = vmatpush.msra.mxu0 0.0
    %3538 = vmatpush.msra.mxu0 0.0
    %3539 = vmatpush.msra.mxu0 0.0
    %3540 = vmatpush.msra.mxu0 0.0
    %3541 = vmatpush.msra.mxu0 0.0
    %3542 = vmatpush.msra.mxu0 0.0
    %3543 = vmatpush.msra.mxu0 0.0
    %3544 = vmatpush.msra.mxu0 0.0
    %3545 = vmatpush.msra.mxu0 0.0
    %3546 = vmatpush.msra.mxu0 0.0
    %3547 = vmatpush.msra.mxu0 0.0
    %3548 = vmatpush.msra.mxu0 %v584
    %3549 = vmatpush.msra.mxu0 %v583
    %3550 = vmatpush.msra.mxu0 %v582
    %3551 = vmatpush.msra.mxu0 %v581
    %3552 = vmatmul.f32.gmra.mxu0 %v3534
    %v3553 = vpop.f32.mrf.mxu0
    %v3554 = vadd.f32 %v2255, %v3553
    %3555 = vdwg.mxu0
    %3556 = vmatpush.msra.mxu0 0.0
    %3557 = vmatpush.msra.mxu0 0.0
    %3558 = vmatpush.msra.mxu0 0.0
    %3559 = vmatpush.msra.mxu0 0.0
    %3560 = vmatpush.msra.mxu0 0.0
    %3561 = vmatpush.msra.mxu0 0.0
    %3562 = vmatpush.msra.mxu0 0.0
    %3563 = vmatpush.msra.mxu0 0.0
    %3564 = vmatpush.msra.mxu0 0.0
    %3565 = vmatpush.msra.mxu0 0.0
    %3566 = vmatpush.msra.mxu0 0.0
    %3567 = vmatpush.msra.mxu0 0.0
    %3568 = vmatpush.msra.mxu0 %v588
    %3569 = vmatpush.msra.mxu0 %v587
    %3570 = vmatpush.msra.mxu0 %v586
    %3571 = vmatpush.msra.mxu0 %v585
    %3572 = vmatmul.f32.gmra.mxu0 %v3278
    %v3573 = vpop.f32.mrf.mxu0
    %v3574 = vadd.f32 %v2281, %v3573
    %3575 = vdwg.mxu0
    %v3576 = vadd.f32 %v3554, %v3574
    %v3577 = vxor.u32 %v3576, 2147483648
    %v3578 = vmul.f32 %v3577, 1.442695
    %v3579 = vpow.pop %v3578
    %v3580 = vadd.f32 %v3579, 1.0
    %v3581 = vrcp.pop %v3580
    %v3582 = vmul.f32 %v3580, %v3581
    %v3583 = vsub.f32 1.0, %v3582
    %v3584 = vmul.f32 %v3581, %v3583
    %v3585 = vadd.f32 %v3581, %v3584
    %vm3586 = vweird.f32 %v3580
    %vm3587 = vweird.f32 %v3581
    %vm3588 = vmor %vm3586, %vm3587
    %v3589 = vsel %vm3588, %v3581, %v3585
    %v3590 = vand.u32 2147483647, %v3580
    %vm3591 = vcmp.eq.f32.partialorder %v3590, 8.507059e+37
    %v3592 = vand.u32 %v3580, 2147483648
    %v3593 = vor.u32 1.1754944e-38, %v3592
    %v3594 = vsel %vm3591, %v3593, %v3589
    %v3595 = vmul.f32 1.0, %v3594
    %3597 = vrot.lane.b32.xlu0 %v3574, 64
    %v3598 = vpop.permute.xlu0 %3597
    %v3600 = vmul.f32 %v3595, %v3598
    %3602 = vrot.lane.b32.xlu0 %v3600, 64
    %v3603 = vpop.permute.xlu0 %3602
    %v3605 = vadd.f32 %v3554, %v3603
    %v3606 = vtanh.pop %v3605
    %v3607 = vsub.f32 1.0, %v3595
    %3609 = vrot.lane.b32.xlu0 %v3606, 96
    %v3610 = vpop.permute.xlu0 %3609
    %v3612 = vmul.f32 %v3607, %v3610
    %v3613 = vmul.f32 %v3595, %v2344
    %v3614 = vadd.f32 %v3612, %v3613
    %v3616 = vsel %vm664, %v3256, 0
    %3618 = vmatpush.msra.mxu0 0.0
    %3619 = vmatpush.msra.mxu0 0.0
    %3620 = vmatpush.msra.mxu0 0.0
    %3621 = vmatpush.msra.mxu0 0.0
    %3622 = vmatpush.msra.mxu0 0.0
    %3623 = vmatpush.msra.mxu0 0.0
    %3624 = vmatpush.msra.mxu0 0.0
    %3625 = vmatpush.msra.mxu0 0.0
    %3626 = vmatpush.msra.mxu0 0.0
    %3627 = vmatpush.msra.mxu0 0.0
    %3628 = vmatpush.msra.mxu0 0.0
    %3629 = vmatpush.msra.mxu0 0.0
    %3630 = vmatpush.msra.mxu0 %v594
    %3631 = vmatpush.msra.mxu0 %v593
    %3632 = vmatpush.msra.mxu0 %v592
    %3633 = vmatpush.msra.mxu0 %v591
    %3634 = vmatmul.f32.gmra.mxu0 %v3616
    %v3635 = vpop.f32.mrf.mxu0
    %v3636 = vadd.f32 %v2346, %v3635
    %3637 = vdwg.mxu0
    %v3638 = vsel %vm664, %v2820, 0
    %3640 = vmatpush.msra.mxu0 0.0
    %3641 = vmatpush.msra.mxu0 0.0
    %3642 = vmatpush.msra.mxu0 0.0
    %3643 = vmatpush.msra.mxu0 0.0
    %3644 = vmatpush.msra.mxu0 0.0
    %3645 = vmatpush.msra.mxu0 0.0
    %3646 = vmatpush.msra.mxu0 0.0
    %3647 = vmatpush.msra.mxu0 0.0
    %3648 = vmatpush.msra.mxu0 0.0
    %3649 = vmatpush.msra.mxu0 0.0
    %3650 = vmatpush.msra.mxu0 0.0
    %3651 = vmatpush.msra.mxu0 0.0
    %3652 = vmatpush.msra.mxu0 %v598
    %3653 = vmatpush.msra.mxu0 %v597
    %3654 = vmatpush.msra.mxu0 %v596
    %3655 = vmatpush.msra.mxu0 %v595
    %3656 = vmatmul.f32.gmra.mxu0 %v3638
    %v3657 = vpop.f32.mrf.mxu0
    %v3658 = vadd.f32 %v2372, %v3657
    %3659 = vdwg.mxu0
    %v3660 = vadd.f32 %v3636, %v3658
    %v3661 = vxor.u32 %v3660, 2147483648
    %v3662 = vmul.f32 %v3661, 1.442695
    %v3663 = vpow.pop %v3662
    %v3664 = vadd.f32 %v3663, 1.0
    %v3665 = vrcp.pop %v3664
    %v3666 = vmul.f32 %v3664, %v3665
    %v3667 = vsub.f32 1.0, %v3666
    %v3668 = vmul.f32 %v3665, %v3667
    %v3669 = vadd.f32 %v3665, %v3668
    %vm3670 = vweird.f32 %v3664
    %vm3671 = vweird.f32 %v3665
    %vm3672 = vmor %vm3670, %vm3671
    %v3673 = vsel %vm3672, %v3665, %v3669
    %v3674 = vand.u32 2147483647, %v3664
    %vm3675 = vcmp.eq.f32.partialorder %v3674, 8.507059e+37
    %v3676 = vand.u32 %v3664, 2147483648
    %v3677 = vor.u32 1.1754944e-38, %v3676
    %v3678 = vsel %vm3675, %v3677, %v3673
    %v3679 = vmul.f32 1.0, %v3678
    %3681 = vrot.lane.b32.xlu0 %v3658, 64
    %v3682 = vpop.permute.xlu0 %3681
    %v3684 = vmul.f32 %v3679, %v3682
    %3686 = vrot.lane.b32.xlu0 %v3684, 64
    %v3687 = vpop.permute.xlu0 %3686
    %v3689 = vadd.f32 %v3636, %v3687
    %v3690 = vtanh.pop %v3689
    %v3691 = vsub.f32 1.0, %v3679
    %3693 = vrot.lane.b32.xlu0 %v3690, 96
    %v3694 = vpop.permute.xlu0 %3693
    %v3696 = vmul.f32 %v3691, %v3694
    %v3697 = vmul.f32 %v3679, %v2438
    %v3698 = vadd.f32 %v3696, %v3697
    %3700 = vset.pattern.permute.xlu0 0
    %3701 = vperm.xlu0 %3700, %v602
    %v3702 = vpop.permute.xlu0 %3701
    %v3704 = vperm.slane %v3702, 0
    %3706 = vrot.lane.b32.xlu0 %v3614, 96
    %v3707 = vpop.permute.xlu0 %3706
    %v3709 = vsel %vm664, %v601, 0
    %v3711 = vsel %vm664, %v3707, 0
    %3713 = vmatpush.xpose.msra.mxu0 0.0
    %3714 = vmatpush.xpose.msra.mxu0 0.0
    %3715 = vmatpush.xpose.msra.mxu0 0.0
    %3716 = vmatpush.xpose.msra.mxu0 0.0
    %3717 = vmatpush.xpose.msra.mxu0 0.0
    %3718 = vmatpush.xpose.msra.mxu0 0.0
    %3719 = vmatpush.xpose.msra.mxu0 0.0
    %3720 = vmatpush.xpose.msra.mxu0 0.0
    %3721 = vmatpush.xpose.msra.mxu0 0.0
    %3722 = vmatpush.xpose.msra.mxu0 0.0
    %3723 = vmatpush.xpose.msra.mxu0 0.0
    %3724 = vmatpush.xpose.msra.mxu0 0.0
    %3725 = vmatpush.xpose.msra.mxu0 0.0
    %3726 = vmatpush.xpose.msra.mxu0 0.0
    %3727 = vmatpush.xpose.msra.mxu0 0.0
    %3728 = vmatpush.xpose.msra.mxu0 %v3711
    %3729 = vmatmul.f32.gmra.mxu0 %v3709
    %v3730 = vpop.f32.mrf.mxu0
    %v3731 = vadd.f32 %v3704, %v3730
    %3732 = vdwg.mxu0
    %vm3733 = vcmp.gt.f32.partialorder %v360, 0.0
    %v3734 = vperm.slane %v3731, 0
    %v3735 = vsel %vm3733, %v3734, -1e+30
    %vm3736 = vcmask 25600
    %v3737 = vsel %vm3736, %v3735, -inf
    %3738 = vmax.xlane.f32.xlu0 %v3737
    %v3739 = vpop.xlane.xlu0 %3738
    %v3740 = vsub.f32 %v3734, %v3739
    %v3741 = vmin.f32 %v3740, 0.0
    %v3742 = vmul.f32 %v3741, 1.442695
    %v3743 = vpow.pop %v3742
    %v3744 = vsel %vm3733, %v3743, 0.0
    %v3745 = vsel %vm3736, %v3744, 0.0
    %3746 = vadd.xlane.f32.xlu0 %v3745
    %v3747 = vpop.xlane.xlu0 %3746
    %v3748 = vrcp.pop %v3747
    %v3749 = vmul.f32 %v3747, %v3748
    %v3750 = vsub.f32 1.0, %v3749
    %v3751 = vmul.f32 %v3748, %v3750
    %v3752 = vadd.f32 %v3748, %v3751
    %vm3753 = vweird.f32 %v3747
    %vm3754 = vweird.f32 %v3748
    %vm3755 = vmor %vm3753, %vm3754
    %v3756 = vsel %vm3755, %v3748, %v3752
    %v3757 = vand.u32 2147483647, %v3747
    %vm3758 = vcmp.eq.f32.partialorder %v3757, 8.507059e+37
    %v3759 = vand.u32 %v3747, 2147483648
    %v3760 = vor.u32 1.1754944e-38, %v3759
    %v3761 = vsel %vm3758, %v3760, %v3756
    %v3762 = vmul.f32 %v3744, %v3761
    %v3764 = vsel %vm1131, %v3762, 0
    %v3766 = vsel %vm1135, %v3707, 0
    %3768 = vmatpush.msra.mxu0 0.0
    %3769 = vmatpush.msra.mxu0 0.0
    %3770 = vmatpush.msra.mxu0 0.0
    %3771 = vmatpush.msra.mxu0 0.0
    %3772 = vmatpush.msra.mxu0 0.0
    %3773 = vmatpush.msra.mxu0 0.0
    %3774 = vmatpush.msra.mxu0 0.0
    %3775 = vmatpush.msra.mxu0 0.0
    %3776 = vmatpush.msra.mxu0 0.0
    %3777 = vmatpush.msra.mxu0 0.0
    %3778 = vmatpush.msra.mxu0 0.0
    %3779 = vmatpush.msra.mxu0 0.0
    %3780 = vmatpush.msra.mxu0 0.0
    %3781 = vmatpush.msra.mxu0 0.0
    %3782 = vmatpush.msra.mxu0 0.0
    %3783 = vmatpush.msra.mxu0 %v3766
    %3784 = vmatmul.f32.gmra.mxu0 %v3764
    %v3785 = vpop.f32.mrf.mxu0
    %v3786 = vadd.f32 0.0, %v3785
    %3787 = vdwg.mxu0
    %vm3788 = vcmp.gt.f32.partialorder %v362, 0.0
    %v3789 = vsel %vm3788, 1, 0
    %3790 = vset.pattern.permute.xlu0 0
    %3791 = vperm.xlu0 %3790, %v3789
    %v3792 = vpop.permute.xlu0 %3791
    %vm3793 = vcmp.eq.s32.totalorder %v3792, 1
    %v3794 = vsel %vm3793, %v3614, -1e+30
    %vm3795 = vcmask 519424
    %v3796 = vsel %vm3795, %v3794, -inf
    %v3797 = vrot.slane %v3796, 4
    %v3798 = vmax.f32 %v3796, %v3797
    %v3799 = vrot.slane %v3798, 2
    %v3800 = vmax.f32 %v3798, %v3799
    %v3801 = vrot.slane %v3800, 1
    %v3802 = vmax.f32 %v3800, %v3801
    %3803 = vset.pattern.permute.xlu0 1
    %3804 = vperm.xlu0 %3803, %v3789
    %v3805 = vpop.permute.xlu0 %3804
    %vm3806 = vcmp.eq.s32.totalorder %v3805, 1
    %v3807 = vsel %vm3806, %v3614, -1e+30
    %v3808 = vsel %vm3795, %v3807, -inf
    %v3809 = vrot.slane %v3808, 4
    %v3810 = vmax.f32 %v3808, %v3809
    %v3811 = vrot.slane %v3810, 2
    %v3812 = vmax.f32 %v3810, %v3811
    %v3813 = vrot.slane %v3812, 1
    %v3814 = vmax.f32 %v3812, %v3813
    %vm3815 = vcmask 1040384
    %v3816 = vsel %vm3815, %v3802, %v3814
    %3818 = vset.pattern.permute.xlu0 0
    %3819 = vperm.xlu0 %3818, %v604
    %v3820 = vpop.permute.xlu0 %3819
    %v3822 = vperm.slane %v3820, 0
    %3824 = vrot.lane.b32.xlu0 %v3698, 96
    %v3825 = vpop.permute.xlu0 %3824
    %v3827 = vsel %vm664, %v603, 0
    %v3829 = vsel %vm664, %v3825, 0
    %3831 = vmatpush.xpose.msra.mxu0 0.0
    %3832 = vmatpush.xpose.msra.mxu0 0.0
    %3833 = vmatpush.xpose.msra.mxu0 0.0
    %3834 = vmatpush.xpose.msra.mxu0 0.0
    %3835 = vmatpush.xpose.msra.mxu0 0.0
    %3836 = vmatpush.xpose.msra.mxu0 0.0
    %3837 = vmatpush.xpose.msra.mxu0 0.0
    %3838 = vmatpush.xpose.msra.mxu0 0.0
    %3839 = vmatpush.xpose.msra.mxu0 0.0
    %3840 = vmatpush.xpose.msra.mxu0 0.0
    %3841 = vmatpush.xpose.msra.mxu0 0.0
    %3842 = vmatpush.xpose.msra.mxu0 0.0
    %3843 = vmatpush.xpose.msra.mxu0 0.0
    %3844 = vmatpush.xpose.msra.mxu0 0.0
    %3845 = vmatpush.xpose.msra.mxu0 0.0
    %3846 = vmatpush.xpose.msra.mxu0 %v3829
    %3847 = vmatmul.f32.gmra.mxu0 %v3827
    %v3848 = vpop.f32.mrf.mxu0
    %v3849 = vadd.f32 %v3822, %v3848
    %3850 = vdwg.mxu0
    %vm3851 = vcmp.gt.f32.partialorder %v359, 0.0
    %v3852 = vperm.slane %v3849, 0
    %v3853 = vsel %vm3851, %v3852, -1e+30
    %vm3854 = vcmask 58368
    %v3855 = vsel %vm3854, %v3853, -inf
    %3856 = vmax.xlane.f32.xlu0 %v3855
    %v3857 = vpop.xlane.xlu0 %3856
    %v3858 = vsub.f32 %v3852, %v3857
    %v3859 = vmin.f32 %v3858, 0.0
    %v3860 = vmul.f32 %v3859, 1.442695
    %v3861 = vpow.pop %v3860
    %v3862 = vsel %vm3851, %v3861, 0.0
    %v3863 = vsel %vm3854, %v3862, 0.0
    %3864 = vadd.xlane.f32.xlu0 %v3863
    %v3865 = vpop.xlane.xlu0 %3864
    %v3866 = vrcp.pop %v3865
    %v3867 = vmul.f32 %v3865, %v3866
    %v3868 = vsub.f32 1.0, %v3867
    %v3869 = vmul.f32 %v3866, %v3868
    %v3870 = vadd.f32 %v3866, %v3869
    %vm3871 = vweird.f32 %v3865
    %vm3872 = vweird.f32 %v3866
    %vm3873 = vmor %vm3871, %vm3872
    %v3874 = vsel %vm3873, %v3866, %v3870
    %v3875 = vand.u32 2147483647, %v3865
    %vm3876 = vcmp.eq.f32.partialorder %v3875, 8.507059e+37
    %v3877 = vand.u32 %v3865, 2147483648
    %v3878 = vor.u32 1.1754944e-38, %v3877
    %v3879 = vsel %vm3876, %v3878, %v3874
    %v3880 = vmul.f32 %v3862, %v3879
    %v3883 = vsel %vm760, %v3880, 0
    %3885 = vmatpush.msra.mxu0 0.0
    %3886 = vmatpush.msra.mxu0 0.0
    %3887 = vmatpush.msra.mxu0 0.0
    %3888 = vmatpush.msra.mxu0 0.0
    %3889 = vmatpush.msra.mxu0 0.0
    %3890 = vmatpush.msra.mxu0 0.0
    %3891 = vmatpush.msra.mxu0 0.0
    %3892 = vmatpush.msra.mxu0 0.0
    %3893 = vmatpush.msra.mxu0 0.0
    %3894 = vmatpush.msra.mxu0 0.0
    %3895 = vmatpush.msra.mxu0 0.0
    %3896 = vmatpush.msra.mxu0 0.0
    %3897 = vmatpush.msra.mxu0 0.0
    %3898 = vmatpush.msra.mxu0 0.0
    %3899 = vmatpush.msra.mxu0 0.0
    %3900 = vmatpush.msra.mxu0 %v3825
    %3901 = vmatmul.f32.gmra.mxu0 %v3883
    %v3902 = vpop.f32.mrf.mxu0
    %v3903 = vadd.f32 0.0, %v3902
    %3904 = vdwg.mxu0
    %vm3905 = vcmp.gt.f32.partialorder %v361, 0.0
    %v3906 = vsel %vm3905, 1, 0
    %3907 = vset.pattern.permute.xlu0 0
    %3908 = vperm.xlu0 %3907, %v3906
    %v3909 = vpop.permute.xlu0 %3908
    %vm3910 = vcmp.eq.s32.totalorder %v3909, 1
    %v3911 = vsel %vm3910, %v3698, -1e+30
    %vm3912 = vcmask 523520
    %v3913 = vsel %vm3912, %v3911, -inf
    %v3914 = vrot.slane %v3913, 4
    %v3915 = vmax.f32 %v3913, %v3914
    %v3916 = vrot.slane %v3915, 2
    %v3917 = vmax.f32 %v3915, %v3916
    %v3918 = vrot.slane %v3917, 1
    %v3919 = vmax.f32 %v3917, %v3918
    %3920 = vset.pattern.permute.xlu0 1
    %3921 = vperm.xlu0 %3920, %v3906
    %v3922 = vpop.permute.xlu0 %3921
    %vm3923 = vcmp.eq.s32.totalorder %v3922, 1
    %v3924 = vsel %vm3923, %v3698, -1e+30
    %v3925 = vsel %vm3912, %v3924, -inf
    %v3926 = vrot.slane %v3925, 4
    %v3927 = vmax.f32 %v3925, %v3926
    %v3928 = vrot.slane %v3927, 2
    %v3929 = vmax.f32 %v3927, %v3928
    %v3930 = vrot.slane %v3929, 1
    %v3931 = vmax.f32 %v3929, %v3930
    %v3932 = vsel %vm3815, %v3919, %v3931
    %3934 = vrot.lane.b32.xlu0 %v3932, 96
    %v3935 = vpop.permute.xlu0 %3934
    %v3936 = vsel %vm664, %v3935, 0
    %3938 = vmatpush.msra.mxu0 0.0
    %3939 = vmatpush.msra.mxu0 0.0
    %3940 = vmatpush.msra.mxu0 0.0
    %3941 = vmatpush.msra.mxu0 0.0
    %3942 = vmatpush.msra.mxu0 0.0
    %3943 = vmatpush.msra.mxu0 0.0
    %3944 = vmatpush.msra.mxu0 0.0
    %3945 = vmatpush.msra.mxu0 0.0
    %3946 = vmatpush.msra.mxu0 0.0
    %3947 = vmatpush.msra.mxu0 0.0
    %3948 = vmatpush.msra.mxu0 0.0
    %3949 = vmatpush.msra.mxu0 0.0
    %3950 = vmatpush.msra.mxu0 %v612
    %3951 = vmatpush.msra.mxu0 %v611
    %3952 = vmatpush.msra.mxu0 %v610
    %3953 = vmatpush.msra.mxu0 %v609
    %3954 = vmatmul.f32.gmra.mxu0 %v3936
    %v3955 = vpop.f32.mrf.mxu0
    %v3956 = vadd.f32 0.0, %v3955
    %3957 = vdwg.mxu0
    %v3959 = vsel %vm664, %v3903, 0
    %3961 = vmatpush.msra.mxu0 0.0
    %3962 = vmatpush.msra.mxu0 0.0
    %3963 = vmatpush.msra.mxu0 0.0
    %3964 = vmatpush.msra.mxu0 0.0
    %3965 = vmatpush.msra.mxu0 0.0
    %3966 = vmatpush.msra.mxu0 0.0
    %3967 = vmatpush.msra.mxu0 0.0
    %3968 = vmatpush.msra.mxu0 0.0
    %3969 = vmatpush.msra.mxu0 0.0
    %3970 = vmatpush.msra.mxu0 0.0
    %3971 = vmatpush.msra.mxu0 0.0
    %3972 = vmatpush.msra.mxu0 0.0
    %3973 = vmatpush.msra.mxu0 %v608
    %3974 = vmatpush.msra.mxu0 %v607
    %3975 = vmatpush.msra.mxu0 %v606
    %3976 = vmatpush.msra.mxu0 %v605
    %3977 = vmatmul.f32.gmra.mxu0 %v3959
    %v3978 = vpop.f32.mrf.mxu0
    %v3979 = vadd.f32 %v3956, %v3978
    %3980 = vdwg.mxu0
    %v3982 = vsel %vm664, %v3786, 0
    %3984 = vmatpush.msra.mxu0 0.0
    %3985 = vmatpush.msra.mxu0 0.0
    %3986 = vmatpush.msra.mxu0 0.0
    %3987 = vmatpush.msra.mxu0 0.0
    %3988 = vmatpush.msra.mxu0 0.0
    %3989 = vmatpush.msra.mxu0 0.0
    %3990 = vmatpush.msra.mxu0 0.0
    %3991 = vmatpush.msra.mxu0 0.0
    %3992 = vmatpush.msra.mxu0 0.0
    %3993 = vmatpush.msra.mxu0 0.0
    %3994 = vmatpush.msra.mxu0 0.0
    %3995 = vmatpush.msra.mxu0 0.0
    %3996 = vmatpush.msra.mxu0 %v616
    %3997 = vmatpush.msra.mxu0 %v615
    %3998 = vmatpush.msra.mxu0 %v614
    %3999 = vmatpush.msra.mxu0 %v613
    %4000 = vmatmul.f32.gmra.mxu0 %v3982
    %v4001 = vpop.f32.mrf.mxu0
    %v4002 = vadd.f32 0.0, %v4001
    %4003 = vdwg.mxu0
    %v4004 = vadd.f32 %v3979, %v4002
    %4006 = vrot.lane.b32.xlu0 %v3816, 96
    %v4007 = vpop.permute.xlu0 %4006
    %v4008 = vsel %vm664, %v4007, 0
    %4010 = vmatpush.msra.mxu0 0.0
    %4011 = vmatpush.msra.mxu0 0.0
    %4012 = vmatpush.msra.mxu0 0.0
    %4013 = vmatpush.msra.mxu0 0.0
    %4014 = vmatpush.msra.mxu0 0.0
    %4015 = vmatpush.msra.mxu0 0.0
    %4016 = vmatpush.msra.mxu0 0.0
    %4017 = vmatpush.msra.mxu0 0.0
    %4018 = vmatpush.msra.mxu0 0.0
    %4019 = vmatpush.msra.mxu0 0.0
    %4020 = vmatpush.msra.mxu0 0.0
    %4021 = vmatpush.msra.mxu0 0.0
    %4022 = vmatpush.msra.mxu0 %v620
    %4023 = vmatpush.msra.mxu0 %v619
    %4024 = vmatpush.msra.mxu0 %v618
    %4025 = vmatpush.msra.mxu0 %v617
    %4026 = vmatmul.f32.gmra.mxu0 %v4008
    %v4027 = vpop.f32.mrf.mxu0
    %v4028 = vadd.f32 0.0, %v4027
    %4029 = vdwg.mxu0
    %v4030 = vadd.f32 %v4004, %v4028
    %v4032 = vperm.slane %v621, 0
    %v4034 = vadd.f32 %v4030, %v4032
    %v4035 = vmax.f32 %v4034, 0.0
    %v4037 = vperm.slane %v630, 0
    %vm4039 = vcmask 523264
    %v4041 = vsel %vm4039, %v4035, 0
    %4043 = vmatpush.msra.mxu0 0.0
    %4044 = vmatpush.msra.mxu0 0.0
    %4045 = vmatpush.msra.mxu0 0.0
    %4046 = vmatpush.msra.mxu0 0.0
    %4047 = vmatpush.msra.mxu0 0.0
    %4048 = vmatpush.msra.mxu0 0.0
    %4049 = vmatpush.msra.mxu0 0.0
    %4050 = vmatpush.msra.mxu0 0.0
    %4051 = vmatpush.msra.mxu0 %v629
    %4052 = vmatpush.msra.mxu0 %v628
    %4053 = vmatpush.msra.mxu0 %v627
    %4054 = vmatpush.msra.mxu0 %v626
    %4055 = vmatpush.msra.mxu0 %v625
    %4056 = vmatpush.msra.mxu0 %v624
    %4057 = vmatpush.msra.mxu0 %v623
    %4058 = vmatpush.msra.mxu0 %v622
    %4059 = vmatmul.f32.gmra.mxu0 %v4041
    %v4060 = vpop.f32.mrf.mxu0
    %v4061 = vadd.f32 %v4037, %v4060
    %4062 = vdwg.mxu0
    %v4064 = vperm.slane %v632, 0
    %vm4066 = vcmask 15360
    %v4068 = vsel %vm4066, %v4061, 0
    %vm4070 = vcmask 1041408
    %v4072 = vsel %vm4070, %v631, 0
    %4074 = vmatpush.msra.mxu0 0.0
    %4075 = vmatpush.msra.mxu0 0.0
    %4076 = vmatpush.msra.mxu0 0.0
    %4077 = vmatpush.msra.mxu0 0.0
    %4078 = vmatpush.msra.mxu0 0.0
    %4079 = vmatpush.msra.mxu0 0.0
    %4080 = vmatpush.msra.mxu0 0.0
    %4081 = vmatpush.msra.mxu0 0.0
    %4082 = vmatpush.msra.mxu0 0.0
    %4083 = vmatpush.msra.mxu0 0.0
    %4084 = vmatpush.msra.mxu0 0.0
    %4085 = vmatpush.msra.mxu0 0.0
    %4086 = vmatpush.msra.mxu0 0.0
    %4087 = vmatpush.msra.mxu0 0.0
    %4088 = vmatpush.msra.mxu0 0.0
    %4089 = vmatpush.msra.mxu0 %v4072
    %4090 = vmatmul.f32.gmra.mxu0 %v4068
    %v4091 = vpop.f32.mrf.mxu0
    %v4092 = vadd.f32 %v4064, %v4091
    %4093 = vdwg.mxu0
    %vm4094 = vcmask 9216
    %4095 = vst.msk [vmem:[#allocation18] sm:$0x3] %vm4094, %v4092
    // Predicated region
    $region262: #{tpu_custom_call.1} parent=1 // pred_check
      _
    $region263: #{tpu_custom_call.1} parent=1 // pred_check_branch
      %4097 = sbr.rel (0) target = $region265
    $region264: #{tpu_custom_call.1} parent=1 // pred_region
      %4099 = vsyncadd [#allocation6], 0
      %s4101 = sshll.u32 [#allocation18], 4
      %s4102 = int_to_ptr.vmem [resolvable:$true] %s4101
      %s4103 = sshll.u32 %s115, 4
      %s4104 = int_to_ptr.hbm [resolvable:$true] %s4103
      %4106 = dma.vmem_to_hbm [thread:$0]  %s4102, 32, %s4104, [#allocation6]
    $region265: #{tpu_custom_call.1} parent=1 // pred_fallthru
      _
    // Predicated region
    $region266: #{tpu_custom_call.1} parent=1 // pred_check
      _
    $region267: #{tpu_custom_call.1} parent=1 // pred_check_branch
      %4108 = sbr.rel (0) target = $region269
    $region268: #{tpu_custom_call.1} parent=1 // pred_region
      %4110 = dma.done [#allocation6], 32
    $region269: #{tpu_custom_call.1} parent=1 // pred_fallthru
      _
    %4111 = vsyncpa [#allocation5], 1
    %4112 = vsyncpa [#allocation8], 1
    %4113 = vsyncpa [#allocation11], 1
    %4114 = vsyncpa [#allocation14], 1
    %4115 = vsyncpa [#allocation17], 1
    %4116 = vsyncpa [#allocation6], 1

</llo_original>
